<compile_context>
chip_gen: v6e
topology: v6e:2x2x1
jax: 0.10.0
libtpu: 0.0.40
codegen_flags: <defaults>
</compile_context>

<pallas_src>
import functools

import jax
import jax.numpy as jnp
from jax.experimental import pallas as pl
from jax.experimental.pallas import tpu as pltpu

CIN, COUT, KH, KW = 3, 32, 3, 3


def _chip_config(n_batch):
    """(elements per grid step, pooling intermediate dtype) chosen per chip generation."""
    try:
        kind = jax.devices()[0].device_kind.lower()
    except Exception:
        kind = ""
    # v7x has 2 TensorCores: one batch element per grid step, split via "parallel" grid.
    # v5e/v6e have a single TC: run the whole batch in one step (amortize step overhead,
    # double the M-occupancy of the dense matmul).
    nb = 1 if "v7" in kind else n_batch
    # bf16 intermediates on v6e/v7x; f32 on v5e (no bf16 VALU).
    pool_dtype = jnp.float32 if "v5" in kind else jnp.bfloat16
    return nb, pool_dtype


# ---------------- fused kernel: conv(+bias)+ReLU+maxpool+Linear+ReLU+Linear -------------
def fused_kernel(xs_ref, wc_ref, w1_ref, b1_ref, w2_ref, b2_ref, o_ref,
                 *, H, W, NB, pool_dtype):
    # xs_ref: (NB, K1, W)  bf16   stacked kw-shifted padded input + ones row,
    #                             rows = kw*CIN*(H+2) + ci*(H+2) + r, last row = 1
    # wc_ref: (H*COUT, K1) bf16   rearranged conv weight, last column = conv bias
    # w1_ref: (W-1, 128)   bf16 ; b1_ref: (1, 128) f32
    # w2_ref: (128, 128)   f32 (cols >=10 zero) ; b2_ref: (1, 128) f32 (cols >=10 zero)
    # o_ref : (NB, (H-1)*COUT, 128) f32, rows = h*COUT + co
    M = (H - 1) * COUT

    pooled_parts = []
    for n in range(NB):  # static unroll over the batch elements of this grid step
        # Conv2d(3,32,3,s=1,p=1) + bias as ONE bf16 MXU dot, f32 accumulation.
        acc = jnp.dot(wc_ref[...], xs_ref[n],
                      preferred_element_type=jnp.float32)              # (H*COUT, W)
        conv = jnp.maximum(acc, 0.0).astype(pool_dtype)                 # ReLU
        # MaxPool2d(2, stride=1): vertical max (sublane-aligned slices), then horizontal.
        vert = jnp.maximum(conv[:M, :], conv[COUT:, :])                 # (M, W)
        pooled_parts.append(
            jnp.maximum(vert[:, :W - 1], vert[:, 1:]).astype(jnp.bfloat16))  # (M, W-1)

    pooled = pooled_parts[0] if NB == 1 else jnp.concatenate(pooled_parts, axis=0)

    # dense: Linear(1984,128) + ReLU + Linear(128,10 padded to 128); f32 accumulation.
    h1 = jnp.dot(pooled, w1_ref[...],
                 preferred_element_type=jnp.float32) + b1_ref[...]      # (NB*M, 128)
    h1 = jnp.maximum(h1, 0.0)
    out = jnp.dot(h1, w2_ref[...],
                  preferred_element_type=jnp.float32) + b2_ref[...]     # (NB*M, 128)

    for n in range(NB):
        o_ref[n] = out[n * M:(n + 1) * M, :]


# --------------------------------- full forward (Module2) -------------------------------
def module2_forward(x, conv_w, conv_b, w1, b1, w2, b2):
    N, _, H, W = x.shape
    Hp = H + 2
    Dh = w1.shape[0]          # 128
    Do = w2.shape[0]          # 10
    DoP = 128                 # lane-dense padded output features
    M = (H - 1) * COUT
    K1 = KW * CIN * Hp + 1    # stacked kw-shifts + ones (bias) row

    NB, pool_dtype = _chip_config(N)

    # ---- glue / weight prep (tiny, done once by XLA) ----
    # zero-padded input, rows flattened as ci*Hp + r
    xp = jnp.pad(x, ((0, 0), (0, 0), (1, 1), (1, 1))).reshape(N, CIN * Hp, W + 2)
    # stack the three kw-shifts along the contraction axis + a ones row for the bias
    xs = jnp.concatenate(
        [xp[:, :, 0:W], xp[:, :, 1:1 + W], xp[:, :, 2:2 + W],
         jnp.ones((N, 1, W), x.dtype)], axis=1).astype(jnp.bfloat16)      # (N, K1, W)

    # Wflat[h*COUT+co, kw*CIN*Hp + ci*Hp + r] = conv_w[co, ci, r-h, kw] (0 outside window)
    hh = jnp.arange(H)[:, None, None]
    rr = jnp.arange(Hp)[None, :, None]
    kk = jnp.arange(KH)[None, None, :]
    S = (rr == hh + kk).astype(conv_w.dtype)                              # (H, Hp, KH)
    wflat = jnp.einsum('oikw,hrk->howir', conv_w, S).reshape(H * COUT, KW * CIN * Hp)
    cb = jnp.tile(conv_b, (H,)).reshape(H * COUT, 1)                      # bias column
    wc = jnp.concatenate([wflat, cb], axis=1).astype(jnp.bfloat16)        # (H*COUT, K1)

    w1t = w1.T.astype(jnp.bfloat16)                                       # (1984, 128)
    b1r = b1.reshape(1, Dh).astype(jnp.float32)
    w2p = jnp.zeros((Dh, DoP), jnp.float32).at[:, :Do].set(w2.T)          # (128, 128)
    b2p = jnp.zeros((1, DoP), jnp.float32).at[:, :Do].set(b2)

    flops = N * 2 * ((H * COUT) * K1 * W + M * (W - 1) * Dh + M * Dh * DoP)
    bytes_acc = (xs.size * 2 + wc.size * 2 + w1t.size * 2
                 + (b1r.size + w2p.size + b2p.size) * 4 + N * M * DoP * 4)

    out = pl.pallas_call(
        functools.partial(fused_kernel, H=H, W=W, NB=NB, pool_dtype=pool_dtype),
        out_shape=jax.ShapeDtypeStruct((N, M, DoP), jnp.float32),
        grid=(N // NB,),
        in_specs=[
            pl.BlockSpec((NB, K1, W), lambda i: (i, 0, 0)),
            pl.BlockSpec((H * COUT, K1), lambda i: (0, 0)),
            pl.BlockSpec((W - 1, Dh), lambda i: (0, 0)),
            pl.BlockSpec((1, Dh), lambda i: (0, 0)),
            pl.BlockSpec((Dh, DoP), lambda i: (0, 0)),
            pl.BlockSpec((1, DoP), lambda i: (0, 0)),
        ],
        out_specs=pl.BlockSpec((NB, M, DoP), lambda i: (i, 0, 0)),
        compiler_params=pltpu.CompilerParams(
            dimension_semantics=("parallel",),
            vmem_limit_bytes=32 * 1024 * 1024,
        ),
        cost_estimate=pl.CostEstimate(flops=flops, transcendentals=0,
                                      bytes_accessed=bytes_acc),
    )(xs, wc, w1t, b1r, w2p, b2p)

    # drop the lane padding; rows are (h, co) -> PyTorch ordering (N, COUT, H-1, 10)
    out = out[..., :Do]
    return out.reshape(N, H - 1, COUT, Do).transpose(0, 2, 1, 3)


# ----------------------------------- pure-JAX reference ---------------------------------
def reference_forward(x, conv_w, conv_b, w1, b1, w2, b2):
    conv = jax.lax.conv_general_dilated(
        x, conv_w, window_strides=(1, 1), padding=((1, 1), (1, 1)),
        dimension_numbers=("NCHW", "OIHW", "NCHW"))
    conv = jnp.maximum(conv + conv_b[None, :, None, None], 0.0)
    pooled = jax.lax.reduce_window(conv, -jnp.inf, jax.lax.max,
                                   (1, 1, 2, 2), (1, 1, 1, 1), "VALID")
    h = jnp.maximum(pooled @ w1.T + b1, 0.0)
    return h @ w2.T + b2


if __name__ == "__main__":
    # Width must be 1985 so that after MaxPool2d(2,1) the last axis is 1984
    # (= Linear in_features, as implied by the discarded .view()).  Batch/height small.
    N, H, W = 2, 4, 1985

    key = jax.random.PRNGKey(0)
    ks = jax.random.split(key, 7)
    conv_w = 0.1 * jax.random.normal(ks[0], (COUT, CIN, KH, KW), jnp.float32)
    conv_b = 0.05 * jax.random.normal(ks[1], (COUT,), jnp.float32)
    w1 = 0.02 * jax.random.normal(ks[2], (128, 1984), jnp.float32)
    b1 = 0.02 * jax.random.normal(ks[3], (128,), jnp.float32)
    w2 = 0.1 * jax.random.normal(ks[4], (10, 128), jnp.float32)
    b2 = 0.02 * jax.random.normal(ks[5], (10,), jnp.float32)
    x = jax.random.normal(ks[6], (N, CIN, H, W), jnp.float32)

    out = jax.jit(module2_forward)(x, conv_w, conv_b, w1, b1, w2, b2)
    out = jax.block_until_ready(out)

    assert out.shape == (N, COUT, H - 1, 10), out.shape
    ref = reference_forward(x, conv_w, conv_b, w1, b1, w2, b2)
    max_err = float(jnp.max(jnp.abs(out - ref)))
    assert max_err < 5e-2, f"max abs err {max_err}"

    print("KERNEL_OK")
</pallas_src>

<mosaic_0001>
module attributes {stable_mosaic.version = 11 : i64} {
  func.func @fused_kernel(%arg0: i32, %arg1: memref<2x55x1985xbf16, #tpu.memory_space<vmem>>, %arg2: memref<128x55xbf16, #tpu.memory_space<vmem>>, %arg3: memref<1984x128xbf16, #tpu.memory_space<vmem>>, %arg4: memref<1x128xf32, #tpu.memory_space<vmem>>, %arg5: memref<128x128xf32, #tpu.memory_space<vmem>>, %arg6: memref<1x128xf32, #tpu.memory_space<vmem>>, %arg7: memref<2x96x128xf32, #tpu.memory_space<vmem>>) attributes {dimension_semantics = [#tpu.dimension_semantics<parallel>], iteration_bounds = array<i64: 1>, scalar_prefetch = 0 : i64, scratch_operands = 0 : i64, tpu.core_type = #tpu.core_type<tc>, window_params = [{transform_indices = @transform_0, window_bounds = array<i64: 2, 55, 1985>}, {pipeline_mode = #tpu.pipeline_mode<synchronous>, transform_indices = @transform_1, window_bounds = array<i64: 128, 55>}, {pipeline_mode = #tpu.pipeline_mode<synchronous>, transform_indices = @transform_2, window_bounds = array<i64: 1984, 128>}, {pipeline_mode = #tpu.pipeline_mode<synchronous>, transform_indices = @transform_3, window_bounds = array<i64: 1, 128>}, {pipeline_mode = #tpu.pipeline_mode<synchronous>, transform_indices = @transform_4, window_bounds = array<i64: 128, 128>}, {pipeline_mode = #tpu.pipeline_mode<synchronous>, transform_indices = @transform_5, window_bounds = array<i64: 1, 128>}, {transform_indices = @transform_6, window_bounds = array<i64: 2, 96, 128>}]} {
    %c0 = arith.constant 0 : index
    %c0_0 = arith.constant 0 : index
    %0 = vector.load %arg2[%c0, %c0_0] : memref<128x55xbf16, #tpu.memory_space<vmem>>, vector<128x55xbf16>
    %c0_1 = arith.constant 0 : index
    %c0_2 = arith.constant 0 : index
    %c0_3 = arith.constant 0 : index
    %1 = vector.load %arg1[%c0_1, %c0_2, %c0_3] : memref<2x55x1985xbf16, #tpu.memory_space<vmem>>, vector<1x55x1985xbf16>
    %2 = vector.shape_cast %1 : vector<1x55x1985xbf16> to vector<55x1985xbf16>
    %cst = arith.constant dense<0.000000e+00> : vector<128x1985xf32>
    %3 = tpu.matmul %0, %2, %cst {dimension_numbers = #tpu.dot_dimension_numbers<[1], [0], [0], [1], [0, 0, 1, 1], [], []>} : vector<128x55xbf16>, vector<55x1985xbf16>, vector<128x1985xf32> -> vector<128x1985xf32>
    %cst_4 = arith.constant 0.000000e+00 : f32
    %4 = vector.broadcast %cst_4 : f32 to vector<128x1985xf32>
    %5 = arith.maximumf %3, %4 : vector<128x1985xf32>
    %6 = arith.truncf %5 : vector<128x1985xf32> to vector<128x1985xbf16>
    %7 = vector.extract_strided_slice %6 {offsets = [0, 0], sizes = [96, 1985], strides = [1, 1]} : vector<128x1985xbf16> to vector<96x1985xbf16>
    %8 = vector.extract_strided_slice %6 {offsets = [32, 0], sizes = [96, 1985], strides = [1, 1]} : vector<128x1985xbf16> to vector<96x1985xbf16>
    %9 = arith.maximumf %7, %8 : vector<96x1985xbf16>
    %10 = vector.extract_strided_slice %9 {offsets = [0, 0], sizes = [96, 1984], strides = [1, 1]} : vector<96x1985xbf16> to vector<96x1984xbf16>
    %11 = vector.extract_strided_slice %9 {offsets = [0, 1], sizes = [96, 1984], strides = [1, 1]} : vector<96x1985xbf16> to vector<96x1984xbf16>
    %12 = arith.maximumf %10, %11 : vector<96x1984xbf16>
    %c0_5 = arith.constant 0 : index
    %c0_6 = arith.constant 0 : index
    %13 = vector.load %arg2[%c0_5, %c0_6] : memref<128x55xbf16, #tpu.memory_space<vmem>>, vector<128x55xbf16>
    %c1 = arith.constant 1 : index
    %c0_7 = arith.constant 0 : index
    %c0_8 = arith.constant 0 : index
    %14 = vector.load %arg1[%c1, %c0_7, %c0_8] : memref<2x55x1985xbf16, #tpu.memory_space<vmem>>, vector<1x55x1985xbf16>
    %15 = vector.shape_cast %14 : vector<1x55x1985xbf16> to vector<55x1985xbf16>
    %cst_9 = arith.constant dense<0.000000e+00> : vector<128x1985xf32>
    %16 = tpu.matmul %13, %15, %cst_9 {dimension_numbers = #tpu.dot_dimension_numbers<[1], [0], [0], [1], [0, 0, 1, 1], [], []>} : vector<128x55xbf16>, vector<55x1985xbf16>, vector<128x1985xf32> -> vector<128x1985xf32>
    %cst_10 = arith.constant 0.000000e+00 : f32
    %17 = vector.broadcast %cst_10 : f32 to vector<128x1985xf32>
    %18 = arith.maximumf %16, %17 : vector<128x1985xf32>
    %19 = arith.truncf %18 : vector<128x1985xf32> to vector<128x1985xbf16>
    %20 = vector.extract_strided_slice %19 {offsets = [0, 0], sizes = [96, 1985], strides = [1, 1]} : vector<128x1985xbf16> to vector<96x1985xbf16>
    %21 = vector.extract_strided_slice %19 {offsets = [32, 0], sizes = [96, 1985], strides = [1, 1]} : vector<128x1985xbf16> to vector<96x1985xbf16>
    %22 = arith.maximumf %20, %21 : vector<96x1985xbf16>
    %23 = vector.extract_strided_slice %22 {offsets = [0, 0], sizes = [96, 1984], strides = [1, 1]} : vector<96x1985xbf16> to vector<96x1984xbf16>
    %24 = vector.extract_strided_slice %22 {offsets = [0, 1], sizes = [96, 1984], strides = [1, 1]} : vector<96x1985xbf16> to vector<96x1984xbf16>
    %25 = arith.maximumf %23, %24 : vector<96x1984xbf16>
    %26 = tpu.concatenate %12, %25 in 0 : vector<96x1984xbf16>, vector<96x1984xbf16> -> vector<192x1984xbf16>
    %c0_11 = arith.constant 0 : index
    %c0_12 = arith.constant 0 : index
    %27 = vector.load %arg3[%c0_11, %c0_12] : memref<1984x128xbf16, #tpu.memory_space<vmem>>, vector<1984x128xbf16>
    %cst_13 = arith.constant dense<0.000000e+00> : vector<192x128xf32>
    %28 = tpu.matmul %26, %27, %cst_13 {dimension_numbers = #tpu.dot_dimension_numbers<[1], [0], [0], [1], [0, 0, 1, 1], [], []>} : vector<192x1984xbf16>, vector<1984x128xbf16>, vector<192x128xf32> -> vector<192x128xf32>
    %c0_14 = arith.constant 0 : index
    %c0_15 = arith.constant 0 : index
    %29 = vector.load %arg4[%c0_14, %c0_15] : memref<1x128xf32, #tpu.memory_space<vmem>>, vector<1x128xf32>
    %30 = vector.broadcast %29 : vector<1x128xf32> to vector<192x128xf32>
    %31 = arith.addf %28, %30 : vector<192x128xf32>
    %cst_16 = arith.constant 0.000000e+00 : f32
    %32 = vector.broadcast %cst_16 : f32 to vector<192x128xf32>
    %33 = arith.maximumf %31, %32 : vector<192x128xf32>
    %c0_17 = arith.constant 0 : index
    %c0_18 = arith.constant 0 : index
    %34 = vector.load %arg5[%c0_17, %c0_18] : memref<128x128xf32, #tpu.memory_space<vmem>>, vector<128x128xf32>
    %cst_19 = arith.constant dense<0.000000e+00> : vector<192x128xf32>
    %35 = tpu.matmul %33, %34, %cst_19 {dimension_numbers = #tpu.dot_dimension_numbers<[1], [0], [0], [1], [0, 0, 1, 1], [], []>} : vector<192x128xf32>, vector<128x128xf32>, vector<192x128xf32> -> vector<192x128xf32>
    %c0_20 = arith.constant 0 : index
    %c0_21 = arith.constant 0 : index
    %36 = vector.load %arg6[%c0_20, %c0_21] : memref<1x128xf32, #tpu.memory_space<vmem>>, vector<1x128xf32>
    %37 = vector.broadcast %36 : vector<1x128xf32> to vector<192x128xf32>
    %38 = arith.addf %35, %37 : vector<192x128xf32>
    %39 = vector.extract_strided_slice %38 {offsets = [0, 0], sizes = [96, 128], strides = [1, 1]} : vector<192x128xf32> to vector<96x128xf32>
    %c0_22 = arith.constant 0 : index
    %c0_23 = arith.constant 0 : index
    %c0_24 = arith.constant 0 : index
    %40 = vector.load %arg7[%c0_22, %c0_23, %c0_24] : memref<2x96x128xf32, #tpu.memory_space<vmem>>, vector<1x96x128xf32>
    %41 = vector.shape_cast %40 : vector<1x96x128xf32> to vector<96x128xf32>
    %42 = vector.shape_cast %39 : vector<96x128xf32> to vector<1x96x128xf32>
    tpu.vector_store %arg7[%c0_22, %c0_23, %c0_24], %42 {strides = array<i32>} : memref<2x96x128xf32, #tpu.memory_space<vmem>>, vector<1x96x128xf32>,
    %43 = vector.extract_strided_slice %38 {offsets = [96, 0], sizes = [96, 128], strides = [1, 1]} : vector<192x128xf32> to vector<96x128xf32>
    %c1_25 = arith.constant 1 : index
    %c0_26 = arith.constant 0 : index
    %c0_27 = arith.constant 0 : index
    %44 = vector.load %arg7[%c1_25, %c0_26, %c0_27] : memref<2x96x128xf32, #tpu.memory_space<vmem>>, vector<1x96x128xf32>
    %45 = vector.shape_cast %44 : vector<1x96x128xf32> to vector<96x128xf32>
    %46 = vector.shape_cast %43 : vector<96x128xf32> to vector<1x96x128xf32>
    tpu.vector_store %arg7[%c1_25, %c0_26, %c0_27], %46 {strides = array<i32>} : memref<2x96x128xf32, #tpu.memory_space<vmem>>, vector<1x96x128xf32>,
    return
  }
  func.func @transform_0(%arg0: i32) -> (i32, i32, i32) {
    %c0_i32 = arith.constant 0 : i32
    %c0_i32_0 = arith.constant 0 : i32
    %c0_i32_1 = arith.constant 0 : i32
    return %arg0, %c0_i32, %c0_i32_0 : i32, i32, i32
  }
  func.func @transform_1(%arg0: i32) -> (i32, i32) {
    %c0_i32 = arith.constant 0 : i32
    %c0_i32_0 = arith.constant 0 : i32
    %c0_i32_1 = arith.constant 0 : i32
    return %c0_i32, %c0_i32_0 : i32, i32
  }
  func.func @transform_2(%arg0: i32) -> (i32, i32) {
    %c0_i32 = arith.constant 0 : i32
    %c0_i32_0 = arith.constant 0 : i32
    %c0_i32_1 = arith.constant 0 : i32
    return %c0_i32, %c0_i32_0 : i32, i32
  }
  func.func @transform_3(%arg0: i32) -> (i32, i32) {
    %c0_i32 = arith.constant 0 : i32
    %c0_i32_0 = arith.constant 0 : i32
    %c0_i32_1 = arith.constant 0 : i32
    return %c0_i32, %c0_i32_0 : i32, i32
  }
  func.func @transform_4(%arg0: i32) -> (i32, i32) {
    %c0_i32 = arith.constant 0 : i32
    %c0_i32_0 = arith.constant 0 : i32
    %c0_i32_1 = arith.constant 0 : i32
    return %c0_i32, %c0_i32_0 : i32, i32
  }
  func.func @transform_5(%arg0: i32) -> (i32, i32) {
    %c0_i32 = arith.constant 0 : i32
    %c0_i32_0 = arith.constant 0 : i32
    %c0_i32_1 = arith.constant 0 : i32
    return %c0_i32, %c0_i32_0 : i32, i32
  }
  func.func @transform_6(%arg0: i32) -> (i32, i32, i32) {
    %c0_i32 = arith.constant 0 : i32
    %c0_i32_0 = arith.constant 0 : i32
    %c0_i32_1 = arith.constant 0 : i32
    return %arg0, %c0_i32, %c0_i32_0 : i32, i32, i32
  }
}

</mosaic_0001>

<llo_original>
// kernel: tile.0
$region0: #{tile.0}
  %s0 = inlined_call_operand.vmem [shape: bf16[4,32], index: 0, kind: input, shape index: {}]
  %s1 = inlined_call_operand.vmem [shape: bf16[128,1], index: 1, kind: output, shape index: {}]
  $region1: #{tile.0} parent=0
    #allocation0 [shape = 'u8[4096]{0}', space=vmem, size = 0x1000, scoped, tag = 'scoped mem for output reshape']
    #allocation1 [shape = 'u8[4096]{0}', space=vmem, size = 0x1000, scoped, tag = 'scoped mem for input reshape']
    %s3 = smul.u32 2, 2
    %s4 = sshll.u32 1, %s3
    %s5 = ssub.s32 %s4, 1
    %s6 = sshrl.u32 %s5, 1
    %s7 = sor.u32 %s5, %s6
    %s8 = sand.u32 %s7, 85
    %s9 = sshrl.u32 %s8, 1
    %s10 = sor.u32 %s8, %s9
    %s11 = sand.u32 51, %s10
    %s12 = sshrl.u32 %s11, 2
    %s13 = sor.u32 %s11, %s12
    %s14 = sand.u32 15, %s13
    %v15 = vld [vmem:[%s0] sm:%s14]
    %v16 = vunpack.c.l.bf16 %v15
    %v17 = vunpack.c.h.bf16 %v15
    %18 = vst [vmem:[#allocation1] sm:%s5] %v16
    %v19 = vld [vmem:[#allocation1] sm:$0x1]
    %vm20 = vcmask 261120
    %21 = vst.msk [vmem:[#allocation0] sm:$0x1] %vm20, %v19
    %s22 = scalar_lea.vmem [#allocation1], 3
    %v23 = vld [vmem:[%s22] sm:$0x1]
    %24 = vrot.lane.b32.xlu0 %v23, 96
    %v25 = vpop.permute.xlu0 %24
    %vm26 = vcmask 1048320
    %27 = vst.msk [vmem:[#allocation0] sm:$0x1] %vm26, %v25
    %s28 = scalar_lea.vmem [#allocation1], 2
    %v29 = vld [vmem:[%s28] sm:$0x1]
    %30 = vrot.lane.b32.xlu0 %v29, 64
    %v31 = vpop.permute.xlu0 %30
    %vm32 = vcmask 785920
    %33 = vst.msk [vmem:[#allocation0] sm:$0x1] %vm32, %v31
    %s34 = scalar_lea.vmem [#allocation1], 1
    %v35 = vld [vmem:[%s34] sm:$0x1]
    %36 = vrot.lane.b32.xlu0 %v35, 32
    %v37 = vpop.permute.xlu0 %36
    %vm38 = vcmask 523520
    %39 = vst.msk [vmem:[#allocation0] sm:$0x1] %vm38, %v37
    %s41 = smul.u32 1, 2
    %s42 = sshll.u32 1, %s41
    %s43 = ssub.s32 %s42, 1
    %s44 = sshrl.u32 %s41, 1
    %v45 = vld [vmem:[#allocation0] sm:%s43]
    %v46 = vpack.c.bf16 0.0, %v45
    %s47 = sshll.u32 1, %s44
    %s48 = ssub.s32 %s47, 1
    %49 = vst [vmem:[%s1] sm:%s48] %v46

// kernel: module2_forward.1
$region0: #{module2_forward.1}
  #allocation0 [shape = 'u32[]', space=smem, size = 0x4, offset = 0x4, fixed_abs, tag = 'smem constant byte address 0x4 - core index']
  #allocation1 [shape = 'u32[144,128]{1,0:T(1,128)}', space=vmem, size = 0x12000, scoped, tag = 'internal scratch']
  %s0 = inlined_call_operand.vmem [shape: bf16[2,55,1985], index: 0, kind: input, shape index: {}]
  %s1 = inlined_call_operand.vmem [shape: bf16[128,55], index: 1, kind: input, shape index: {}]
  %s2 = inlined_call_operand.vmem [shape: bf16[1984,128], index: 2, kind: input, shape index: {}]
  %s3 = inlined_call_operand.vmem [shape: f32[1,128], index: 3, kind: input, shape index: {}]
  %s4 = inlined_call_operand.vmem [shape: f32[128,128], index: 4, kind: input, shape index: {}]
  %s5 = inlined_call_operand.vmem [shape: f32[1,128], index: 5, kind: input, shape index: {}]
  %s6 = inlined_call_operand.vmem [shape: f32[2,96,128], index: 6, kind: output, shape index: {}]
  %s7 = sld [smem:[#allocation0]]
  $region34: #{module2_forward.1} parent=0
    _
  %s9 = ssub.s32 1, %s7
  %s10 = scalar_select 0, %s9, %s7
  // Predicated region
  $region2: #{module2_forward.1} parent=0 // pred_check
    _
  $region3: #{module2_forward.1} parent=0 // pred_check_branch
    %12 = sbr.rel (0) target = $region5
  $region4: #{module2_forward.1} parent=0 // pred_region
    _
  $region5: #{module2_forward.1} parent=0 // pred_fallthru
    _
  // Predicated region
  $region6: #{module2_forward.1} parent=0 // pred_check
    _
  $region7: #{module2_forward.1} parent=0 // pred_check_branch
    %14 = sbr.rel (0) target = $region9
  $region8: #{module2_forward.1} parent=0 // pred_region
    _
  $region9: #{module2_forward.1} parent=0 // pred_fallthru
    _
  // Predicated region
  $region10: #{module2_forward.1} parent=0 // pred_check
    _
  $region11: #{module2_forward.1} parent=0 // pred_check_branch
    %16 = sbr.rel (0) target = $region13
  $region12: #{module2_forward.1} parent=0 // pred_region
    _
  $region13: #{module2_forward.1} parent=0 // pred_fallthru
    _
  // Predicated region
  $region14: #{module2_forward.1} parent=0 // pred_check
    _
  $region15: #{module2_forward.1} parent=0 // pred_check_branch
    %18 = sbr.rel (0) target = $region17
  $region16: #{module2_forward.1} parent=0 // pred_region
    _
  $region17: #{module2_forward.1} parent=0 // pred_fallthru
    _
  // Predicated region
  $region18: #{module2_forward.1} parent=0 // pred_check
    _
  $region19: #{module2_forward.1} parent=0 // pred_check_branch
    %20 = sbr.rel (0) target = $region21
  $region20: #{module2_forward.1} parent=0 // pred_region
    _
  $region21: #{module2_forward.1} parent=0 // pred_fallthru
    _
  // Predicated region
  $region22: #{module2_forward.1} parent=0 // pred_check
    _
  $region23: #{module2_forward.1} parent=0 // pred_check_branch
    %22 = sbr.rel (0) target = $region25
  $region24: #{module2_forward.1} parent=0 // pred_region
    _
  $region25: #{module2_forward.1} parent=0 // pred_fallthru
    _
  %v24 = vld [vmem:[%s1] sm:$0xf]
  %v25 = vld [vmem:[%s1 + $0x4] sm:$0xf]
  %v26 = vld [vmem:[%s1 + $0x8] sm:$0xf]
  %v27 = vld [vmem:[%s1 + $0xc] sm:$0xf]
  %v28 = vld [vmem:[%s1 + $0x10] sm:$0xf]
  %v29 = vld [vmem:[%s1 + $0x14] sm:$0xf]
  %v30 = vld [vmem:[%s1 + $0x18] sm:$0xf]
  %v31 = vld [vmem:[%s1 + $0x1c] sm:$0xf]
  %v32 = vld [vmem:[%s1 + $0x20] sm:$0xf]
  %v33 = vld [vmem:[%s1 + $0x24] sm:$0xf]
  %v34 = vld [vmem:[%s1 + $0x28] sm:$0xf]
  %v35 = vld [vmem:[%s1 + $0x2c] sm:$0xf]
  %v36 = vld [vmem:[%s1 + $0x30] sm:$0xf]
  %v37 = vld [vmem:[%s1 + $0x34] sm:$0xf]
  %v38 = vld [vmem:[%s1 + $0x38] sm:$0xf]
  %v39 = vld [vmem:[%s1 + $0x3c] sm:$0xf]
  %v40 = vld [vmem:[%s0] sm:$0xff]
  %v41 = vld [vmem:[%s0 + $0x8] sm:$0xff]
  %v42 = vld [vmem:[%s0 + $0x10] sm:$0xff]
  %v43 = vld [vmem:[%s0 + $0x18] sm:$0xff]
  %v44 = vld [vmem:[%s0 + $0x20] sm:$0xff]
  %v45 = vld [vmem:[%s0 + $0x28] sm:$0xff]
  %v46 = vld [vmem:[%s0 + $0x30] sm:$0xff]
  %v47 = vld [vmem:[%s0 + $0x38] sm:$0xff]
  %v48 = vld [vmem:[%s0 + $0x40] sm:$0xff]
  %v49 = vld [vmem:[%s0 + $0x48] sm:$0xff]
  %v50 = vld [vmem:[%s0 + $0x50] sm:$0xff]
  %v51 = vld [vmem:[%s0 + $0x58] sm:$0xff]
  %v52 = vld [vmem:[%s0 + $0x60] sm:$0xff]
  %v53 = vld [vmem:[%s0 + $0x68] sm:$0xff]
  %v54 = vld [vmem:[%s0 + $0x70] sm:$0xff]
  %v55 = vld [vmem:[%s0 + $0x78] sm:$0xff]
  %v56 = vld [vmem:[%s0 + $0x80] sm:$0xff]
  %v57 = vld [vmem:[%s0 + $0x88] sm:$0xff]
  %v58 = vld [vmem:[%s0 + $0x90] sm:$0xff]
  %v59 = vld [vmem:[%s0 + $0x98] sm:$0xff]
  %v60 = vld [vmem:[%s0 + $0xa0] sm:$0xff]
  %v61 = vld [vmem:[%s0 + $0xa8] sm:$0xff]
  %v62 = vld [vmem:[%s0 + $0xb0] sm:$0xff]
  %v63 = vld [vmem:[%s0 + $0xb8] sm:$0xff]
  %v64 = vld [vmem:[%s0 + $0xc0] sm:$0xff]
  %v65 = vld [vmem:[%s0 + $0xc8] sm:$0xff]
  %v66 = vld [vmem:[%s0 + $0xd0] sm:$0xff]
  %v67 = vld [vmem:[%s0 + $0xd8] sm:$0xff]
  %v68 = vld [vmem:[%s0 + $0xe0] sm:$0xff]
  %v69 = vld [vmem:[%s0 + $0xe8] sm:$0xff]
  %v70 = vld [vmem:[%s0 + $0xf0] sm:$0xff]
  %v71 = vld [vmem:[%s0 + $0xf8] sm:$0xff]
  %v72 = vld [vmem:[%s0 + $0x100] sm:$0xff]
  %v73 = vld [vmem:[%s0 + $0x108] sm:$0xff]
  %v74 = vld [vmem:[%s0 + $0x110] sm:$0xff]
  %v75 = vld [vmem:[%s0 + $0x118] sm:$0xff]
  %v76 = vld [vmem:[%s0 + $0x120] sm:$0xff]
  %v77 = vld [vmem:[%s0 + $0x128] sm:$0xff]
  %v78 = vld [vmem:[%s0 + $0x130] sm:$0xff]
  %v79 = vld [vmem:[%s0 + $0x138] sm:$0xff]
  %v80 = vld [vmem:[%s0 + $0x140] sm:$0xff]
  %v81 = vld [vmem:[%s0 + $0x148] sm:$0xff]
  %v82 = vld [vmem:[%s0 + $0x150] sm:$0xff]
  %v83 = vld [vmem:[%s0 + $0x158] sm:$0xff]
  %v84 = vld [vmem:[%s0 + $0x160] sm:$0xff]
  %v85 = vld [vmem:[%s0 + $0x168] sm:$0xff]
  %v86 = vld [vmem:[%s0 + $0x170] sm:$0xff]
  %v87 = vld [vmem:[%s0 + $0x178] sm:$0xff]
  %v88 = vld [vmem:[%s0 + $0x180] sm:$0xff]
  %v89 = vld [vmem:[%s0 + $0x188] sm:$0xff]
  %v90 = vld [vmem:[%s0 + $0x190] sm:$0xff]
  %v91 = vld [vmem:[%s0 + $0x198] sm:$0xff]
  %v92 = vld [vmem:[%s0 + $0x1a0] sm:$0xff]
  %v93 = vld [vmem:[%s0 + $0x1a8] sm:$0xff]
  %v94 = vld [vmem:[%s0 + $0x1b0] sm:$0xff]
  %v95 = vld [vmem:[%s0 + $0x1b8] sm:$0xff]
  %v112 = vunpack.c.l.b16 %v24
  %v113 = vunpack.c.l.b16 %v25
  %v114 = vunpack.c.l.b16 %v26
  %v115 = vunpack.c.l.b16 %v27
  %v116 = vunpack.c.l.b16 %v28
  %v117 = vunpack.c.l.b16 %v29
  %v118 = vunpack.c.l.b16 %v30
  %v119 = vunpack.c.l.b16 %v31
  %v120 = vunpack.c.l.b16 %v32
  %v121 = vunpack.c.l.b16 %v33
  %v122 = vunpack.c.l.b16 %v34
  %v123 = vunpack.c.l.b16 %v35
  %v124 = vunpack.c.l.b16 %v36
  %v125 = vunpack.c.l.b16 %v37
  %v126 = vunpack.c.l.b16 %v38
  %v127 = vunpack.c.l.b16 %v39
  %v128 = vpack.c.b16 %v113, %v112
  %v129 = vpack.c.b16 %v115, %v114
  %v130 = vpack.c.b16 %v117, %v116
  %v131 = vpack.c.b16 %v119, %v118
  %v132 = vpack.c.b16 %v121, %v120
  %v133 = vpack.c.b16 %v123, %v122
  %v134 = vpack.c.b16 %v125, %v124
  %v135 = vpack.c.b16 %v127, %v126
  %v192 = vunpack.c.l.b16 %v40
  %v193 = vunpack.c.h.b16 %v40
  %v194 = vunpack.c.l.b16 %v41
  %v195 = vunpack.c.h.b16 %v41
  %v196 = vunpack.c.l.b16 %v42
  %v197 = vunpack.c.h.b16 %v42
  %v198 = vunpack.c.l.b16 %v43
  %v199 = vunpack.c.h.b16 %v43
  %v200 = vunpack.c.l.b16 %v44
  %v201 = vunpack.c.h.b16 %v44
  %v202 = vunpack.c.l.b16 %v45
  %v203 = vunpack.c.h.b16 %v45
  %v204 = vunpack.c.l.b16 %v46
  %v205 = vunpack.c.h.b16 %v46
  %v206 = vunpack.c.l.b16 %v47
  %v207 = vunpack.c.h.b16 %v47
  %v208 = vunpack.c.l.b16 %v48
  %v209 = vunpack.c.h.b16 %v48
  %v210 = vunpack.c.l.b16 %v49
  %v211 = vunpack.c.h.b16 %v49
  %v212 = vunpack.c.l.b16 %v50
  %v213 = vunpack.c.h.b16 %v50
  %v214 = vunpack.c.l.b16 %v51
  %v215 = vunpack.c.h.b16 %v51
  %v216 = vunpack.c.l.b16 %v52
  %v217 = vunpack.c.h.b16 %v52
  %v218 = vunpack.c.l.b16 %v53
  %v219 = vunpack.c.h.b16 %v53
  %v220 = vunpack.c.l.b16 %v54
  %v221 = vunpack.c.h.b16 %v54
  %v222 = vunpack.c.l.b16 %v55
  %v223 = vunpack.c.h.b16 %v55
  %v224 = vunpack.c.l.b16 %v56
  %v225 = vunpack.c.h.b16 %v56
  %v226 = vunpack.c.l.b16 %v57
  %v227 = vunpack.c.h.b16 %v57
  %v228 = vunpack.c.l.b16 %v58
  %v229 = vunpack.c.h.b16 %v58
  %v230 = vunpack.c.l.b16 %v59
  %v231 = vunpack.c.h.b16 %v59
  %v232 = vunpack.c.l.b16 %v60
  %v233 = vunpack.c.h.b16 %v60
  %v234 = vunpack.c.l.b16 %v61
  %v235 = vunpack.c.h.b16 %v61
  %v236 = vunpack.c.l.b16 %v62
  %v237 = vunpack.c.h.b16 %v62
  %v238 = vunpack.c.l.b16 %v63
  %v239 = vunpack.c.h.b16 %v63
  %v240 = vunpack.c.l.b16 %v64
  %v241 = vunpack.c.h.b16 %v64
  %v242 = vunpack.c.l.b16 %v65
  %v243 = vunpack.c.h.b16 %v65
  %v244 = vunpack.c.l.b16 %v66
  %v245 = vunpack.c.h.b16 %v66
  %v246 = vunpack.c.l.b16 %v67
  %v247 = vunpack.c.h.b16 %v67
  %v248 = vunpack.c.l.b16 %v68
  %v249 = vunpack.c.h.b16 %v68
  %v250 = vunpack.c.l.b16 %v69
  %v251 = vunpack.c.h.b16 %v69
  %v252 = vunpack.c.l.b16 %v70
  %v253 = vunpack.c.h.b16 %v70
  %v254 = vunpack.c.l.b16 %v71
  %v255 = vunpack.c.h.b16 %v71
  %v256 = vunpack.c.l.b16 %v72
  %v257 = vunpack.c.h.b16 %v72
  %v258 = vunpack.c.l.b16 %v73
  %v259 = vunpack.c.h.b16 %v73
  %v260 = vunpack.c.l.b16 %v74
  %v261 = vunpack.c.h.b16 %v74
  %v262 = vunpack.c.l.b16 %v75
  %v263 = vunpack.c.h.b16 %v75
  %v264 = vunpack.c.l.b16 %v76
  %v265 = vunpack.c.h.b16 %v76
  %v266 = vunpack.c.l.b16 %v77
  %v267 = vunpack.c.h.b16 %v77
  %v268 = vunpack.c.l.b16 %v78
  %v269 = vunpack.c.h.b16 %v78
  %v270 = vunpack.c.l.b16 %v79
  %v271 = vunpack.c.h.b16 %v79
  %v272 = vunpack.c.l.b16 %v80
  %v273 = vunpack.c.h.b16 %v80
  %v274 = vunpack.c.l.b16 %v81
  %v275 = vunpack.c.h.b16 %v81
  %v276 = vunpack.c.l.b16 %v82
  %v277 = vunpack.c.h.b16 %v82
  %v278 = vunpack.c.l.b16 %v83
  %v279 = vunpack.c.h.b16 %v83
  %v280 = vunpack.c.l.b16 %v84
  %v281 = vunpack.c.h.b16 %v84
  %v282 = vunpack.c.l.b16 %v85
  %v283 = vunpack.c.h.b16 %v85
  %v284 = vunpack.c.l.b16 %v86
  %v285 = vunpack.c.h.b16 %v86
  %v286 = vunpack.c.l.b16 %v87
  %v287 = vunpack.c.h.b16 %v87
  %v288 = vunpack.c.l.b16 %v88
  %v289 = vunpack.c.h.b16 %v88
  %v290 = vunpack.c.l.b16 %v89
  %v291 = vunpack.c.h.b16 %v89
  %v292 = vunpack.c.l.b16 %v90
  %v293 = vunpack.c.h.b16 %v90
  %v294 = vunpack.c.l.b16 %v91
  %v295 = vunpack.c.h.b16 %v91
  %v296 = vunpack.c.l.b16 %v92
  %v297 = vunpack.c.h.b16 %v92
  %v298 = vunpack.c.l.b16 %v93
  %v299 = vunpack.c.h.b16 %v93
  %v300 = vunpack.c.l.b16 %v94
  %v301 = vunpack.c.h.b16 %v94
  %v302 = vunpack.c.l.b16 %v95
  %v303 = vunpack.c.h.b16 %v95
  %v304 = vpack.c.b16 %v208, %v192
  %v305 = vpack.c.b16 %v209, %v193
  %v306 = vpack.c.b16 %v210, %v194
  %v307 = vpack.c.b16 %v211, %v195
  %v308 = vpack.c.b16 %v212, %v196
  %v309 = vpack.c.b16 %v213, %v197
  %v310 = vpack.c.b16 %v214, %v198
  %v311 = vpack.c.b16 %v215, %v199
  %v312 = vpack.c.b16 %v216, %v200
  %v313 = vpack.c.b16 %v217, %v201
  %v314 = vpack.c.b16 %v218, %v202
  %v315 = vpack.c.b16 %v219, %v203
  %v316 = vpack.c.b16 %v220, %v204
  %v317 = vpack.c.b16 %v221, %v205
  %v318 = vpack.c.b16 %v222, %v206
  %v319 = vpack.c.b16 %v223, %v207
  %v320 = vpack.c.b16 %v240, %v224
  %v321 = vpack.c.b16 %v241, %v225
  %v322 = vpack.c.b16 %v242, %v226
  %v323 = vpack.c.b16 %v243, %v227
  %v324 = vpack.c.b16 %v244, %v228
  %v325 = vpack.c.b16 %v245, %v229
  %v326 = vpack.c.b16 %v246, %v230
  %v327 = vpack.c.b16 %v247, %v231
  %v328 = vpack.c.b16 %v248, %v232
  %v329 = vpack.c.b16 %v249, %v233
  %v330 = vpack.c.b16 %v250, %v234
  %v331 = vpack.c.b16 %v251, %v235
  %v332 = vpack.c.b16 %v252, %v236
  %v333 = vpack.c.b16 %v253, %v237
  %v334 = vpack.c.b16 %v254, %v238
  %v335 = vpack.c.b16 %v255, %v239
  %v336 = vpack.c.b16 %v272, %v256
  %v337 = vpack.c.b16 %v273, %v257
  %v338 = vpack.c.b16 %v274, %v258
  %v339 = vpack.c.b16 %v275, %v259
  %v340 = vpack.c.b16 %v276, %v260
  %v341 = vpack.c.b16 %v277, %v261
  %v342 = vpack.c.b16 %v278, %v262
  %v343 = vpack.c.b16 %v279, %v263
  %v344 = vpack.c.b16 %v280, %v264
  %v345 = vpack.c.b16 %v281, %v265
  %v346 = vpack.c.b16 %v282, %v266
  %v347 = vpack.c.b16 %v283, %v267
  %v348 = vpack.c.b16 %v284, %v268
  %v349 = vpack.c.b16 %v285, %v269
  %v350 = vpack.c.b16 %v286, %v270
  %v351 = vpack.c.b16 %v287, %v271
  %v352 = vpack.c.b16 %v288, %v288
  %v353 = vpack.c.b16 %v289, %v289
  %v354 = vpack.c.b16 %v290, %v290
  %v355 = vpack.c.b16 %v291, %v291
  %v356 = vpack.c.b16 %v292, %v292
  %v357 = vpack.c.b16 %v293, %v293
  %v358 = vpack.c.b16 %v294, %v294
  %v359 = vpack.c.b16 %v295, %v295
  %v360 = vpack.c.b16 %v296, %v296
  %v361 = vpack.c.b16 %v297, %v297
  %v362 = vpack.c.b16 %v298, %v298
  %v363 = vpack.c.b16 %v299, %v299
  %v364 = vpack.c.b16 %v300, %v300
  %v365 = vpack.c.b16 %v301, %v301
  %v366 = vpack.c.b16 %v302, %v302
  %v367 = vpack.c.b16 %v303, %v303
  %vm416 = vcmask 449536
  %v418 = vsel %vm416, %v128, 0
  %v421 = vsel %vm416, %v129, 0
  %v424 = vsel %vm416, %v130, 0
  %v427 = vsel %vm416, %v131, 0
  %v430 = vsel %vm416, %v132, 0
  %v433 = vsel %vm416, %v133, 0
  %v436 = vsel %vm416, %v134, 0
  %v439 = vsel %vm416, %v135, 0
  %vm441 = vcmask 1042432
  %vm442 = vcmask 1043456
  %v443 = vsel %vm441, 4294967295, 65535
  %v444 = vsel %vm442, %v443, 0
  %v446 = vand.u32 %v352, %v444
  %v449 = vand.u32 %v353, %v444
  %v452 = vand.u32 %v354, %v444
  %v455 = vand.u32 %v355, %v444
  %v458 = vand.u32 %v356, %v444
  %v461 = vand.u32 %v357, %v444
  %v464 = vand.u32 %v358, %v444
  %v467 = vand.u32 %v359, %v444
  %v470 = vand.u32 %v360, %v444
  %v473 = vand.u32 %v361, %v444
  %v476 = vand.u32 %v362, %v444
  %v479 = vand.u32 %v363, %v444
  %v482 = vand.u32 %v364, %v444
  %v485 = vand.u32 %v365, %v444
  %v488 = vand.u32 %v366, %v444
  %v491 = vand.u32 %v367, %v444
  %493 = vmatprep.subr.bf16.mxu0 0
  %494 = vmatpush1.bf16.msra.mxu0 0
  %495 = vmatprep.subr.bf16.mxu0 0
  %496 = vmatpush1.bf16.msra.mxu0 0
  %497 = vmatprep.subr.bf16.mxu0 0
  %498 = vmatpush1.bf16.msra.mxu0 0
  %499 = vmatprep.subr.bf16.mxu0 0
  %500 = vmatpush1.bf16.msra.mxu0 0
  %501 = vmatprep.subr.bf16.mxu0 %v449
  %502 = vmatpush1.bf16.msra.mxu0 %v446
  %503 = vmatprep.subr.bf16.mxu0 %v337
  %504 = vmatpush1.bf16.msra.mxu0 %v336
  %505 = vmatprep.subr.bf16.mxu0 %v321
  %506 = vmatpush1.bf16.msra.mxu0 %v320
  %507 = vmatprep.subr.bf16.mxu0 %v305
  %508 = vmatpush1.bf16.msra.mxu0 %v304
  %509 = vmatprep.subr.bf16.mxu0 0
  %510 = vmatpush2.bf16.msra.mxu0 0
  %511 = vmatprep.subr.bf16.mxu0 0
  %512 = vmatpush2.bf16.msra.mxu0 0
  %513 = vmatprep.subr.bf16.mxu0 0
  %514 = vmatpush2.bf16.msra.mxu0 0
  %515 = vmatprep.subr.bf16.mxu0 0
  %516 = vmatpush2.bf16.msra.mxu0 0
  %517 = vmatprep.subr.bf16.mxu0 0
  %518 = vmatpush2.bf16.msra.mxu0 0
  %519 = vmatprep.subr.bf16.mxu0 0
  %520 = vmatpush2.bf16.msra.mxu0 0
  %521 = vmatprep.subr.bf16.mxu0 0
  %522 = vmatpush2.bf16.msra.mxu0 0
  %523 = vmatprep.subr.bf16.mxu0 0
  %524 = vmatpush2.bf16.msra.mxu0 0
  %525 = vmatprep.mubr.bf16.mxu0 0
  %526 = vmatmul.mubr.bf16.gmra.mxu0 %v418
  %v527 = vpop.f32.mrf.mxu0
  %v528 = vadd.f32 0.0, %v527
  %v529 = vpop.f32.mrf.mxu0
  %v530 = vadd.f32 0.0, %v529
  %v531 = vpop.f32.mrf.mxu0
  %v532 = vadd.f32 0.0, %v531
  %v533 = vpop.f32.mrf.mxu0
  %v534 = vadd.f32 0.0, %v533
  %535 = vmatprep.mubr.bf16.mxu0 0
  %536 = vmatmul.mubr.bf16.gmra.mxu0 %v421
  %v537 = vpop.f32.mrf.mxu0
  %v538 = vadd.f32 0.0, %v537
  %v539 = vpop.f32.mrf.mxu0
  %v540 = vadd.f32 0.0, %v539
  %v541 = vpop.f32.mrf.mxu0
  %v542 = vadd.f32 0.0, %v541
  %v543 = vpop.f32.mrf.mxu0
  %v544 = vadd.f32 0.0, %v543
  %545 = vmatprep.mubr.bf16.mxu0 0
  %546 = vmatmul.mubr.bf16.gmra.mxu0 %v424
  %v547 = vpop.f32.mrf.mxu0
  %v548 = vadd.f32 0.0, %v547
  %v549 = vpop.f32.mrf.mxu0
  %v550 = vadd.f32 0.0, %v549
  %v551 = vpop.f32.mrf.mxu0
  %v552 = vadd.f32 0.0, %v551
  %v553 = vpop.f32.mrf.mxu0
  %v554 = vadd.f32 0.0, %v553
  %555 = vmatprep.mubr.bf16.mxu0 0
  %556 = vmatmul.mubr.bf16.gmra.mxu0 %v427
  %v557 = vpop.f32.mrf.mxu0
  %v558 = vadd.f32 0.0, %v557
  %v559 = vpop.f32.mrf.mxu0
  %v560 = vadd.f32 0.0, %v559
  %v561 = vpop.f32.mrf.mxu0
  %v562 = vadd.f32 0.0, %v561
  %v563 = vpop.f32.mrf.mxu0
  %v564 = vadd.f32 0.0, %v563
  %565 = vmatprep.mubr.bf16.mxu0 0
  %566 = vmatmul.mubr.bf16.gmra.mxu0 %v430
  %v567 = vpop.f32.mrf.mxu0
  %v568 = vadd.f32 0.0, %v567
  %v569 = vpop.f32.mrf.mxu0
  %v570 = vadd.f32 0.0, %v569
  %v571 = vpop.f32.mrf.mxu0
  %v572 = vadd.f32 0.0, %v571
  %v573 = vpop.f32.mrf.mxu0
  %v574 = vadd.f32 0.0, %v573
  %575 = vmatprep.mubr.bf16.mxu0 0
  %576 = vmatmul.mubr.bf16.gmra.mxu0 %v433
  %v577 = vpop.f32.mrf.mxu0
  %v578 = vadd.f32 0.0, %v577
  %v579 = vpop.f32.mrf.mxu0
  %v580 = vadd.f32 0.0, %v579
  %v581 = vpop.f32.mrf.mxu0
  %v582 = vadd.f32 0.0, %v581
  %v583 = vpop.f32.mrf.mxu0
  %v584 = vadd.f32 0.0, %v583
  %585 = vmatprep.mubr.bf16.mxu0 0
  %586 = vmatmul.mubr.bf16.gmra.mxu0 %v436
  %v587 = vpop.f32.mrf.mxu0
  %v588 = vadd.f32 0.0, %v587
  %v589 = vpop.f32.mrf.mxu0
  %v590 = vadd.f32 0.0, %v589
  %v591 = vpop.f32.mrf.mxu0
  %v592 = vadd.f32 0.0, %v591
  %v593 = vpop.f32.mrf.mxu0
  %v594 = vadd.f32 0.0, %v593
  %595 = vmatprep.mubr.bf16.mxu0 0
  %596 = vmatmul.mubr.bf16.gmra.mxu0 %v439
  %v597 = vpop.f32.mrf.mxu0
  %v598 = vadd.f32 0.0, %v597
  %v599 = vpop.f32.mrf.mxu0
  %v600 = vadd.f32 0.0, %v599
  %v601 = vpop.f32.mrf.mxu0
  %v602 = vadd.f32 0.0, %v601
  %v603 = vpop.f32.mrf.mxu0
  %v604 = vadd.f32 0.0, %v603
  %605 = vdwg.mxu0
  %606 = vmatprep.subr.bf16.mxu0 0
  %607 = vmatpush1.bf16.msra.mxu0 0
  %608 = vmatprep.subr.bf16.mxu0 0
  %609 = vmatpush1.bf16.msra.mxu0 0
  %610 = vmatprep.subr.bf16.mxu0 0
  %611 = vmatpush1.bf16.msra.mxu0 0
  %612 = vmatprep.subr.bf16.mxu0 0
  %613 = vmatpush1.bf16.msra.mxu0 0
  %614 = vmatprep.subr.bf16.mxu0 %v455
  %615 = vmatpush1.bf16.msra.mxu0 %v452
  %616 = vmatprep.subr.bf16.mxu0 %v339
  %617 = vmatpush1.bf16.msra.mxu0 %v338
  %618 = vmatprep.subr.bf16.mxu0 %v323
  %619 = vmatpush1.bf16.msra.mxu0 %v322
  %620 = vmatprep.subr.bf16.mxu0 %v307
  %621 = vmatpush1.bf16.msra.mxu0 %v306
  %622 = vmatprep.subr.bf16.mxu0 0
  %623 = vmatpush2.bf16.msra.mxu0 0
  %624 = vmatprep.subr.bf16.mxu0 0
  %625 = vmatpush2.bf16.msra.mxu0 0
  %626 = vmatprep.subr.bf16.mxu0 0
  %627 = vmatpush2.bf16.msra.mxu0 0
  %628 = vmatprep.subr.bf16.mxu0 0
  %629 = vmatpush2.bf16.msra.mxu0 0
  %630 = vmatprep.subr.bf16.mxu0 0
  %631 = vmatpush2.bf16.msra.mxu0 0
  %632 = vmatprep.subr.bf16.mxu0 0
  %633 = vmatpush2.bf16.msra.mxu0 0
  %634 = vmatprep.subr.bf16.mxu0 0
  %635 = vmatpush2.bf16.msra.mxu0 0
  %636 = vmatprep.subr.bf16.mxu0 0
  %637 = vmatpush2.bf16.msra.mxu0 0
  %638 = vmatprep.mubr.bf16.mxu0 0
  %639 = vmatmul.mubr.bf16.gmra.mxu0 %v418
  %v640 = vpop.f32.mrf.mxu0
  %v641 = vadd.f32 0.0, %v640
  %v642 = vpop.f32.mrf.mxu0
  %v643 = vadd.f32 0.0, %v642
  %v644 = vpop.f32.mrf.mxu0
  %v645 = vadd.f32 0.0, %v644
  %v646 = vpop.f32.mrf.mxu0
  %v647 = vadd.f32 0.0, %v646
  %648 = vmatprep.mubr.bf16.mxu0 0
  %649 = vmatmul.mubr.bf16.gmra.mxu0 %v421
  %v650 = vpop.f32.mrf.mxu0
  %v651 = vadd.f32 0.0, %v650
  %v652 = vpop.f32.mrf.mxu0
  %v653 = vadd.f32 0.0, %v652
  %v654 = vpop.f32.mrf.mxu0
  %v655 = vadd.f32 0.0, %v654
  %v656 = vpop.f32.mrf.mxu0
  %v657 = vadd.f32 0.0, %v656
  %658 = vmatprep.mubr.bf16.mxu0 0
  %659 = vmatmul.mubr.bf16.gmra.mxu0 %v424
  %v660 = vpop.f32.mrf.mxu0
  %v661 = vadd.f32 0.0, %v660
  %v662 = vpop.f32.mrf.mxu0
  %v663 = vadd.f32 0.0, %v662
  %v664 = vpop.f32.mrf.mxu0
  %v665 = vadd.f32 0.0, %v664
  %v666 = vpop.f32.mrf.mxu0
  %v667 = vadd.f32 0.0, %v666
  %668 = vmatprep.mubr.bf16.mxu0 0
  %669 = vmatmul.mubr.bf16.gmra.mxu0 %v427
  %v670 = vpop.f32.mrf.mxu0
  %v671 = vadd.f32 0.0, %v670
  %v672 = vpop.f32.mrf.mxu0
  %v673 = vadd.f32 0.0, %v672
  %v674 = vpop.f32.mrf.mxu0
  %v675 = vadd.f32 0.0, %v674
  %v676 = vpop.f32.mrf.mxu0
  %v677 = vadd.f32 0.0, %v676
  %678 = vmatprep.mubr.bf16.mxu0 0
  %679 = vmatmul.mubr.bf16.gmra.mxu0 %v430
  %v680 = vpop.f32.mrf.mxu0
  %v681 = vadd.f32 0.0, %v680
  %v682 = vpop.f32.mrf.mxu0
  %v683 = vadd.f32 0.0, %v682
  %v684 = vpop.f32.mrf.mxu0
  %v685 = vadd.f32 0.0, %v684
  %v686 = vpop.f32.mrf.mxu0
  %v687 = vadd.f32 0.0, %v686
  %688 = vmatprep.mubr.bf16.mxu0 0
  %689 = vmatmul.mubr.bf16.gmra.mxu0 %v433
  %v690 = vpop.f32.mrf.mxu0
  %v691 = vadd.f32 0.0, %v690
  %v692 = vpop.f32.mrf.mxu0
  %v693 = vadd.f32 0.0, %v692
  %v694 = vpop.f32.mrf.mxu0
  %v695 = vadd.f32 0.0, %v694
  %v696 = vpop.f32.mrf.mxu0
  %v697 = vadd.f32 0.0, %v696
  %698 = vmatprep.mubr.bf16.mxu0 0
  %699 = vmatmul.mubr.bf16.gmra.mxu0 %v436
  %v700 = vpop.f32.mrf.mxu0
  %v701 = vadd.f32 0.0, %v700
  %v702 = vpop.f32.mrf.mxu0
  %v703 = vadd.f32 0.0, %v702
  %v704 = vpop.f32.mrf.mxu0
  %v705 = vadd.f32 0.0, %v704
  %v706 = vpop.f32.mrf.mxu0
  %v707 = vadd.f32 0.0, %v706
  %708 = vmatprep.mubr.bf16.mxu0 0
  %709 = vmatmul.mubr.bf16.gmra.mxu0 %v439
  %v710 = vpop.f32.mrf.mxu0
  %v711 = vadd.f32 0.0, %v710
  %v712 = vpop.f32.mrf.mxu0
  %v713 = vadd.f32 0.0, %v712
  %v714 = vpop.f32.mrf.mxu0
  %v715 = vadd.f32 0.0, %v714
  %v716 = vpop.f32.mrf.mxu0
  %v717 = vadd.f32 0.0, %v716
  %718 = vdwg.mxu0
  %719 = vmatprep.subr.bf16.mxu0 0
  %720 = vmatpush1.bf16.msra.mxu0 0
  %721 = vmatprep.subr.bf16.mxu0 0
  %722 = vmatpush1.bf16.msra.mxu0 0
  %723 = vmatprep.subr.bf16.mxu0 0
  %724 = vmatpush1.bf16.msra.mxu0 0
  %725 = vmatprep.subr.bf16.mxu0 0
  %726 = vmatpush1.bf16.msra.mxu0 0
  %727 = vmatprep.subr.bf16.mxu0 %v461
  %728 = vmatpush1.bf16.msra.mxu0 %v458
  %729 = vmatprep.subr.bf16.mxu0 %v341
  %730 = vmatpush1.bf16.msra.mxu0 %v340
  %731 = vmatprep.subr.bf16.mxu0 %v325
  %732 = vmatpush1.bf16.msra.mxu0 %v324
  %733 = vmatprep.subr.bf16.mxu0 %v309
  %734 = vmatpush1.bf16.msra.mxu0 %v308
  %735 = vmatprep.subr.bf16.mxu0 0
  %736 = vmatpush2.bf16.msra.mxu0 0
  %737 = vmatprep.subr.bf16.mxu0 0
  %738 = vmatpush2.bf16.msra.mxu0 0
  %739 = vmatprep.subr.bf16.mxu0 0
  %740 = vmatpush2.bf16.msra.mxu0 0
  %741 = vmatprep.subr.bf16.mxu0 0
  %742 = vmatpush2.bf16.msra.mxu0 0
  %743 = vmatprep.subr.bf16.mxu0 0
  %744 = vmatpush2.bf16.msra.mxu0 0
  %745 = vmatprep.subr.bf16.mxu0 0
  %746 = vmatpush2.bf16.msra.mxu0 0
  %747 = vmatprep.subr.bf16.mxu0 0
  %748 = vmatpush2.bf16.msra.mxu0 0
  %749 = vmatprep.subr.bf16.mxu0 0
  %750 = vmatpush2.bf16.msra.mxu0 0
  %751 = vmatprep.mubr.bf16.mxu0 0
  %752 = vmatmul.mubr.bf16.gmra.mxu0 %v418
  %v753 = vpop.f32.mrf.mxu0
  %v754 = vadd.f32 0.0, %v753
  %v755 = vpop.f32.mrf.mxu0
  %v756 = vadd.f32 0.0, %v755
  %v757 = vpop.f32.mrf.mxu0
  %v758 = vadd.f32 0.0, %v757
  %v759 = vpop.f32.mrf.mxu0
  %v760 = vadd.f32 0.0, %v759
  %761 = vmatprep.mubr.bf16.mxu0 0
  %762 = vmatmul.mubr.bf16.gmra.mxu0 %v421
  %v763 = vpop.f32.mrf.mxu0
  %v764 = vadd.f32 0.0, %v763
  %v765 = vpop.f32.mrf.mxu0
  %v766 = vadd.f32 0.0, %v765
  %v767 = vpop.f32.mrf.mxu0
  %v768 = vadd.f32 0.0, %v767
  %v769 = vpop.f32.mrf.mxu0
  %v770 = vadd.f32 0.0, %v769
  %771 = vmatprep.mubr.bf16.mxu0 0
  %772 = vmatmul.mubr.bf16.gmra.mxu0 %v424
  %v773 = vpop.f32.mrf.mxu0
  %v774 = vadd.f32 0.0, %v773
  %v775 = vpop.f32.mrf.mxu0
  %v776 = vadd.f32 0.0, %v775
  %v777 = vpop.f32.mrf.mxu0
  %v778 = vadd.f32 0.0, %v777
  %v779 = vpop.f32.mrf.mxu0
  %v780 = vadd.f32 0.0, %v779
  %781 = vmatprep.mubr.bf16.mxu0 0
  %782 = vmatmul.mubr.bf16.gmra.mxu0 %v427
  %v783 = vpop.f32.mrf.mxu0
  %v784 = vadd.f32 0.0, %v783
  %v785 = vpop.f32.mrf.mxu0
  %v786 = vadd.f32 0.0, %v785
  %v787 = vpop.f32.mrf.mxu0
  %v788 = vadd.f32 0.0, %v787
  %v789 = vpop.f32.mrf.mxu0
  %v790 = vadd.f32 0.0, %v789
  %791 = vmatprep.mubr.bf16.mxu0 0
  %792 = vmatmul.mubr.bf16.gmra.mxu0 %v430
  %v793 = vpop.f32.mrf.mxu0
  %v794 = vadd.f32 0.0, %v793
  %v795 = vpop.f32.mrf.mxu0
  %v796 = vadd.f32 0.0, %v795
  %v797 = vpop.f32.mrf.mxu0
  %v798 = vadd.f32 0.0, %v797
  %v799 = vpop.f32.mrf.mxu0
  %v800 = vadd.f32 0.0, %v799
  %801 = vmatprep.mubr.bf16.mxu0 0
  %802 = vmatmul.mubr.bf16.gmra.mxu0 %v433
  %v803 = vpop.f32.mrf.mxu0
  %v804 = vadd.f32 0.0, %v803
  %v805 = vpop.f32.mrf.mxu0
  %v806 = vadd.f32 0.0, %v805
  %v807 = vpop.f32.mrf.mxu0
  %v808 = vadd.f32 0.0, %v807
  %v809 = vpop.f32.mrf.mxu0
  %v810 = vadd.f32 0.0, %v809
  %811 = vmatprep.mubr.bf16.mxu0 0
  %812 = vmatmul.mubr.bf16.gmra.mxu0 %v436
  %v813 = vpop.f32.mrf.mxu0
  %v814 = vadd.f32 0.0, %v813
  %v815 = vpop.f32.mrf.mxu0
  %v816 = vadd.f32 0.0, %v815
  %v817 = vpop.f32.mrf.mxu0
  %v818 = vadd.f32 0.0, %v817
  %v819 = vpop.f32.mrf.mxu0
  %v820 = vadd.f32 0.0, %v819
  %821 = vmatprep.mubr.bf16.mxu0 0
  %822 = vmatmul.mubr.bf16.gmra.mxu0 %v439
  %v823 = vpop.f32.mrf.mxu0
  %v824 = vadd.f32 0.0, %v823
  %v825 = vpop.f32.mrf.mxu0
  %v826 = vadd.f32 0.0, %v825
  %v827 = vpop.f32.mrf.mxu0
  %v828 = vadd.f32 0.0, %v827
  %v829 = vpop.f32.mrf.mxu0
  %v830 = vadd.f32 0.0, %v829
  %831 = vdwg.mxu0
  %832 = vmatprep.subr.bf16.mxu0 0
  %833 = vmatpush1.bf16.msra.mxu0 0
  %834 = vmatprep.subr.bf16.mxu0 0
  %835 = vmatpush1.bf16.msra.mxu0 0
  %836 = vmatprep.subr.bf16.mxu0 0
  %837 = vmatpush1.bf16.msra.mxu0 0
  %838 = vmatprep.subr.bf16.mxu0 0
  %839 = vmatpush1.bf16.msra.mxu0 0
  %840 = vmatprep.subr.bf16.mxu0 %v467
  %841 = vmatpush1.bf16.msra.mxu0 %v464
  %842 = vmatprep.subr.bf16.mxu0 %v343
  %843 = vmatpush1.bf16.msra.mxu0 %v342
  %844 = vmatprep.subr.bf16.mxu0 %v327
  %845 = vmatpush1.bf16.msra.mxu0 %v326
  %846 = vmatprep.subr.bf16.mxu0 %v311
  %847 = vmatpush1.bf16.msra.mxu0 %v310
  %848 = vmatprep.subr.bf16.mxu0 0
  %849 = vmatpush2.bf16.msra.mxu0 0
  %850 = vmatprep.subr.bf16.mxu0 0
  %851 = vmatpush2.bf16.msra.mxu0 0
  %852 = vmatprep.subr.bf16.mxu0 0
  %853 = vmatpush2.bf16.msra.mxu0 0
  %854 = vmatprep.subr.bf16.mxu0 0
  %855 = vmatpush2.bf16.msra.mxu0 0
  %856 = vmatprep.subr.bf16.mxu0 0
  %857 = vmatpush2.bf16.msra.mxu0 0
  %858 = vmatprep.subr.bf16.mxu0 0
  %859 = vmatpush2.bf16.msra.mxu0 0
  %860 = vmatprep.subr.bf16.mxu0 0
  %861 = vmatpush2.bf16.msra.mxu0 0
  %862 = vmatprep.subr.bf16.mxu0 0
  %863 = vmatpush2.bf16.msra.mxu0 0
  %864 = vmatprep.mubr.bf16.mxu0 0
  %865 = vmatmul.mubr.bf16.gmra.mxu0 %v418
  %v866 = vpop.f32.mrf.mxu0
  %v867 = vadd.f32 0.0, %v866
  %v868 = vpop.f32.mrf.mxu0
  %v869 = vadd.f32 0.0, %v868
  %v870 = vpop.f32.mrf.mxu0
  %v871 = vadd.f32 0.0, %v870
  %v872 = vpop.f32.mrf.mxu0
  %v873 = vadd.f32 0.0, %v872
  %874 = vmatprep.mubr.bf16.mxu0 0
  %875 = vmatmul.mubr.bf16.gmra.mxu0 %v421
  %v876 = vpop.f32.mrf.mxu0
  %v877 = vadd.f32 0.0, %v876
  %v878 = vpop.f32.mrf.mxu0
  %v879 = vadd.f32 0.0, %v878
  %v880 = vpop.f32.mrf.mxu0
  %v881 = vadd.f32 0.0, %v880
  %v882 = vpop.f32.mrf.mxu0
  %v883 = vadd.f32 0.0, %v882
  %884 = vmatprep.mubr.bf16.mxu0 0
  %885 = vmatmul.mubr.bf16.gmra.mxu0 %v424
  %v886 = vpop.f32.mrf.mxu0
  %v887 = vadd.f32 0.0, %v886
  %v888 = vpop.f32.mrf.mxu0
  %v889 = vadd.f32 0.0, %v888
  %v890 = vpop.f32.mrf.mxu0
  %v891 = vadd.f32 0.0, %v890
  %v892 = vpop.f32.mrf.mxu0
  %v893 = vadd.f32 0.0, %v892
  %894 = vmatprep.mubr.bf16.mxu0 0
  %895 = vmatmul.mubr.bf16.gmra.mxu0 %v427
  %v896 = vpop.f32.mrf.mxu0
  %v897 = vadd.f32 0.0, %v896
  %v898 = vpop.f32.mrf.mxu0
  %v899 = vadd.f32 0.0, %v898
  %v900 = vpop.f32.mrf.mxu0
  %v901 = vadd.f32 0.0, %v900
  %v902 = vpop.f32.mrf.mxu0
  %v903 = vadd.f32 0.0, %v902
  %904 = vmatprep.mubr.bf16.mxu0 0
  %905 = vmatmul.mubr.bf16.gmra.mxu0 %v430
  %v906 = vpop.f32.mrf.mxu0
  %v907 = vadd.f32 0.0, %v906
  %v908 = vpop.f32.mrf.mxu0
  %v909 = vadd.f32 0.0, %v908
  %v910 = vpop.f32.mrf.mxu0
  %v911 = vadd.f32 0.0, %v910
  %v912 = vpop.f32.mrf.mxu0
  %v913 = vadd.f32 0.0, %v912
  %914 = vmatprep.mubr.bf16.mxu0 0
  %915 = vmatmul.mubr.bf16.gmra.mxu0 %v433
  %v916 = vpop.f32.mrf.mxu0
  %v917 = vadd.f32 0.0, %v916
  %v918 = vpop.f32.mrf.mxu0
  %v919 = vadd.f32 0.0, %v918
  %v920 = vpop.f32.mrf.mxu0
  %v921 = vadd.f32 0.0, %v920
  %v922 = vpop.f32.mrf.mxu0
  %v923 = vadd.f32 0.0, %v922
  %924 = vmatprep.mubr.bf16.mxu0 0
  %925 = vmatmul.mubr.bf16.gmra.mxu0 %v436
  %v926 = vpop.f32.mrf.mxu0
  %v927 = vadd.f32 0.0, %v926
  %v928 = vpop.f32.mrf.mxu0
  %v929 = vadd.f32 0.0, %v928
  %v930 = vpop.f32.mrf.mxu0
  %v931 = vadd.f32 0.0, %v930
  %v932 = vpop.f32.mrf.mxu0
  %v933 = vadd.f32 0.0, %v932
  %934 = vmatprep.mubr.bf16.mxu0 0
  %935 = vmatmul.mubr.bf16.gmra.mxu0 %v439
  %v936 = vpop.f32.mrf.mxu0
  %v937 = vadd.f32 0.0, %v936
  %v938 = vpop.f32.mrf.mxu0
  %v939 = vadd.f32 0.0, %v938
  %v940 = vpop.f32.mrf.mxu0
  %v941 = vadd.f32 0.0, %v940
  %v942 = vpop.f32.mrf.mxu0
  %v943 = vadd.f32 0.0, %v942
  %944 = vdwg.mxu0
  %945 = vmatprep.subr.bf16.mxu0 0
  %946 = vmatpush1.bf16.msra.mxu0 0
  %947 = vmatprep.subr.bf16.mxu0 0
  %948 = vmatpush1.bf16.msra.mxu0 0
  %949 = vmatprep.subr.bf16.mxu0 0
  %950 = vmatpush1.bf16.msra.mxu0 0
  %951 = vmatprep.subr.bf16.mxu0 0
  %952 = vmatpush1.bf16.msra.mxu0 0
  %953 = vmatprep.subr.bf16.mxu0 %v473
  %954 = vmatpush1.bf16.msra.mxu0 %v470
  %955 = vmatprep.subr.bf16.mxu0 %v345
  %956 = vmatpush1.bf16.msra.mxu0 %v344
  %957 = vmatprep.subr.bf16.mxu0 %v329
  %958 = vmatpush1.bf16.msra.mxu0 %v328
  %959 = vmatprep.subr.bf16.mxu0 %v313
  %960 = vmatpush1.bf16.msra.mxu0 %v312
  %961 = vmatprep.subr.bf16.mxu0 0
  %962 = vmatpush2.bf16.msra.mxu0 0
  %963 = vmatprep.subr.bf16.mxu0 0
  %964 = vmatpush2.bf16.msra.mxu0 0
  %965 = vmatprep.subr.bf16.mxu0 0
  %966 = vmatpush2.bf16.msra.mxu0 0
  %967 = vmatprep.subr.bf16.mxu0 0
  %968 = vmatpush2.bf16.msra.mxu0 0
  %969 = vmatprep.subr.bf16.mxu0 0
  %970 = vmatpush2.bf16.msra.mxu0 0
  %971 = vmatprep.subr.bf16.mxu0 0
  %972 = vmatpush2.bf16.msra.mxu0 0
  %973 = vmatprep.subr.bf16.mxu0 0
  %974 = vmatpush2.bf16.msra.mxu0 0
  %975 = vmatprep.subr.bf16.mxu0 0
  %976 = vmatpush2.bf16.msra.mxu0 0
  %977 = vmatprep.mubr.bf16.mxu0 0
  %978 = vmatmul.mubr.bf16.gmra.mxu0 %v418
  %v979 = vpop.f32.mrf.mxu0
  %v980 = vadd.f32 0.0, %v979
  %v981 = vpop.f32.mrf.mxu0
  %v982 = vadd.f32 0.0, %v981
  %v983 = vpop.f32.mrf.mxu0
  %v984 = vadd.f32 0.0, %v983
  %v985 = vpop.f32.mrf.mxu0
  %v986 = vadd.f32 0.0, %v985
  %987 = vmatprep.mubr.bf16.mxu0 0
  %988 = vmatmul.mubr.bf16.gmra.mxu0 %v421
  %v989 = vpop.f32.mrf.mxu0
  %v990 = vadd.f32 0.0, %v989
  %v991 = vpop.f32.mrf.mxu0
  %v992 = vadd.f32 0.0, %v991
  %v993 = vpop.f32.mrf.mxu0
  %v994 = vadd.f32 0.0, %v993
  %v995 = vpop.f32.mrf.mxu0
  %v996 = vadd.f32 0.0, %v995
  %997 = vmatprep.mubr.bf16.mxu0 0
  %998 = vmatmul.mubr.bf16.gmra.mxu0 %v424
  %v999 = vpop.f32.mrf.mxu0
  %v1000 = vadd.f32 0.0, %v999
  %v1001 = vpop.f32.mrf.mxu0
  %v1002 = vadd.f32 0.0, %v1001
  %v1003 = vpop.f32.mrf.mxu0
  %v1004 = vadd.f32 0.0, %v1003
  %v1005 = vpop.f32.mrf.mxu0
  %v1006 = vadd.f32 0.0, %v1005
  %1007 = vmatprep.mubr.bf16.mxu0 0
  %1008 = vmatmul.mubr.bf16.gmra.mxu0 %v427
  %v1009 = vpop.f32.mrf.mxu0
  %v1010 = vadd.f32 0.0, %v1009
  %v1011 = vpop.f32.mrf.mxu0
  %v1012 = vadd.f32 0.0, %v1011
  %v1013 = vpop.f32.mrf.mxu0
  %v1014 = vadd.f32 0.0, %v1013
  %v1015 = vpop.f32.mrf.mxu0
  %v1016 = vadd.f32 0.0, %v1015
  %1017 = vmatprep.mubr.bf16.mxu0 0
  %1018 = vmatmul.mubr.bf16.gmra.mxu0 %v430
  %v1019 = vpop.f32.mrf.mxu0
  %v1020 = vadd.f32 0.0, %v1019
  %v1021 = vpop.f32.mrf.mxu0
  %v1022 = vadd.f32 0.0, %v1021
  %v1023 = vpop.f32.mrf.mxu0
  %v1024 = vadd.f32 0.0, %v1023
  %v1025 = vpop.f32.mrf.mxu0
  %v1026 = vadd.f32 0.0, %v1025
  %1027 = vmatprep.mubr.bf16.mxu0 0
  %1028 = vmatmul.mubr.bf16.gmra.mxu0 %v433
  %v1029 = vpop.f32.mrf.mxu0
  %v1030 = vadd.f32 0.0, %v1029
  %v1031 = vpop.f32.mrf.mxu0
  %v1032 = vadd.f32 0.0, %v1031
  %v1033 = vpop.f32.mrf.mxu0
  %v1034 = vadd.f32 0.0, %v1033
  %v1035 = vpop.f32.mrf.mxu0
  %v1036 = vadd.f32 0.0, %v1035
  %1037 = vmatprep.mubr.bf16.mxu0 0
  %1038 = vmatmul.mubr.bf16.gmra.mxu0 %v436
  %v1039 = vpop.f32.mrf.mxu0
  %v1040 = vadd.f32 0.0, %v1039
  %v1041 = vpop.f32.mrf.mxu0
  %v1042 = vadd.f32 0.0, %v1041
  %v1043 = vpop.f32.mrf.mxu0
  %v1044 = vadd.f32 0.0, %v1043
  %v1045 = vpop.f32.mrf.mxu0
  %v1046 = vadd.f32 0.0, %v1045
  %1047 = vmatprep.mubr.bf16.mxu0 0
  %1048 = vmatmul.mubr.bf16.gmra.mxu0 %v439
  %v1049 = vpop.f32.mrf.mxu0
  %v1050 = vadd.f32 0.0, %v1049
  %v1051 = vpop.f32.mrf.mxu0
  %v1052 = vadd.f32 0.0, %v1051
  %v1053 = vpop.f32.mrf.mxu0
  %v1054 = vadd.f32 0.0, %v1053
  %v1055 = vpop.f32.mrf.mxu0
  %v1056 = vadd.f32 0.0, %v1055
  %1057 = vdwg.mxu0
  %1058 = vmatprep.subr.bf16.mxu0 0
  %1059 = vmatpush1.bf16.msra.mxu0 0
  %1060 = vmatprep.subr.bf16.mxu0 0
  %1061 = vmatpush1.bf16.msra.mxu0 0
  %1062 = vmatprep.subr.bf16.mxu0 0
  %1063 = vmatpush1.bf16.msra.mxu0 0
  %1064 = vmatprep.subr.bf16.mxu0 0
  %1065 = vmatpush1.bf16.msra.mxu0 0
  %1066 = vmatprep.subr.bf16.mxu0 %v479
  %1067 = vmatpush1.bf16.msra.mxu0 %v476
  %1068 = vmatprep.subr.bf16.mxu0 %v347
  %1069 = vmatpush1.bf16.msra.mxu0 %v346
  %1070 = vmatprep.subr.bf16.mxu0 %v331
  %1071 = vmatpush1.bf16.msra.mxu0 %v330
  %1072 = vmatprep.subr.bf16.mxu0 %v315
  %1073 = vmatpush1.bf16.msra.mxu0 %v314
  %1074 = vmatprep.subr.bf16.mxu0 0
  %1075 = vmatpush2.bf16.msra.mxu0 0
  %1076 = vmatprep.subr.bf16.mxu0 0
  %1077 = vmatpush2.bf16.msra.mxu0 0
  %1078 = vmatprep.subr.bf16.mxu0 0
  %1079 = vmatpush2.bf16.msra.mxu0 0
  %1080 = vmatprep.subr.bf16.mxu0 0
  %1081 = vmatpush2.bf16.msra.mxu0 0
  %1082 = vmatprep.subr.bf16.mxu0 0
  %1083 = vmatpush2.bf16.msra.mxu0 0
  %1084 = vmatprep.subr.bf16.mxu0 0
  %1085 = vmatpush2.bf16.msra.mxu0 0
  %1086 = vmatprep.subr.bf16.mxu0 0
  %1087 = vmatpush2.bf16.msra.mxu0 0
  %1088 = vmatprep.subr.bf16.mxu0 0
  %1089 = vmatpush2.bf16.msra.mxu0 0
  %1090 = vmatprep.mubr.bf16.mxu0 0
  %1091 = vmatmul.mubr.bf16.gmra.mxu0 %v418
  %v1092 = vpop.f32.mrf.mxu0
  %v1093 = vadd.f32 0.0, %v1092
  %v1094 = vpop.f32.mrf.mxu0
  %v1095 = vadd.f32 0.0, %v1094
  %v1096 = vpop.f32.mrf.mxu0
  %v1097 = vadd.f32 0.0, %v1096
  %v1098 = vpop.f32.mrf.mxu0
  %v1099 = vadd.f32 0.0, %v1098
  %1100 = vmatprep.mubr.bf16.mxu0 0
  %1101 = vmatmul.mubr.bf16.gmra.mxu0 %v421
  %v1102 = vpop.f32.mrf.mxu0
  %v1103 = vadd.f32 0.0, %v1102
  %v1104 = vpop.f32.mrf.mxu0
  %v1105 = vadd.f32 0.0, %v1104
  %v1106 = vpop.f32.mrf.mxu0
  %v1107 = vadd.f32 0.0, %v1106
  %v1108 = vpop.f32.mrf.mxu0
  %v1109 = vadd.f32 0.0, %v1108
  %1110 = vmatprep.mubr.bf16.mxu0 0
  %1111 = vmatmul.mubr.bf16.gmra.mxu0 %v424
  %v1112 = vpop.f32.mrf.mxu0
  %v1113 = vadd.f32 0.0, %v1112
  %v1114 = vpop.f32.mrf.mxu0
  %v1115 = vadd.f32 0.0, %v1114
  %v1116 = vpop.f32.mrf.mxu0
  %v1117 = vadd.f32 0.0, %v1116
  %v1118 = vpop.f32.mrf.mxu0
  %v1119 = vadd.f32 0.0, %v1118
  %1120 = vmatprep.mubr.bf16.mxu0 0
  %1121 = vmatmul.mubr.bf16.gmra.mxu0 %v427
  %v1122 = vpop.f32.mrf.mxu0
  %v1123 = vadd.f32 0.0, %v1122
  %v1124 = vpop.f32.mrf.mxu0
  %v1125 = vadd.f32 0.0, %v1124
  %v1126 = vpop.f32.mrf.mxu0
  %v1127 = vadd.f32 0.0, %v1126
  %v1128 = vpop.f32.mrf.mxu0
  %v1129 = vadd.f32 0.0, %v1128
  %1130 = vmatprep.mubr.bf16.mxu0 0
  %1131 = vmatmul.mubr.bf16.gmra.mxu0 %v430
  %v1132 = vpop.f32.mrf.mxu0
  %v1133 = vadd.f32 0.0, %v1132
  %v1134 = vpop.f32.mrf.mxu0
  %v1135 = vadd.f32 0.0, %v1134
  %v1136 = vpop.f32.mrf.mxu0
  %v1137 = vadd.f32 0.0, %v1136
  %v1138 = vpop.f32.mrf.mxu0
  %v1139 = vadd.f32 0.0, %v1138
  %1140 = vmatprep.mubr.bf16.mxu0 0
  %1141 = vmatmul.mubr.bf16.gmra.mxu0 %v433
  %v1142 = vpop.f32.mrf.mxu0
  %v1143 = vadd.f32 0.0, %v1142
  %v1144 = vpop.f32.mrf.mxu0
  %v1145 = vadd.f32 0.0, %v1144
  %v1146 = vpop.f32.mrf.mxu0
  %v1147 = vadd.f32 0.0, %v1146
  %v1148 = vpop.f32.mrf.mxu0
  %v1149 = vadd.f32 0.0, %v1148
  %1150 = vmatprep.mubr.bf16.mxu0 0
  %1151 = vmatmul.mubr.bf16.gmra.mxu0 %v436
  %v1152 = vpop.f32.mrf.mxu0
  %v1153 = vadd.f32 0.0, %v1152
  %v1154 = vpop.f32.mrf.mxu0
  %v1155 = vadd.f32 0.0, %v1154
  %v1156 = vpop.f32.mrf.mxu0
  %v1157 = vadd.f32 0.0, %v1156
  %v1158 = vpop.f32.mrf.mxu0
  %v1159 = vadd.f32 0.0, %v1158
  %1160 = vmatprep.mubr.bf16.mxu0 0
  %1161 = vmatmul.mubr.bf16.gmra.mxu0 %v439
  %v1162 = vpop.f32.mrf.mxu0
  %v1163 = vadd.f32 0.0, %v1162
  %v1164 = vpop.f32.mrf.mxu0
  %v1165 = vadd.f32 0.0, %v1164
  %v1166 = vpop.f32.mrf.mxu0
  %v1167 = vadd.f32 0.0, %v1166
  %v1168 = vpop.f32.mrf.mxu0
  %v1169 = vadd.f32 0.0, %v1168
  %1170 = vdwg.mxu0
  %1171 = vmatprep.subr.bf16.mxu0 0
  %1172 = vmatpush1.bf16.msra.mxu0 0
  %1173 = vmatprep.subr.bf16.mxu0 0
  %1174 = vmatpush1.bf16.msra.mxu0 0
  %1175 = vmatprep.subr.bf16.mxu0 0
  %1176 = vmatpush1.bf16.msra.mxu0 0
  %1177 = vmatprep.subr.bf16.mxu0 0
  %1178 = vmatpush1.bf16.msra.mxu0 0
  %1179 = vmatprep.subr.bf16.mxu0 %v485
  %1180 = vmatpush1.bf16.msra.mxu0 %v482
  %1181 = vmatprep.subr.bf16.mxu0 %v349
  %1182 = vmatpush1.bf16.msra.mxu0 %v348
  %1183 = vmatprep.subr.bf16.mxu0 %v333
  %1184 = vmatpush1.bf16.msra.mxu0 %v332
  %1185 = vmatprep.subr.bf16.mxu0 %v317
  %1186 = vmatpush1.bf16.msra.mxu0 %v316
  %1187 = vmatprep.subr.bf16.mxu0 0
  %1188 = vmatpush2.bf16.msra.mxu0 0
  %1189 = vmatprep.subr.bf16.mxu0 0
  %1190 = vmatpush2.bf16.msra.mxu0 0
  %1191 = vmatprep.subr.bf16.mxu0 0
  %1192 = vmatpush2.bf16.msra.mxu0 0
  %1193 = vmatprep.subr.bf16.mxu0 0
  %1194 = vmatpush2.bf16.msra.mxu0 0
  %1195 = vmatprep.subr.bf16.mxu0 0
  %1196 = vmatpush2.bf16.msra.mxu0 0
  %1197 = vmatprep.subr.bf16.mxu0 0
  %1198 = vmatpush2.bf16.msra.mxu0 0
  %1199 = vmatprep.subr.bf16.mxu0 0
  %1200 = vmatpush2.bf16.msra.mxu0 0
  %1201 = vmatprep.subr.bf16.mxu0 0
  %1202 = vmatpush2.bf16.msra.mxu0 0
  %1203 = vmatprep.mubr.bf16.mxu0 0
  %1204 = vmatmul.mubr.bf16.gmra.mxu0 %v418
  %v1205 = vpop.f32.mrf.mxu0
  %v1206 = vadd.f32 0.0, %v1205
  %v1207 = vpop.f32.mrf.mxu0
  %v1208 = vadd.f32 0.0, %v1207
  %v1209 = vpop.f32.mrf.mxu0
  %v1210 = vadd.f32 0.0, %v1209
  %v1211 = vpop.f32.mrf.mxu0
  %v1212 = vadd.f32 0.0, %v1211
  %1213 = vmatprep.mubr.bf16.mxu0 0
  %1214 = vmatmul.mubr.bf16.gmra.mxu0 %v421
  %v1215 = vpop.f32.mrf.mxu0
  %v1216 = vadd.f32 0.0, %v1215
  %v1217 = vpop.f32.mrf.mxu0
  %v1218 = vadd.f32 0.0, %v1217
  %v1219 = vpop.f32.mrf.mxu0
  %v1220 = vadd.f32 0.0, %v1219
  %v1221 = vpop.f32.mrf.mxu0
  %v1222 = vadd.f32 0.0, %v1221
  %1223 = vmatprep.mubr.bf16.mxu0 0
  %1224 = vmatmul.mubr.bf16.gmra.mxu0 %v424
  %v1225 = vpop.f32.mrf.mxu0
  %v1226 = vadd.f32 0.0, %v1225
  %v1227 = vpop.f32.mrf.mxu0
  %v1228 = vadd.f32 0.0, %v1227
  %v1229 = vpop.f32.mrf.mxu0
  %v1230 = vadd.f32 0.0, %v1229
  %v1231 = vpop.f32.mrf.mxu0
  %v1232 = vadd.f32 0.0, %v1231
  %1233 = vmatprep.mubr.bf16.mxu0 0
  %1234 = vmatmul.mubr.bf16.gmra.mxu0 %v427
  %v1235 = vpop.f32.mrf.mxu0
  %v1236 = vadd.f32 0.0, %v1235
  %v1237 = vpop.f32.mrf.mxu0
  %v1238 = vadd.f32 0.0, %v1237
  %v1239 = vpop.f32.mrf.mxu0
  %v1240 = vadd.f32 0.0, %v1239
  %v1241 = vpop.f32.mrf.mxu0
  %v1242 = vadd.f32 0.0, %v1241
  %1243 = vmatprep.mubr.bf16.mxu0 0
  %1244 = vmatmul.mubr.bf16.gmra.mxu0 %v430
  %v1245 = vpop.f32.mrf.mxu0
  %v1246 = vadd.f32 0.0, %v1245
  %v1247 = vpop.f32.mrf.mxu0
  %v1248 = vadd.f32 0.0, %v1247
  %v1249 = vpop.f32.mrf.mxu0
  %v1250 = vadd.f32 0.0, %v1249
  %v1251 = vpop.f32.mrf.mxu0
  %v1252 = vadd.f32 0.0, %v1251
  %1253 = vmatprep.mubr.bf16.mxu0 0
  %1254 = vmatmul.mubr.bf16.gmra.mxu0 %v433
  %v1255 = vpop.f32.mrf.mxu0
  %v1256 = vadd.f32 0.0, %v1255
  %v1257 = vpop.f32.mrf.mxu0
  %v1258 = vadd.f32 0.0, %v1257
  %v1259 = vpop.f32.mrf.mxu0
  %v1260 = vadd.f32 0.0, %v1259
  %v1261 = vpop.f32.mrf.mxu0
  %v1262 = vadd.f32 0.0, %v1261
  %1263 = vmatprep.mubr.bf16.mxu0 0
  %1264 = vmatmul.mubr.bf16.gmra.mxu0 %v436
  %v1265 = vpop.f32.mrf.mxu0
  %v1266 = vadd.f32 0.0, %v1265
  %v1267 = vpop.f32.mrf.mxu0
  %v1268 = vadd.f32 0.0, %v1267
  %v1269 = vpop.f32.mrf.mxu0
  %v1270 = vadd.f32 0.0, %v1269
  %v1271 = vpop.f32.mrf.mxu0
  %v1272 = vadd.f32 0.0, %v1271
  %1273 = vmatprep.mubr.bf16.mxu0 0
  %1274 = vmatmul.mubr.bf16.gmra.mxu0 %v439
  %v1275 = vpop.f32.mrf.mxu0
  %v1276 = vadd.f32 0.0, %v1275
  %v1277 = vpop.f32.mrf.mxu0
  %v1278 = vadd.f32 0.0, %v1277
  %v1279 = vpop.f32.mrf.mxu0
  %v1280 = vadd.f32 0.0, %v1279
  %v1281 = vpop.f32.mrf.mxu0
  %v1282 = vadd.f32 0.0, %v1281
  %1283 = vdwg.mxu0
  %1284 = vmatprep.subr.bf16.mxu0 0
  %1285 = vmatpush1.bf16.msra.mxu0 0
  %1286 = vmatprep.subr.bf16.mxu0 0
  %1287 = vmatpush1.bf16.msra.mxu0 0
  %1288 = vmatprep.subr.bf16.mxu0 0
  %1289 = vmatpush1.bf16.msra.mxu0 0
  %1290 = vmatprep.subr.bf16.mxu0 0
  %1291 = vmatpush1.bf16.msra.mxu0 0
  %1292 = vmatprep.subr.bf16.mxu0 %v491
  %1293 = vmatpush1.bf16.msra.mxu0 %v488
  %1294 = vmatprep.subr.bf16.mxu0 %v351
  %1295 = vmatpush1.bf16.msra.mxu0 %v350
  %1296 = vmatprep.subr.bf16.mxu0 %v335
  %1297 = vmatpush1.bf16.msra.mxu0 %v334
  %1298 = vmatprep.subr.bf16.mxu0 %v319
  %1299 = vmatpush1.bf16.msra.mxu0 %v318
  %1300 = vmatprep.subr.bf16.mxu0 0
  %1301 = vmatpush2.bf16.msra.mxu0 0
  %1302 = vmatprep.subr.bf16.mxu0 0
  %1303 = vmatpush2.bf16.msra.mxu0 0
  %1304 = vmatprep.subr.bf16.mxu0 0
  %1305 = vmatpush2.bf16.msra.mxu0 0
  %1306 = vmatprep.subr.bf16.mxu0 0
  %1307 = vmatpush2.bf16.msra.mxu0 0
  %1308 = vmatprep.subr.bf16.mxu0 0
  %1309 = vmatpush2.bf16.msra.mxu0 0
  %1310 = vmatprep.subr.bf16.mxu0 0
  %1311 = vmatpush2.bf16.msra.mxu0 0
  %1312 = vmatprep.subr.bf16.mxu0 0
  %1313 = vmatpush2.bf16.msra.mxu0 0
  %1314 = vmatprep.subr.bf16.mxu0 0
  %1315 = vmatpush2.bf16.msra.mxu0 0
  %1316 = vmatprep.mubr.bf16.mxu0 0
  %1317 = vmatmul.mubr.bf16.gmra.mxu0 %v418
  %v1318 = vpop.f32.mrf.mxu0
  %v1319 = vadd.f32 0.0, %v1318
  %v1320 = vpop.f32.mrf.mxu0
  %v1321 = vadd.f32 0.0, %v1320
  %v1322 = vpop.f32.mrf.mxu0
  %v1323 = vadd.f32 0.0, %v1322
  %v1324 = vpop.f32.mrf.mxu0
  %v1325 = vadd.f32 0.0, %v1324
  %1326 = vmatprep.mubr.bf16.mxu0 0
  %1327 = vmatmul.mubr.bf16.gmra.mxu0 %v421
  %v1328 = vpop.f32.mrf.mxu0
  %v1329 = vadd.f32 0.0, %v1328
  %v1330 = vpop.f32.mrf.mxu0
  %v1331 = vadd.f32 0.0, %v1330
  %v1332 = vpop.f32.mrf.mxu0
  %v1333 = vadd.f32 0.0, %v1332
  %v1334 = vpop.f32.mrf.mxu0
  %v1335 = vadd.f32 0.0, %v1334
  %1336 = vmatprep.mubr.bf16.mxu0 0
  %1337 = vmatmul.mubr.bf16.gmra.mxu0 %v424
  %v1338 = vpop.f32.mrf.mxu0
  %v1339 = vadd.f32 0.0, %v1338
  %v1340 = vpop.f32.mrf.mxu0
  %v1341 = vadd.f32 0.0, %v1340
  %v1342 = vpop.f32.mrf.mxu0
  %v1343 = vadd.f32 0.0, %v1342
  %v1344 = vpop.f32.mrf.mxu0
  %v1345 = vadd.f32 0.0, %v1344
  %1346 = vmatprep.mubr.bf16.mxu0 0
  %1347 = vmatmul.mubr.bf16.gmra.mxu0 %v427
  %v1348 = vpop.f32.mrf.mxu0
  %v1349 = vadd.f32 0.0, %v1348
  %v1350 = vpop.f32.mrf.mxu0
  %v1351 = vadd.f32 0.0, %v1350
  %v1352 = vpop.f32.mrf.mxu0
  %v1353 = vadd.f32 0.0, %v1352
  %v1354 = vpop.f32.mrf.mxu0
  %v1355 = vadd.f32 0.0, %v1354
  %1356 = vmatprep.mubr.bf16.mxu0 0
  %1357 = vmatmul.mubr.bf16.gmra.mxu0 %v430
  %v1358 = vpop.f32.mrf.mxu0
  %v1359 = vadd.f32 0.0, %v1358
  %v1360 = vpop.f32.mrf.mxu0
  %v1361 = vadd.f32 0.0, %v1360
  %v1362 = vpop.f32.mrf.mxu0
  %v1363 = vadd.f32 0.0, %v1362
  %v1364 = vpop.f32.mrf.mxu0
  %v1365 = vadd.f32 0.0, %v1364
  %1366 = vmatprep.mubr.bf16.mxu0 0
  %1367 = vmatmul.mubr.bf16.gmra.mxu0 %v433
  %v1368 = vpop.f32.mrf.mxu0
  %v1369 = vadd.f32 0.0, %v1368
  %v1370 = vpop.f32.mrf.mxu0
  %v1371 = vadd.f32 0.0, %v1370
  %v1372 = vpop.f32.mrf.mxu0
  %v1373 = vadd.f32 0.0, %v1372
  %v1374 = vpop.f32.mrf.mxu0
  %v1375 = vadd.f32 0.0, %v1374
  %1376 = vmatprep.mubr.bf16.mxu0 0
  %1377 = vmatmul.mubr.bf16.gmra.mxu0 %v436
  %v1378 = vpop.f32.mrf.mxu0
  %v1379 = vadd.f32 0.0, %v1378
  %v1380 = vpop.f32.mrf.mxu0
  %v1381 = vadd.f32 0.0, %v1380
  %v1382 = vpop.f32.mrf.mxu0
  %v1383 = vadd.f32 0.0, %v1382
  %v1384 = vpop.f32.mrf.mxu0
  %v1385 = vadd.f32 0.0, %v1384
  %1386 = vmatprep.mubr.bf16.mxu0 0
  %1387 = vmatmul.mubr.bf16.gmra.mxu0 %v439
  %v1388 = vpop.f32.mrf.mxu0
  %v1389 = vadd.f32 0.0, %v1388
  %v1390 = vpop.f32.mrf.mxu0
  %v1391 = vadd.f32 0.0, %v1390
  %v1392 = vpop.f32.mrf.mxu0
  %v1393 = vadd.f32 0.0, %v1392
  %v1394 = vpop.f32.mrf.mxu0
  %v1395 = vadd.f32 0.0, %v1394
  %1396 = vdwg.mxu0
  %v1397 = vmax.f32 %v528, 0.0
  %v1398 = vmax.f32 %v530, 0.0
  %v1399 = vmax.f32 %v641, 0.0
  %v1400 = vmax.f32 %v643, 0.0
  %v1401 = vmax.f32 %v754, 0.0
  %v1402 = vmax.f32 %v756, 0.0
  %v1403 = vmax.f32 %v867, 0.0
  %v1404 = vmax.f32 %v869, 0.0
  %v1405 = vmax.f32 %v980, 0.0
  %v1406 = vmax.f32 %v982, 0.0
  %v1407 = vmax.f32 %v1093, 0.0
  %v1408 = vmax.f32 %v1095, 0.0
  %v1409 = vmax.f32 %v1206, 0.0
  %v1410 = vmax.f32 %v1208, 0.0
  %v1411 = vmax.f32 %v1319, 0.0
  %v1412 = vmax.f32 %v1321, 0.0
  %v1413 = vmax.f32 %v532, 0.0
  %v1414 = vmax.f32 %v534, 0.0
  %v1415 = vmax.f32 %v645, 0.0
  %v1416 = vmax.f32 %v647, 0.0
  %v1417 = vmax.f32 %v758, 0.0
  %v1418 = vmax.f32 %v760, 0.0
  %v1419 = vmax.f32 %v871, 0.0
  %v1420 = vmax.f32 %v873, 0.0
  %v1421 = vmax.f32 %v984, 0.0
  %v1422 = vmax.f32 %v986, 0.0
  %v1423 = vmax.f32 %v1097, 0.0
  %v1424 = vmax.f32 %v1099, 0.0
  %v1425 = vmax.f32 %v1210, 0.0
  %v1426 = vmax.f32 %v1212, 0.0
  %v1427 = vmax.f32 %v1323, 0.0
  %v1428 = vmax.f32 %v1325, 0.0
  %v1429 = vmax.f32 %v538, 0.0
  %v1430 = vmax.f32 %v540, 0.0
  %v1431 = vmax.f32 %v651, 0.0
  %v1432 = vmax.f32 %v653, 0.0
  %v1433 = vmax.f32 %v764, 0.0
  %v1434 = vmax.f32 %v766, 0.0
  %v1435 = vmax.f32 %v877, 0.0
  %v1436 = vmax.f32 %v879, 0.0
  %v1437 = vmax.f32 %v990, 0.0
  %v1438 = vmax.f32 %v992, 0.0
  %v1439 = vmax.f32 %v1103, 0.0
  %v1440 = vmax.f32 %v1105, 0.0
  %v1441 = vmax.f32 %v1216, 0.0
  %v1442 = vmax.f32 %v1218, 0.0
  %v1443 = vmax.f32 %v1329, 0.0
  %v1444 = vmax.f32 %v1331, 0.0
  %v1445 = vmax.f32 %v542, 0.0
  %v1446 = vmax.f32 %v544, 0.0
  %v1447 = vmax.f32 %v655, 0.0
  %v1448 = vmax.f32 %v657, 0.0
  %v1449 = vmax.f32 %v768, 0.0
  %v1450 = vmax.f32 %v770, 0.0
  %v1451 = vmax.f32 %v881, 0.0
  %v1452 = vmax.f32 %v883, 0.0
  %v1453 = vmax.f32 %v994, 0.0
  %v1454 = vmax.f32 %v996, 0.0
  %v1455 = vmax.f32 %v1107, 0.0
  %v1456 = vmax.f32 %v1109, 0.0
  %v1457 = vmax.f32 %v1220, 0.0
  %v1458 = vmax.f32 %v1222, 0.0
  %v1459 = vmax.f32 %v1333, 0.0
  %v1460 = vmax.f32 %v1335, 0.0
  %v1461 = vmax.f32 %v548, 0.0
  %v1462 = vmax.f32 %v550, 0.0
  %v1463 = vmax.f32 %v661, 0.0
  %v1464 = vmax.f32 %v663, 0.0
  %v1465 = vmax.f32 %v774, 0.0
  %v1466 = vmax.f32 %v776, 0.0
  %v1467 = vmax.f32 %v887, 0.0
  %v1468 = vmax.f32 %v889, 0.0
  %v1469 = vmax.f32 %v1000, 0.0
  %v1470 = vmax.f32 %v1002, 0.0
  %v1471 = vmax.f32 %v1113, 0.0
  %v1472 = vmax.f32 %v1115, 0.0
  %v1473 = vmax.f32 %v1226, 0.0
  %v1474 = vmax.f32 %v1228, 0.0
  %v1475 = vmax.f32 %v1339, 0.0
  %v1476 = vmax.f32 %v1341, 0.0
  %v1477 = vmax.f32 %v552, 0.0
  %v1478 = vmax.f32 %v554, 0.0
  %v1479 = vmax.f32 %v665, 0.0
  %v1480 = vmax.f32 %v667, 0.0
  %v1481 = vmax.f32 %v778, 0.0
  %v1482 = vmax.f32 %v780, 0.0
  %v1483 = vmax.f32 %v891, 0.0
  %v1484 = vmax.f32 %v893, 0.0
  %v1485 = vmax.f32 %v1004, 0.0
  %v1486 = vmax.f32 %v1006, 0.0
  %v1487 = vmax.f32 %v1117, 0.0
  %v1488 = vmax.f32 %v1119, 0.0
  %v1489 = vmax.f32 %v1230, 0.0
  %v1490 = vmax.f32 %v1232, 0.0
  %v1491 = vmax.f32 %v1343, 0.0
  %v1492 = vmax.f32 %v1345, 0.0
  %v1493 = vmax.f32 %v558, 0.0
  %v1494 = vmax.f32 %v560, 0.0
  %v1495 = vmax.f32 %v671, 0.0
  %v1496 = vmax.f32 %v673, 0.0
  %v1497 = vmax.f32 %v784, 0.0
  %v1498 = vmax.f32 %v786, 0.0
  %v1499 = vmax.f32 %v897, 0.0
  %v1500 = vmax.f32 %v899, 0.0
  %v1501 = vmax.f32 %v1010, 0.0
  %v1502 = vmax.f32 %v1012, 0.0
  %v1503 = vmax.f32 %v1123, 0.0
  %v1504 = vmax.f32 %v1125, 0.0
  %v1505 = vmax.f32 %v1236, 0.0
  %v1506 = vmax.f32 %v1238, 0.0
  %v1507 = vmax.f32 %v1349, 0.0
  %v1508 = vmax.f32 %v1351, 0.0
  %v1509 = vmax.f32 %v562, 0.0
  %v1510 = vmax.f32 %v564, 0.0
  %v1511 = vmax.f32 %v675, 0.0
  %v1512 = vmax.f32 %v677, 0.0
  %v1513 = vmax.f32 %v788, 0.0
  %v1514 = vmax.f32 %v790, 0.0
  %v1515 = vmax.f32 %v901, 0.0
  %v1516 = vmax.f32 %v903, 0.0
  %v1517 = vmax.f32 %v1014, 0.0
  %v1518 = vmax.f32 %v1016, 0.0
  %v1519 = vmax.f32 %v1127, 0.0
  %v1520 = vmax.f32 %v1129, 0.0
  %v1521 = vmax.f32 %v1240, 0.0
  %v1522 = vmax.f32 %v1242, 0.0
  %v1523 = vmax.f32 %v1353, 0.0
  %v1524 = vmax.f32 %v1355, 0.0
  %v1525 = vmax.f32 %v568, 0.0
  %v1526 = vmax.f32 %v570, 0.0
  %v1527 = vmax.f32 %v681, 0.0
  %v1528 = vmax.f32 %v683, 0.0
  %v1529 = vmax.f32 %v794, 0.0
  %v1530 = vmax.f32 %v796, 0.0
  %v1531 = vmax.f32 %v907, 0.0
  %v1532 = vmax.f32 %v909, 0.0
  %v1533 = vmax.f32 %v1020, 0.0
  %v1534 = vmax.f32 %v1022, 0.0
  %v1535 = vmax.f32 %v1133, 0.0
  %v1536 = vmax.f32 %v1135, 0.0
  %v1537 = vmax.f32 %v1246, 0.0
  %v1538 = vmax.f32 %v1248, 0.0
  %v1539 = vmax.f32 %v1359, 0.0
  %v1540 = vmax.f32 %v1361, 0.0
  %v1541 = vmax.f32 %v572, 0.0
  %v1542 = vmax.f32 %v574, 0.0
  %v1543 = vmax.f32 %v685, 0.0
  %v1544 = vmax.f32 %v687, 0.0
  %v1545 = vmax.f32 %v798, 0.0
  %v1546 = vmax.f32 %v800, 0.0
  %v1547 = vmax.f32 %v911, 0.0
  %v1548 = vmax.f32 %v913, 0.0
  %v1549 = vmax.f32 %v1024, 0.0
  %v1550 = vmax.f32 %v1026, 0.0
  %v1551 = vmax.f32 %v1137, 0.0
  %v1552 = vmax.f32 %v1139, 0.0
  %v1553 = vmax.f32 %v1250, 0.0
  %v1554 = vmax.f32 %v1252, 0.0
  %v1555 = vmax.f32 %v1363, 0.0
  %v1556 = vmax.f32 %v1365, 0.0
  %v1557 = vmax.f32 %v578, 0.0
  %v1558 = vmax.f32 %v580, 0.0
  %v1559 = vmax.f32 %v691, 0.0
  %v1560 = vmax.f32 %v693, 0.0
  %v1561 = vmax.f32 %v804, 0.0
  %v1562 = vmax.f32 %v806, 0.0
  %v1563 = vmax.f32 %v917, 0.0
  %v1564 = vmax.f32 %v919, 0.0
  %v1565 = vmax.f32 %v1030, 0.0
  %v1566 = vmax.f32 %v1032, 0.0
  %v1567 = vmax.f32 %v1143, 0.0
  %v1568 = vmax.f32 %v1145, 0.0
  %v1569 = vmax.f32 %v1256, 0.0
  %v1570 = vmax.f32 %v1258, 0.0
  %v1571 = vmax.f32 %v1369, 0.0
  %v1572 = vmax.f32 %v1371, 0.0
  %v1573 = vmax.f32 %v582, 0.0
  %v1574 = vmax.f32 %v584, 0.0
  %v1575 = vmax.f32 %v695, 0.0
  %v1576 = vmax.f32 %v697, 0.0
  %v1577 = vmax.f32 %v808, 0.0
  %v1578 = vmax.f32 %v810, 0.0
  %v1579 = vmax.f32 %v921, 0.0
  %v1580 = vmax.f32 %v923, 0.0
  %v1581 = vmax.f32 %v1034, 0.0
  %v1582 = vmax.f32 %v1036, 0.0
  %v1583 = vmax.f32 %v1147, 0.0
  %v1584 = vmax.f32 %v1149, 0.0
  %v1585 = vmax.f32 %v1260, 0.0
  %v1586 = vmax.f32 %v1262, 0.0
  %v1587 = vmax.f32 %v1373, 0.0
  %v1588 = vmax.f32 %v1375, 0.0
  %v1589 = vmax.f32 %v588, 0.0
  %v1590 = vmax.f32 %v590, 0.0
  %v1591 = vmax.f32 %v701, 0.0
  %v1592 = vmax.f32 %v703, 0.0
  %v1593 = vmax.f32 %v814, 0.0
  %v1594 = vmax.f32 %v816, 0.0
  %v1595 = vmax.f32 %v927, 0.0
  %v1596 = vmax.f32 %v929, 0.0
  %v1597 = vmax.f32 %v1040, 0.0
  %v1598 = vmax.f32 %v1042, 0.0
  %v1599 = vmax.f32 %v1153, 0.0
  %v1600 = vmax.f32 %v1155, 0.0
  %v1601 = vmax.f32 %v1266, 0.0
  %v1602 = vmax.f32 %v1268, 0.0
  %v1603 = vmax.f32 %v1379, 0.0
  %v1604 = vmax.f32 %v1381, 0.0
  %v1605 = vmax.f32 %v592, 0.0
  %v1606 = vmax.f32 %v594, 0.0
  %v1607 = vmax.f32 %v705, 0.0
  %v1608 = vmax.f32 %v707, 0.0
  %v1609 = vmax.f32 %v818, 0.0
  %v1610 = vmax.f32 %v820, 0.0
  %v1611 = vmax.f32 %v931, 0.0
  %v1612 = vmax.f32 %v933, 0.0
  %v1613 = vmax.f32 %v1044, 0.0
  %v1614 = vmax.f32 %v1046, 0.0
  %v1615 = vmax.f32 %v1157, 0.0
  %v1616 = vmax.f32 %v1159, 0.0
  %v1617 = vmax.f32 %v1270, 0.0
  %v1618 = vmax.f32 %v1272, 0.0
  %v1619 = vmax.f32 %v1383, 0.0
  %v1620 = vmax.f32 %v1385, 0.0
  %v1621 = vmax.f32 %v598, 0.0
  %v1622 = vmax.f32 %v600, 0.0
  %v1623 = vmax.f32 %v711, 0.0
  %v1624 = vmax.f32 %v713, 0.0
  %v1625 = vmax.f32 %v824, 0.0
  %v1626 = vmax.f32 %v826, 0.0
  %v1627 = vmax.f32 %v937, 0.0
  %v1628 = vmax.f32 %v939, 0.0
  %v1629 = vmax.f32 %v1050, 0.0
  %v1630 = vmax.f32 %v1052, 0.0
  %v1631 = vmax.f32 %v1163, 0.0
  %v1632 = vmax.f32 %v1165, 0.0
  %v1633 = vmax.f32 %v1276, 0.0
  %v1634 = vmax.f32 %v1278, 0.0
  %v1635 = vmax.f32 %v1389, 0.0
  %v1636 = vmax.f32 %v1391, 0.0
  %v1637 = vmax.f32 %v602, 0.0
  %v1638 = vmax.f32 %v604, 0.0
  %v1639 = vmax.f32 %v715, 0.0
  %v1640 = vmax.f32 %v717, 0.0
  %v1641 = vmax.f32 %v828, 0.0
  %v1642 = vmax.f32 %v830, 0.0
  %v1643 = vmax.f32 %v941, 0.0
  %v1644 = vmax.f32 %v943, 0.0
  %v1645 = vmax.f32 %v1054, 0.0
  %v1646 = vmax.f32 %v1056, 0.0
  %v1647 = vmax.f32 %v1167, 0.0
  %v1648 = vmax.f32 %v1169, 0.0
  %v1649 = vmax.f32 %v1280, 0.0
  %v1650 = vmax.f32 %v1282, 0.0
  %v1651 = vmax.f32 %v1393, 0.0
  %v1652 = vmax.f32 %v1395, 0.0
  %v1653 = vpack.c.bf16 %v1413, %v1397
  %v1654 = vpack.c.bf16 %v1414, %v1398
  %v1655 = vpack.c.bf16 %v1415, %v1399
  %v1656 = vpack.c.bf16 %v1416, %v1400
  %v1657 = vpack.c.bf16 %v1417, %v1401
  %v1658 = vpack.c.bf16 %v1418, %v1402
  %v1659 = vpack.c.bf16 %v1419, %v1403
  %v1660 = vpack.c.bf16 %v1420, %v1404
  %v1661 = vpack.c.bf16 %v1421, %v1405
  %v1662 = vpack.c.bf16 %v1422, %v1406
  %v1663 = vpack.c.bf16 %v1423, %v1407
  %v1664 = vpack.c.bf16 %v1424, %v1408
  %v1665 = vpack.c.bf16 %v1425, %v1409
  %v1666 = vpack.c.bf16 %v1426, %v1410
  %v1667 = vpack.c.bf16 %v1427, %v1411
  %v1668 = vpack.c.bf16 %v1428, %v1412
  %v1669 = vpack.c.bf16 %v1445, %v1429
  %v1670 = vpack.c.bf16 %v1446, %v1430
  %v1671 = vpack.c.bf16 %v1447, %v1431
  %v1672 = vpack.c.bf16 %v1448, %v1432
  %v1673 = vpack.c.bf16 %v1449, %v1433
  %v1674 = vpack.c.bf16 %v1450, %v1434
  %v1675 = vpack.c.bf16 %v1451, %v1435
  %v1676 = vpack.c.bf16 %v1452, %v1436
  %v1677 = vpack.c.bf16 %v1453, %v1437
  %v1678 = vpack.c.bf16 %v1454, %v1438
  %v1679 = vpack.c.bf16 %v1455, %v1439
  %v1680 = vpack.c.bf16 %v1456, %v1440
  %v1681 = vpack.c.bf16 %v1457, %v1441
  %v1682 = vpack.c.bf16 %v1458, %v1442
  %v1683 = vpack.c.bf16 %v1459, %v1443
  %v1684 = vpack.c.bf16 %v1460, %v1444
  %v1685 = vpack.c.bf16 %v1477, %v1461
  %v1686 = vpack.c.bf16 %v1478, %v1462
  %v1687 = vpack.c.bf16 %v1479, %v1463
  %v1688 = vpack.c.bf16 %v1480, %v1464
  %v1689 = vpack.c.bf16 %v1481, %v1465
  %v1690 = vpack.c.bf16 %v1482, %v1466
  %v1691 = vpack.c.bf16 %v1483, %v1467
  %v1692 = vpack.c.bf16 %v1484, %v1468
  %v1693 = vpack.c.bf16 %v1485, %v1469
  %v1694 = vpack.c.bf16 %v1486, %v1470
  %v1695 = vpack.c.bf16 %v1487, %v1471
  %v1696 = vpack.c.bf16 %v1488, %v1472
  %v1697 = vpack.c.bf16 %v1489, %v1473
  %v1698 = vpack.c.bf16 %v1490, %v1474
  %v1699 = vpack.c.bf16 %v1491, %v1475
  %v1700 = vpack.c.bf16 %v1492, %v1476
  %v1701 = vpack.c.bf16 %v1509, %v1493
  %v1702 = vpack.c.bf16 %v1510, %v1494
  %v1703 = vpack.c.bf16 %v1511, %v1495
  %v1704 = vpack.c.bf16 %v1512, %v1496
  %v1705 = vpack.c.bf16 %v1513, %v1497
  %v1706 = vpack.c.bf16 %v1514, %v1498
  %v1707 = vpack.c.bf16 %v1515, %v1499
  %v1708 = vpack.c.bf16 %v1516, %v1500
  %v1709 = vpack.c.bf16 %v1517, %v1501
  %v1710 = vpack.c.bf16 %v1518, %v1502
  %v1711 = vpack.c.bf16 %v1519, %v1503
  %v1712 = vpack.c.bf16 %v1520, %v1504
  %v1713 = vpack.c.bf16 %v1521, %v1505
  %v1714 = vpack.c.bf16 %v1522, %v1506
  %v1715 = vpack.c.bf16 %v1523, %v1507
  %v1716 = vpack.c.bf16 %v1524, %v1508
  %v1717 = vpack.c.bf16 %v1541, %v1525
  %v1718 = vpack.c.bf16 %v1542, %v1526
  %v1719 = vpack.c.bf16 %v1543, %v1527
  %v1720 = vpack.c.bf16 %v1544, %v1528
  %v1721 = vpack.c.bf16 %v1545, %v1529
  %v1722 = vpack.c.bf16 %v1546, %v1530
  %v1723 = vpack.c.bf16 %v1547, %v1531
  %v1724 = vpack.c.bf16 %v1548, %v1532
  %v1725 = vpack.c.bf16 %v1549, %v1533
  %v1726 = vpack.c.bf16 %v1550, %v1534
  %v1727 = vpack.c.bf16 %v1551, %v1535
  %v1728 = vpack.c.bf16 %v1552, %v1536
  %v1729 = vpack.c.bf16 %v1553, %v1537
  %v1730 = vpack.c.bf16 %v1554, %v1538
  %v1731 = vpack.c.bf16 %v1555, %v1539
  %v1732 = vpack.c.bf16 %v1556, %v1540
  %v1733 = vpack.c.bf16 %v1573, %v1557
  %v1734 = vpack.c.bf16 %v1574, %v1558
  %v1735 = vpack.c.bf16 %v1575, %v1559
  %v1736 = vpack.c.bf16 %v1576, %v1560
  %v1737 = vpack.c.bf16 %v1577, %v1561
  %v1738 = vpack.c.bf16 %v1578, %v1562
  %v1739 = vpack.c.bf16 %v1579, %v1563
  %v1740 = vpack.c.bf16 %v1580, %v1564
  %v1741 = vpack.c.bf16 %v1581, %v1565
  %v1742 = vpack.c.bf16 %v1582, %v1566
  %v1743 = vpack.c.bf16 %v1583, %v1567
  %v1744 = vpack.c.bf16 %v1584, %v1568
  %v1745 = vpack.c.bf16 %v1585, %v1569
  %v1746 = vpack.c.bf16 %v1586, %v1570
  %v1747 = vpack.c.bf16 %v1587, %v1571
  %v1748 = vpack.c.bf16 %v1588, %v1572
  %v1749 = vpack.c.bf16 %v1605, %v1589
  %v1750 = vpack.c.bf16 %v1606, %v1590
  %v1751 = vpack.c.bf16 %v1607, %v1591
  %v1752 = vpack.c.bf16 %v1608, %v1592
  %v1753 = vpack.c.bf16 %v1609, %v1593
  %v1754 = vpack.c.bf16 %v1610, %v1594
  %v1755 = vpack.c.bf16 %v1611, %v1595
  %v1756 = vpack.c.bf16 %v1612, %v1596
  %v1757 = vpack.c.bf16 %v1613, %v1597
  %v1758 = vpack.c.bf16 %v1614, %v1598
  %v1759 = vpack.c.bf16 %v1615, %v1599
  %v1760 = vpack.c.bf16 %v1616, %v1600
  %v1761 = vpack.c.bf16 %v1617, %v1601
  %v1762 = vpack.c.bf16 %v1618, %v1602
  %v1763 = vpack.c.bf16 %v1619, %v1603
  %v1764 = vpack.c.bf16 %v1620, %v1604
  %v1765 = vpack.c.bf16 %v1637, %v1621
  %v1766 = vpack.c.bf16 %v1638, %v1622
  %v1767 = vpack.c.bf16 %v1639, %v1623
  %v1768 = vpack.c.bf16 %v1640, %v1624
  %v1769 = vpack.c.bf16 %v1641, %v1625
  %v1770 = vpack.c.bf16 %v1642, %v1626
  %v1771 = vpack.c.bf16 %v1643, %v1627
  %v1772 = vpack.c.bf16 %v1644, %v1628
  %v1773 = vpack.c.bf16 %v1645, %v1629
  %v1774 = vpack.c.bf16 %v1646, %v1630
  %v1775 = vpack.c.bf16 %v1647, %v1631
  %v1776 = vpack.c.bf16 %v1648, %v1632
  %v1777 = vpack.c.bf16 %v1649, %v1633
  %v1778 = vpack.c.bf16 %v1650, %v1634
  %v1779 = vpack.c.bf16 %v1651, %v1635
  %v1780 = vpack.c.bf16 %v1652, %v1636
  %v1781 = vmax.bf16 %v1653, %v1685
  %v1782 = vmax.bf16 %v1654, %v1686
  %v1783 = vmax.bf16 %v1655, %v1687
  %v1784 = vmax.bf16 %v1656, %v1688
  %v1785 = vmax.bf16 %v1657, %v1689
  %v1786 = vmax.bf16 %v1658, %v1690
  %v1787 = vmax.bf16 %v1659, %v1691
  %v1788 = vmax.bf16 %v1660, %v1692
  %v1789 = vmax.bf16 %v1661, %v1693
  %v1790 = vmax.bf16 %v1662, %v1694
  %v1791 = vmax.bf16 %v1663, %v1695
  %v1792 = vmax.bf16 %v1664, %v1696
  %v1793 = vmax.bf16 %v1665, %v1697
  %v1794 = vmax.bf16 %v1666, %v1698
  %v1795 = vmax.bf16 %v1667, %v1699
  %v1796 = vmax.bf16 %v1668, %v1700
  %v1797 = vmax.bf16 %v1669, %v1701
  %v1798 = vmax.bf16 %v1670, %v1702
  %v1799 = vmax.bf16 %v1671, %v1703
  %v1800 = vmax.bf16 %v1672, %v1704
  %v1801 = vmax.bf16 %v1673, %v1705
  %v1802 = vmax.bf16 %v1674, %v1706
  %v1803 = vmax.bf16 %v1675, %v1707
  %v1804 = vmax.bf16 %v1676, %v1708
  %v1805 = vmax.bf16 %v1677, %v1709
  %v1806 = vmax.bf16 %v1678, %v1710
  %v1807 = vmax.bf16 %v1679, %v1711
  %v1808 = vmax.bf16 %v1680, %v1712
  %v1809 = vmax.bf16 %v1681, %v1713
  %v1810 = vmax.bf16 %v1682, %v1714
  %v1811 = vmax.bf16 %v1683, %v1715
  %v1812 = vmax.bf16 %v1684, %v1716
  %v1813 = vmax.bf16 %v1685, %v1717
  %v1814 = vmax.bf16 %v1686, %v1718
  %v1815 = vmax.bf16 %v1687, %v1719
  %v1816 = vmax.bf16 %v1688, %v1720
  %v1817 = vmax.bf16 %v1689, %v1721
  %v1818 = vmax.bf16 %v1690, %v1722
  %v1819 = vmax.bf16 %v1691, %v1723
  %v1820 = vmax.bf16 %v1692, %v1724
  %v1821 = vmax.bf16 %v1693, %v1725
  %v1822 = vmax.bf16 %v1694, %v1726
  %v1823 = vmax.bf16 %v1695, %v1727
  %v1824 = vmax.bf16 %v1696, %v1728
  %v1825 = vmax.bf16 %v1697, %v1729
  %v1826 = vmax.bf16 %v1698, %v1730
  %v1827 = vmax.bf16 %v1699, %v1731
  %v1828 = vmax.bf16 %v1700, %v1732
  %v1829 = vmax.bf16 %v1701, %v1733
  %v1830 = vmax.bf16 %v1702, %v1734
  %v1831 = vmax.bf16 %v1703, %v1735
  %v1832 = vmax.bf16 %v1704, %v1736
  %v1833 = vmax.bf16 %v1705, %v1737
  %v1834 = vmax.bf16 %v1706, %v1738
  %v1835 = vmax.bf16 %v1707, %v1739
  %v1836 = vmax.bf16 %v1708, %v1740
  %v1837 = vmax.bf16 %v1709, %v1741
  %v1838 = vmax.bf16 %v1710, %v1742
  %v1839 = vmax.bf16 %v1711, %v1743
  %v1840 = vmax.bf16 %v1712, %v1744
  %v1841 = vmax.bf16 %v1713, %v1745
  %v1842 = vmax.bf16 %v1714, %v1746
  %v1843 = vmax.bf16 %v1715, %v1747
  %v1844 = vmax.bf16 %v1716, %v1748
  %v1845 = vmax.bf16 %v1717, %v1749
  %v1846 = vmax.bf16 %v1718, %v1750
  %v1847 = vmax.bf16 %v1719, %v1751
  %v1848 = vmax.bf16 %v1720, %v1752
  %v1849 = vmax.bf16 %v1721, %v1753
  %v1850 = vmax.bf16 %v1722, %v1754
  %v1851 = vmax.bf16 %v1723, %v1755
  %v1852 = vmax.bf16 %v1724, %v1756
  %v1853 = vmax.bf16 %v1725, %v1757
  %v1854 = vmax.bf16 %v1726, %v1758
  %v1855 = vmax.bf16 %v1727, %v1759
  %v1856 = vmax.bf16 %v1728, %v1760
  %v1857 = vmax.bf16 %v1729, %v1761
  %v1858 = vmax.bf16 %v1730, %v1762
  %v1859 = vmax.bf16 %v1731, %v1763
  %v1860 = vmax.bf16 %v1732, %v1764
  %v1861 = vmax.bf16 %v1733, %v1765
  %v1862 = vmax.bf16 %v1734, %v1766
  %v1863 = vmax.bf16 %v1735, %v1767
  %v1864 = vmax.bf16 %v1736, %v1768
  %v1865 = vmax.bf16 %v1737, %v1769
  %v1866 = vmax.bf16 %v1738, %v1770
  %v1867 = vmax.bf16 %v1739, %v1771
  %v1868 = vmax.bf16 %v1740, %v1772
  %v1869 = vmax.bf16 %v1741, %v1773
  %v1870 = vmax.bf16 %v1742, %v1774
  %v1871 = vmax.bf16 %v1743, %v1775
  %v1872 = vmax.bf16 %v1744, %v1776
  %v1873 = vmax.bf16 %v1745, %v1777
  %v1874 = vmax.bf16 %v1746, %v1778
  %v1875 = vmax.bf16 %v1747, %v1779
  %v1876 = vmax.bf16 %v1748, %v1780
  %1973 = vrot.lane.b32.xlu0 %v1781, 127
  %v1974 = vpop.permute.xlu0 %1973
  %1975 = vrot.lane.b32.xlu0 %v1782, 127
  %v1976 = vpop.permute.xlu0 %1975
  %1977 = vrot.lane.b32.xlu0 %v1783, 127
  %v1978 = vpop.permute.xlu0 %1977
  %1979 = vrot.lane.b32.xlu0 %v1784, 127
  %v1980 = vpop.permute.xlu0 %1979
  %1981 = vrot.lane.b32.xlu0 %v1785, 127
  %v1982 = vpop.permute.xlu0 %1981
  %1983 = vrot.lane.b32.xlu0 %v1786, 127
  %v1984 = vpop.permute.xlu0 %1983
  %1985 = vrot.lane.b32.xlu0 %v1787, 127
  %v1986 = vpop.permute.xlu0 %1985
  %1987 = vrot.lane.b32.xlu0 %v1788, 127
  %v1988 = vpop.permute.xlu0 %1987
  %1989 = vrot.lane.b32.xlu0 %v1789, 127
  %v1990 = vpop.permute.xlu0 %1989
  %1991 = vrot.lane.b32.xlu0 %v1790, 127
  %v1992 = vpop.permute.xlu0 %1991
  %1993 = vrot.lane.b32.xlu0 %v1791, 127
  %v1994 = vpop.permute.xlu0 %1993
  %1995 = vrot.lane.b32.xlu0 %v1792, 127
  %v1996 = vpop.permute.xlu0 %1995
  %1997 = vrot.lane.b32.xlu0 %v1793, 127
  %v1998 = vpop.permute.xlu0 %1997
  %1999 = vrot.lane.b32.xlu0 %v1794, 127
  %v2000 = vpop.permute.xlu0 %1999
  %2001 = vrot.lane.b32.xlu0 %v1795, 127
  %v2002 = vpop.permute.xlu0 %2001
  %2003 = vrot.lane.b32.xlu0 %v1796, 127
  %v2004 = vpop.permute.xlu0 %2003
  %2005 = vrot.lane.b32.xlu0 %v1797, 127
  %v2006 = vpop.permute.xlu0 %2005
  %2007 = vrot.lane.b32.xlu0 %v1798, 127
  %v2008 = vpop.permute.xlu0 %2007
  %2009 = vrot.lane.b32.xlu0 %v1799, 127
  %v2010 = vpop.permute.xlu0 %2009
  %2011 = vrot.lane.b32.xlu0 %v1800, 127
  %v2012 = vpop.permute.xlu0 %2011
  %2013 = vrot.lane.b32.xlu0 %v1801, 127
  %v2014 = vpop.permute.xlu0 %2013
  %2015 = vrot.lane.b32.xlu0 %v1802, 127
  %v2016 = vpop.permute.xlu0 %2015
  %2017 = vrot.lane.b32.xlu0 %v1803, 127
  %v2018 = vpop.permute.xlu0 %2017
  %2019 = vrot.lane.b32.xlu0 %v1804, 127
  %v2020 = vpop.permute.xlu0 %2019
  %2021 = vrot.lane.b32.xlu0 %v1805, 127
  %v2022 = vpop.permute.xlu0 %2021
  %2023 = vrot.lane.b32.xlu0 %v1806, 127
  %v2024 = vpop.permute.xlu0 %2023
  %2025 = vrot.lane.b32.xlu0 %v1807, 127
  %v2026 = vpop.permute.xlu0 %2025
  %2027 = vrot.lane.b32.xlu0 %v1808, 127
  %v2028 = vpop.permute.xlu0 %2027
  %2029 = vrot.lane.b32.xlu0 %v1809, 127
  %v2030 = vpop.permute.xlu0 %2029
  %2031 = vrot.lane.b32.xlu0 %v1810, 127
  %v2032 = vpop.permute.xlu0 %2031
  %2033 = vrot.lane.b32.xlu0 %v1811, 127
  %v2034 = vpop.permute.xlu0 %2033
  %2035 = vrot.lane.b32.xlu0 %v1812, 127
  %v2036 = vpop.permute.xlu0 %2035
  %2037 = vrot.lane.b32.xlu0 %v1813, 127
  %v2038 = vpop.permute.xlu0 %2037
  %2039 = vrot.lane.b32.xlu0 %v1814, 127
  %v2040 = vpop.permute.xlu0 %2039
  %2041 = vrot.lane.b32.xlu0 %v1815, 127
  %v2042 = vpop.permute.xlu0 %2041
  %2043 = vrot.lane.b32.xlu0 %v1816, 127
  %v2044 = vpop.permute.xlu0 %2043
  %2045 = vrot.lane.b32.xlu0 %v1817, 127
  %v2046 = vpop.permute.xlu0 %2045
  %2047 = vrot.lane.b32.xlu0 %v1818, 127
  %v2048 = vpop.permute.xlu0 %2047
  %2049 = vrot.lane.b32.xlu0 %v1819, 127
  %v2050 = vpop.permute.xlu0 %2049
  %2051 = vrot.lane.b32.xlu0 %v1820, 127
  %v2052 = vpop.permute.xlu0 %2051
  %2053 = vrot.lane.b32.xlu0 %v1821, 127
  %v2054 = vpop.permute.xlu0 %2053
  %2055 = vrot.lane.b32.xlu0 %v1822, 127
  %v2056 = vpop.permute.xlu0 %2055
  %2057 = vrot.lane.b32.xlu0 %v1823, 127
  %v2058 = vpop.permute.xlu0 %2057
  %2059 = vrot.lane.b32.xlu0 %v1824, 127
  %v2060 = vpop.permute.xlu0 %2059
  %2061 = vrot.lane.b32.xlu0 %v1825, 127
  %v2062 = vpop.permute.xlu0 %2061
  %2063 = vrot.lane.b32.xlu0 %v1826, 127
  %v2064 = vpop.permute.xlu0 %2063
  %2065 = vrot.lane.b32.xlu0 %v1827, 127
  %v2066 = vpop.permute.xlu0 %2065
  %2067 = vrot.lane.b32.xlu0 %v1828, 127
  %v2068 = vpop.permute.xlu0 %2067
  %2069 = vrot.lane.b32.xlu0 %v1829, 127
  %v2070 = vpop.permute.xlu0 %2069
  %2071 = vrot.lane.b32.xlu0 %v1830, 127
  %v2072 = vpop.permute.xlu0 %2071
  %2073 = vrot.lane.b32.xlu0 %v1831, 127
  %v2074 = vpop.permute.xlu0 %2073
  %2075 = vrot.lane.b32.xlu0 %v1832, 127
  %v2076 = vpop.permute.xlu0 %2075
  %2077 = vrot.lane.b32.xlu0 %v1833, 127
  %v2078 = vpop.permute.xlu0 %2077
  %2079 = vrot.lane.b32.xlu0 %v1834, 127
  %v2080 = vpop.permute.xlu0 %2079
  %2081 = vrot.lane.b32.xlu0 %v1835, 127
  %v2082 = vpop.permute.xlu0 %2081
  %2083 = vrot.lane.b32.xlu0 %v1836, 127
  %v2084 = vpop.permute.xlu0 %2083
  %2085 = vrot.lane.b32.xlu0 %v1837, 127
  %v2086 = vpop.permute.xlu0 %2085
  %2087 = vrot.lane.b32.xlu0 %v1838, 127
  %v2088 = vpop.permute.xlu0 %2087
  %2089 = vrot.lane.b32.xlu0 %v1839, 127
  %v2090 = vpop.permute.xlu0 %2089
  %2091 = vrot.lane.b32.xlu0 %v1840, 127
  %v2092 = vpop.permute.xlu0 %2091
  %2093 = vrot.lane.b32.xlu0 %v1841, 127
  %v2094 = vpop.permute.xlu0 %2093
  %2095 = vrot.lane.b32.xlu0 %v1842, 127
  %v2096 = vpop.permute.xlu0 %2095
  %2097 = vrot.lane.b32.xlu0 %v1843, 127
  %v2098 = vpop.permute.xlu0 %2097
  %2099 = vrot.lane.b32.xlu0 %v1844, 127
  %v2100 = vpop.permute.xlu0 %2099
  %2101 = vrot.lane.b32.xlu0 %v1845, 127
  %v2102 = vpop.permute.xlu0 %2101
  %2103 = vrot.lane.b32.xlu0 %v1846, 127
  %v2104 = vpop.permute.xlu0 %2103
  %2105 = vrot.lane.b32.xlu0 %v1847, 127
  %v2106 = vpop.permute.xlu0 %2105
  %2107 = vrot.lane.b32.xlu0 %v1848, 127
  %v2108 = vpop.permute.xlu0 %2107
  %2109 = vrot.lane.b32.xlu0 %v1849, 127
  %v2110 = vpop.permute.xlu0 %2109
  %2111 = vrot.lane.b32.xlu0 %v1850, 127
  %v2112 = vpop.permute.xlu0 %2111
  %2113 = vrot.lane.b32.xlu0 %v1851, 127
  %v2114 = vpop.permute.xlu0 %2113
  %2115 = vrot.lane.b32.xlu0 %v1852, 127
  %v2116 = vpop.permute.xlu0 %2115
  %2117 = vrot.lane.b32.xlu0 %v1853, 127
  %v2118 = vpop.permute.xlu0 %2117
  %2119 = vrot.lane.b32.xlu0 %v1854, 127
  %v2120 = vpop.permute.xlu0 %2119
  %2121 = vrot.lane.b32.xlu0 %v1855, 127
  %v2122 = vpop.permute.xlu0 %2121
  %2123 = vrot.lane.b32.xlu0 %v1856, 127
  %v2124 = vpop.permute.xlu0 %2123
  %2125 = vrot.lane.b32.xlu0 %v1857, 127
  %v2126 = vpop.permute.xlu0 %2125
  %2127 = vrot.lane.b32.xlu0 %v1858, 127
  %v2128 = vpop.permute.xlu0 %2127
  %2129 = vrot.lane.b32.xlu0 %v1859, 127
  %v2130 = vpop.permute.xlu0 %2129
  %2131 = vrot.lane.b32.xlu0 %v1860, 127
  %v2132 = vpop.permute.xlu0 %2131
  %2133 = vrot.lane.b32.xlu0 %v1861, 127
  %v2134 = vpop.permute.xlu0 %2133
  %2135 = vrot.lane.b32.xlu0 %v1862, 127
  %v2136 = vpop.permute.xlu0 %2135
  %2137 = vrot.lane.b32.xlu0 %v1863, 127
  %v2138 = vpop.permute.xlu0 %2137
  %2139 = vrot.lane.b32.xlu0 %v1864, 127
  %v2140 = vpop.permute.xlu0 %2139
  %2141 = vrot.lane.b32.xlu0 %v1865, 127
  %v2142 = vpop.permute.xlu0 %2141
  %2143 = vrot.lane.b32.xlu0 %v1866, 127
  %v2144 = vpop.permute.xlu0 %2143
  %2145 = vrot.lane.b32.xlu0 %v1867, 127
  %v2146 = vpop.permute.xlu0 %2145
  %2147 = vrot.lane.b32.xlu0 %v1868, 127
  %v2148 = vpop.permute.xlu0 %2147
  %2149 = vrot.lane.b32.xlu0 %v1869, 127
  %v2150 = vpop.permute.xlu0 %2149
  %2151 = vrot.lane.b32.xlu0 %v1870, 127
  %v2152 = vpop.permute.xlu0 %2151
  %2153 = vrot.lane.b32.xlu0 %v1871, 127
  %v2154 = vpop.permute.xlu0 %2153
  %2155 = vrot.lane.b32.xlu0 %v1872, 127
  %v2156 = vpop.permute.xlu0 %2155
  %2157 = vrot.lane.b32.xlu0 %v1873, 127
  %v2158 = vpop.permute.xlu0 %2157
  %2159 = vrot.lane.b32.xlu0 %v1874, 127
  %v2160 = vpop.permute.xlu0 %2159
  %2161 = vrot.lane.b32.xlu0 %v1875, 127
  %v2162 = vpop.permute.xlu0 %2161
  %2163 = vrot.lane.b32.xlu0 %v1876, 127
  %v2164 = vpop.permute.xlu0 %2163
  %vm2165 = vcmask 1039360
  %v2166 = vsel %vm2165, %v1974, %v1976
  %v2167 = vsel %vm2165, %v1976, %v1978
  %v2168 = vsel %vm2165, %v1978, %v1980
  %v2169 = vsel %vm2165, %v1980, %v1982
  %v2170 = vsel %vm2165, %v1982, %v1984
  %v2171 = vsel %vm2165, %v1984, %v1986
  %v2172 = vsel %vm2165, %v1986, %v1988
  %v2173 = vsel %vm2165, %v1988, %v1990
  %v2174 = vsel %vm2165, %v1990, %v1992
  %v2175 = vsel %vm2165, %v1992, %v1994
  %v2176 = vsel %vm2165, %v1994, %v1996
  %v2177 = vsel %vm2165, %v1996, %v1998
  %v2178 = vsel %vm2165, %v1998, %v2000
  %v2179 = vsel %vm2165, %v2000, %v2002
  %v2180 = vsel %vm2165, %v2002, %v2004
  %v2181 = vsel %vm2165, %v2006, %v2008
  %v2182 = vsel %vm2165, %v2008, %v2010
  %v2183 = vsel %vm2165, %v2010, %v2012
  %v2184 = vsel %vm2165, %v2012, %v2014
  %v2185 = vsel %vm2165, %v2014, %v2016
  %v2186 = vsel %vm2165, %v2016, %v2018
  %v2187 = vsel %vm2165, %v2018, %v2020
  %v2188 = vsel %vm2165, %v2020, %v2022
  %v2189 = vsel %vm2165, %v2022, %v2024
  %v2190 = vsel %vm2165, %v2024, %v2026
  %v2191 = vsel %vm2165, %v2026, %v2028
  %v2192 = vsel %vm2165, %v2028, %v2030
  %v2193 = vsel %vm2165, %v2030, %v2032
  %v2194 = vsel %vm2165, %v2032, %v2034
  %v2195 = vsel %vm2165, %v2034, %v2036
  %v2196 = vsel %vm2165, %v2038, %v2040
  %v2197 = vsel %vm2165, %v2040, %v2042
  %v2198 = vsel %vm2165, %v2042, %v2044
  %v2199 = vsel %vm2165, %v2044, %v2046
  %v2200 = vsel %vm2165, %v2046, %v2048
  %v2201 = vsel %vm2165, %v2048, %v2050
  %v2202 = vsel %vm2165, %v2050, %v2052
  %v2203 = vsel %vm2165, %v2052, %v2054
  %v2204 = vsel %vm2165, %v2054, %v2056
  %v2205 = vsel %vm2165, %v2056, %v2058
  %v2206 = vsel %vm2165, %v2058, %v2060
  %v2207 = vsel %vm2165, %v2060, %v2062
  %v2208 = vsel %vm2165, %v2062, %v2064
  %v2209 = vsel %vm2165, %v2064, %v2066
  %v2210 = vsel %vm2165, %v2066, %v2068
  %v2211 = vsel %vm2165, %v2070, %v2072
  %v2212 = vsel %vm2165, %v2072, %v2074
  %v2213 = vsel %vm2165, %v2074, %v2076
  %v2214 = vsel %vm2165, %v2076, %v2078
  %v2215 = vsel %vm2165, %v2078, %v2080
  %v2216 = vsel %vm2165, %v2080, %v2082
  %v2217 = vsel %vm2165, %v2082, %v2084
  %v2218 = vsel %vm2165, %v2084, %v2086
  %v2219 = vsel %vm2165, %v2086, %v2088
  %v2220 = vsel %vm2165, %v2088, %v2090
  %v2221 = vsel %vm2165, %v2090, %v2092
  %v2222 = vsel %vm2165, %v2092, %v2094
  %v2223 = vsel %vm2165, %v2094, %v2096
  %v2224 = vsel %vm2165, %v2096, %v2098
  %v2225 = vsel %vm2165, %v2098, %v2100
  %v2226 = vsel %vm2165, %v2102, %v2104
  %v2227 = vsel %vm2165, %v2104, %v2106
  %v2228 = vsel %vm2165, %v2106, %v2108
  %v2229 = vsel %vm2165, %v2108, %v2110
  %v2230 = vsel %vm2165, %v2110, %v2112
  %v2231 = vsel %vm2165, %v2112, %v2114
  %v2232 = vsel %vm2165, %v2114, %v2116
  %v2233 = vsel %vm2165, %v2116, %v2118
  %v2234 = vsel %vm2165, %v2118, %v2120
  %v2235 = vsel %vm2165, %v2120, %v2122
  %v2236 = vsel %vm2165, %v2122, %v2124
  %v2237 = vsel %vm2165, %v2124, %v2126
  %v2238 = vsel %vm2165, %v2126, %v2128
  %v2239 = vsel %vm2165, %v2128, %v2130
  %v2240 = vsel %vm2165, %v2130, %v2132
  %v2241 = vsel %vm2165, %v2134, %v2136
  %v2242 = vsel %vm2165, %v2136, %v2138
  %v2243 = vsel %vm2165, %v2138, %v2140
  %v2244 = vsel %vm2165, %v2140, %v2142
  %v2245 = vsel %vm2165, %v2142, %v2144
  %v2246 = vsel %vm2165, %v2144, %v2146
  %v2247 = vsel %vm2165, %v2146, %v2148
  %v2248 = vsel %vm2165, %v2148, %v2150
  %v2249 = vsel %vm2165, %v2150, %v2152
  %v2250 = vsel %vm2165, %v2152, %v2154
  %v2251 = vsel %vm2165, %v2154, %v2156
  %v2252 = vsel %vm2165, %v2156, %v2158
  %v2253 = vsel %vm2165, %v2158, %v2160
  %v2254 = vsel %vm2165, %v2160, %v2162
  %v2255 = vsel %vm2165, %v2162, %v2164
  %v2352 = vmax.bf16 %v1781, %v2166
  %v2353 = vmax.bf16 %v1782, %v2167
  %v2354 = vmax.bf16 %v1783, %v2168
  %v2355 = vmax.bf16 %v1784, %v2169
  %v2356 = vmax.bf16 %v1785, %v2170
  %v2357 = vmax.bf16 %v1786, %v2171
  %v2358 = vmax.bf16 %v1787, %v2172
  %v2359 = vmax.bf16 %v1788, %v2173
  %v2360 = vmax.bf16 %v1789, %v2174
  %v2361 = vmax.bf16 %v1790, %v2175
  %v2362 = vmax.bf16 %v1791, %v2176
  %v2363 = vmax.bf16 %v1792, %v2177
  %v2364 = vmax.bf16 %v1793, %v2178
  %v2365 = vmax.bf16 %v1794, %v2179
  %v2366 = vmax.bf16 %v1795, %v2180
  %v2367 = vmax.bf16 %v1796, %v2004
  %v2368 = vmax.bf16 %v1797, %v2181
  %v2369 = vmax.bf16 %v1798, %v2182
  %v2370 = vmax.bf16 %v1799, %v2183
  %v2371 = vmax.bf16 %v1800, %v2184
  %v2372 = vmax.bf16 %v1801, %v2185
  %v2373 = vmax.bf16 %v1802, %v2186
  %v2374 = vmax.bf16 %v1803, %v2187
  %v2375 = vmax.bf16 %v1804, %v2188
  %v2376 = vmax.bf16 %v1805, %v2189
  %v2377 = vmax.bf16 %v1806, %v2190
  %v2378 = vmax.bf16 %v1807, %v2191
  %v2379 = vmax.bf16 %v1808, %v2192
  %v2380 = vmax.bf16 %v1809, %v2193
  %v2381 = vmax.bf16 %v1810, %v2194
  %v2382 = vmax.bf16 %v1811, %v2195
  %v2383 = vmax.bf16 %v1812, %v2036
  %v2384 = vmax.bf16 %v1813, %v2196
  %v2385 = vmax.bf16 %v1814, %v2197
  %v2386 = vmax.bf16 %v1815, %v2198
  %v2387 = vmax.bf16 %v1816, %v2199
  %v2388 = vmax.bf16 %v1817, %v2200
  %v2389 = vmax.bf16 %v1818, %v2201
  %v2390 = vmax.bf16 %v1819, %v2202
  %v2391 = vmax.bf16 %v1820, %v2203
  %v2392 = vmax.bf16 %v1821, %v2204
  %v2393 = vmax.bf16 %v1822, %v2205
  %v2394 = vmax.bf16 %v1823, %v2206
  %v2395 = vmax.bf16 %v1824, %v2207
  %v2396 = vmax.bf16 %v1825, %v2208
  %v2397 = vmax.bf16 %v1826, %v2209
  %v2398 = vmax.bf16 %v1827, %v2210
  %v2399 = vmax.bf16 %v1828, %v2068
  %v2400 = vmax.bf16 %v1829, %v2211
  %v2401 = vmax.bf16 %v1830, %v2212
  %v2402 = vmax.bf16 %v1831, %v2213
  %v2403 = vmax.bf16 %v1832, %v2214
  %v2404 = vmax.bf16 %v1833, %v2215
  %v2405 = vmax.bf16 %v1834, %v2216
  %v2406 = vmax.bf16 %v1835, %v2217
  %v2407 = vmax.bf16 %v1836, %v2218
  %v2408 = vmax.bf16 %v1837, %v2219
  %v2409 = vmax.bf16 %v1838, %v2220
  %v2410 = vmax.bf16 %v1839, %v2221
  %v2411 = vmax.bf16 %v1840, %v2222
  %v2412 = vmax.bf16 %v1841, %v2223
  %v2413 = vmax.bf16 %v1842, %v2224
  %v2414 = vmax.bf16 %v1843, %v2225
  %v2415 = vmax.bf16 %v1844, %v2100
  %v2416 = vmax.bf16 %v1845, %v2226
  %v2417 = vmax.bf16 %v1846, %v2227
  %v2418 = vmax.bf16 %v1847, %v2228
  %v2419 = vmax.bf16 %v1848, %v2229
  %v2420 = vmax.bf16 %v1849, %v2230
  %v2421 = vmax.bf16 %v1850, %v2231
  %v2422 = vmax.bf16 %v1851, %v2232
  %v2423 = vmax.bf16 %v1852, %v2233
  %v2424 = vmax.bf16 %v1853, %v2234
  %v2425 = vmax.bf16 %v1854, %v2235
  %v2426 = vmax.bf16 %v1855, %v2236
  %v2427 = vmax.bf16 %v1856, %v2237
  %v2428 = vmax.bf16 %v1857, %v2238
  %v2429 = vmax.bf16 %v1858, %v2239
  %v2430 = vmax.bf16 %v1859, %v2240
  %v2431 = vmax.bf16 %v1860, %v2132
  %v2432 = vmax.bf16 %v1861, %v2241
  %v2433 = vmax.bf16 %v1862, %v2242
  %v2434 = vmax.bf16 %v1863, %v2243
  %v2435 = vmax.bf16 %v1864, %v2244
  %v2436 = vmax.bf16 %v1865, %v2245
  %v2437 = vmax.bf16 %v1866, %v2246
  %v2438 = vmax.bf16 %v1867, %v2247
  %v2439 = vmax.bf16 %v1868, %v2248
  %v2440 = vmax.bf16 %v1869, %v2249
  %v2441 = vmax.bf16 %v1870, %v2250
  %v2442 = vmax.bf16 %v1871, %v2251
  %v2443 = vmax.bf16 %v1872, %v2252
  %v2444 = vmax.bf16 %v1873, %v2253
  %v2445 = vmax.bf16 %v1874, %v2254
  %v2446 = vmax.bf16 %v1875, %v2255
  %v2447 = vmax.bf16 %v1876, %v2164
  %s2448 = scalar_lea.vmem %s0, 448
  %v2449 = vld [vmem:[%s2448] sm:$0xff]
  %v2450 = vld [vmem:[%s2448 + $0x8] sm:$0xff]
  %v2451 = vld [vmem:[%s2448 + $0x10] sm:$0xff]
  %v2452 = vld [vmem:[%s2448 + $0x18] sm:$0xff]
  %v2453 = vld [vmem:[%s2448 + $0x20] sm:$0xff]
  %v2454 = vld [vmem:[%s2448 + $0x28] sm:$0xff]
  %v2455 = vld [vmem:[%s2448 + $0x30] sm:$0xff]
  %v2456 = vld [vmem:[%s2448 + $0x38] sm:$0xff]
  %v2457 = vld [vmem:[%s2448 + $0x40] sm:$0xff]
  %v2458 = vld [vmem:[%s2448 + $0x48] sm:$0xff]
  %v2459 = vld [vmem:[%s2448 + $0x50] sm:$0xff]
  %v2460 = vld [vmem:[%s2448 + $0x58] sm:$0xff]
  %v2461 = vld [vmem:[%s2448 + $0x60] sm:$0xff]
  %v2462 = vld [vmem:[%s2448 + $0x68] sm:$0xff]
  %v2463 = vld [vmem:[%s2448 + $0x70] sm:$0xff]
  %v2464 = vld [vmem:[%s2448 + $0x78] sm:$0xff]
  %v2465 = vld [vmem:[%s2448 + $0x80] sm:$0xff]
  %v2466 = vld [vmem:[%s2448 + $0x88] sm:$0xff]
  %v2467 = vld [vmem:[%s2448 + $0x90] sm:$0xff]
  %v2468 = vld [vmem:[%s2448 + $0x98] sm:$0xff]
  %v2469 = vld [vmem:[%s2448 + $0xa0] sm:$0xff]
  %v2470 = vld [vmem:[%s2448 + $0xa8] sm:$0xff]
  %v2471 = vld [vmem:[%s2448 + $0xb0] sm:$0xff]
  %v2472 = vld [vmem:[%s2448 + $0xb8] sm:$0xff]
  %v2473 = vld [vmem:[%s2448 + $0xc0] sm:$0xff]
  %v2474 = vld [vmem:[%s2448 + $0xc8] sm:$0xff]
  %v2475 = vld [vmem:[%s2448 + $0xd0] sm:$0xff]
  %v2476 = vld [vmem:[%s2448 + $0xd8] sm:$0xff]
  %v2477 = vld [vmem:[%s2448 + $0xe0] sm:$0xff]
  %v2478 = vld [vmem:[%s2448 + $0xe8] sm:$0xff]
  %v2479 = vld [vmem:[%s2448 + $0xf0] sm:$0xff]
  %v2480 = vld [vmem:[%s2448 + $0xf8] sm:$0xff]
  %v2481 = vld [vmem:[%s2448 + $0x100] sm:$0xff]
  %v2482 = vld [vmem:[%s2448 + $0x108] sm:$0xff]
  %v2483 = vld [vmem:[%s2448 + $0x110] sm:$0xff]
  %v2484 = vld [vmem:[%s2448 + $0x118] sm:$0xff]
  %v2485 = vld [vmem:[%s2448 + $0x120] sm:$0xff]
  %v2486 = vld [vmem:[%s2448 + $0x128] sm:$0xff]
  %v2487 = vld [vmem:[%s2448 + $0x130] sm:$0xff]
  %v2488 = vld [vmem:[%s2448 + $0x138] sm:$0xff]
  %v2489 = vld [vmem:[%s2448 + $0x140] sm:$0xff]
  %v2490 = vld [vmem:[%s2448 + $0x148] sm:$0xff]
  %v2491 = vld [vmem:[%s2448 + $0x150] sm:$0xff]
  %v2492 = vld [vmem:[%s2448 + $0x158] sm:$0xff]
  %v2493 = vld [vmem:[%s2448 + $0x160] sm:$0xff]
  %v2494 = vld [vmem:[%s2448 + $0x168] sm:$0xff]
  %v2495 = vld [vmem:[%s2448 + $0x170] sm:$0xff]
  %v2496 = vld [vmem:[%s2448 + $0x178] sm:$0xff]
  %v2497 = vld [vmem:[%s2448 + $0x180] sm:$0xff]
  %v2498 = vld [vmem:[%s2448 + $0x188] sm:$0xff]
  %v2499 = vld [vmem:[%s2448 + $0x190] sm:$0xff]
  %v2500 = vld [vmem:[%s2448 + $0x198] sm:$0xff]
  %v2501 = vld [vmem:[%s2448 + $0x1a0] sm:$0xff]
  %v2502 = vld [vmem:[%s2448 + $0x1a8] sm:$0xff]
  %v2503 = vld [vmem:[%s2448 + $0x1b0] sm:$0xff]
  %v2504 = vld [vmem:[%s2448 + $0x1b8] sm:$0xff]
  %v2561 = vunpack.c.l.b16 %v2449
  %v2562 = vunpack.c.h.b16 %v2449
  %v2563 = vunpack.c.l.b16 %v2450
  %v2564 = vunpack.c.h.b16 %v2450
  %v2565 = vunpack.c.l.b16 %v2451
  %v2566 = vunpack.c.h.b16 %v2451
  %v2567 = vunpack.c.l.b16 %v2452
  %v2568 = vunpack.c.h.b16 %v2452
  %v2569 = vunpack.c.l.b16 %v2453
  %v2570 = vunpack.c.h.b16 %v2453
  %v2571 = vunpack.c.l.b16 %v2454
  %v2572 = vunpack.c.h.b16 %v2454
  %v2573 = vunpack.c.l.b16 %v2455
  %v2574 = vunpack.c.h.b16 %v2455
  %v2575 = vunpack.c.l.b16 %v2456
  %v2576 = vunpack.c.h.b16 %v2456
  %v2577 = vunpack.c.l.b16 %v2457
  %v2578 = vunpack.c.h.b16 %v2457
  %v2579 = vunpack.c.l.b16 %v2458
  %v2580 = vunpack.c.h.b16 %v2458
  %v2581 = vunpack.c.l.b16 %v2459
  %v2582 = vunpack.c.h.b16 %v2459
  %v2583 = vunpack.c.l.b16 %v2460
  %v2584 = vunpack.c.h.b16 %v2460
  %v2585 = vunpack.c.l.b16 %v2461
  %v2586 = vunpack.c.h.b16 %v2461
  %v2587 = vunpack.c.l.b16 %v2462
  %v2588 = vunpack.c.h.b16 %v2462
  %v2589 = vunpack.c.l.b16 %v2463
  %v2590 = vunpack.c.h.b16 %v2463
  %v2591 = vunpack.c.l.b16 %v2464
  %v2592 = vunpack.c.h.b16 %v2464
  %v2593 = vunpack.c.l.b16 %v2465
  %v2594 = vunpack.c.h.b16 %v2465
  %v2595 = vunpack.c.l.b16 %v2466
  %v2596 = vunpack.c.h.b16 %v2466
  %v2597 = vunpack.c.l.b16 %v2467
  %v2598 = vunpack.c.h.b16 %v2467
  %v2599 = vunpack.c.l.b16 %v2468
  %v2600 = vunpack.c.h.b16 %v2468
  %v2601 = vunpack.c.l.b16 %v2469
  %v2602 = vunpack.c.h.b16 %v2469
  %v2603 = vunpack.c.l.b16 %v2470
  %v2604 = vunpack.c.h.b16 %v2470
  %v2605 = vunpack.c.l.b16 %v2471
  %v2606 = vunpack.c.h.b16 %v2471
  %v2607 = vunpack.c.l.b16 %v2472
  %v2608 = vunpack.c.h.b16 %v2472
  %v2609 = vunpack.c.l.b16 %v2473
  %v2610 = vunpack.c.h.b16 %v2473
  %v2611 = vunpack.c.l.b16 %v2474
  %v2612 = vunpack.c.h.b16 %v2474
  %v2613 = vunpack.c.l.b16 %v2475
  %v2614 = vunpack.c.h.b16 %v2475
  %v2615 = vunpack.c.l.b16 %v2476
  %v2616 = vunpack.c.h.b16 %v2476
  %v2617 = vunpack.c.l.b16 %v2477
  %v2618 = vunpack.c.h.b16 %v2477
  %v2619 = vunpack.c.l.b16 %v2478
  %v2620 = vunpack.c.h.b16 %v2478
  %v2621 = vunpack.c.l.b16 %v2479
  %v2622 = vunpack.c.h.b16 %v2479
  %v2623 = vunpack.c.l.b16 %v2480
  %v2624 = vunpack.c.h.b16 %v2480
  %v2625 = vunpack.c.l.b16 %v2481
  %v2626 = vunpack.c.h.b16 %v2481
  %v2627 = vunpack.c.l.b16 %v2482
  %v2628 = vunpack.c.h.b16 %v2482
  %v2629 = vunpack.c.l.b16 %v2483
  %v2630 = vunpack.c.h.b16 %v2483
  %v2631 = vunpack.c.l.b16 %v2484
  %v2632 = vunpack.c.h.b16 %v2484
  %v2633 = vunpack.c.l.b16 %v2485
  %v2634 = vunpack.c.h.b16 %v2485
  %v2635 = vunpack.c.l.b16 %v2486
  %v2636 = vunpack.c.h.b16 %v2486
  %v2637 = vunpack.c.l.b16 %v2487
  %v2638 = vunpack.c.h.b16 %v2487
  %v2639 = vunpack.c.l.b16 %v2488
  %v2640 = vunpack.c.h.b16 %v2488
  %v2641 = vunpack.c.l.b16 %v2489
  %v2642 = vunpack.c.h.b16 %v2489
  %v2643 = vunpack.c.l.b16 %v2490
  %v2644 = vunpack.c.h.b16 %v2490
  %v2645 = vunpack.c.l.b16 %v2491
  %v2646 = vunpack.c.h.b16 %v2491
  %v2647 = vunpack.c.l.b16 %v2492
  %v2648 = vunpack.c.h.b16 %v2492
  %v2649 = vunpack.c.l.b16 %v2493
  %v2650 = vunpack.c.h.b16 %v2493
  %v2651 = vunpack.c.l.b16 %v2494
  %v2652 = vunpack.c.h.b16 %v2494
  %v2653 = vunpack.c.l.b16 %v2495
  %v2654 = vunpack.c.h.b16 %v2495
  %v2655 = vunpack.c.l.b16 %v2496
  %v2656 = vunpack.c.h.b16 %v2496
  %v2657 = vunpack.c.l.b16 %v2497
  %v2658 = vunpack.c.h.b16 %v2497
  %v2659 = vunpack.c.l.b16 %v2498
  %v2660 = vunpack.c.h.b16 %v2498
  %v2661 = vunpack.c.l.b16 %v2499
  %v2662 = vunpack.c.h.b16 %v2499
  %v2663 = vunpack.c.l.b16 %v2500
  %v2664 = vunpack.c.h.b16 %v2500
  %v2665 = vunpack.c.l.b16 %v2501
  %v2666 = vunpack.c.h.b16 %v2501
  %v2667 = vunpack.c.l.b16 %v2502
  %v2668 = vunpack.c.h.b16 %v2502
  %v2669 = vunpack.c.l.b16 %v2503
  %v2670 = vunpack.c.h.b16 %v2503
  %v2671 = vunpack.c.l.b16 %v2504
  %v2672 = vunpack.c.h.b16 %v2504
  %v2673 = vpack.c.b16 %v2577, %v2561
  %v2674 = vpack.c.b16 %v2578, %v2562
  %v2675 = vpack.c.b16 %v2579, %v2563
  %v2676 = vpack.c.b16 %v2580, %v2564
  %v2677 = vpack.c.b16 %v2581, %v2565
  %v2678 = vpack.c.b16 %v2582, %v2566
  %v2679 = vpack.c.b16 %v2583, %v2567
  %v2680 = vpack.c.b16 %v2584, %v2568
  %v2681 = vpack.c.b16 %v2585, %v2569
  %v2682 = vpack.c.b16 %v2586, %v2570
  %v2683 = vpack.c.b16 %v2587, %v2571
  %v2684 = vpack.c.b16 %v2588, %v2572
  %v2685 = vpack.c.b16 %v2589, %v2573
  %v2686 = vpack.c.b16 %v2590, %v2574
  %v2687 = vpack.c.b16 %v2591, %v2575
  %v2688 = vpack.c.b16 %v2592, %v2576
  %v2689 = vpack.c.b16 %v2609, %v2593
  %v2690 = vpack.c.b16 %v2610, %v2594
  %v2691 = vpack.c.b16 %v2611, %v2595
  %v2692 = vpack.c.b16 %v2612, %v2596
  %v2693 = vpack.c.b16 %v2613, %v2597
  %v2694 = vpack.c.b16 %v2614, %v2598
  %v2695 = vpack.c.b16 %v2615, %v2599
  %v2696 = vpack.c.b16 %v2616, %v2600
  %v2697 = vpack.c.b16 %v2617, %v2601
  %v2698 = vpack.c.b16 %v2618, %v2602
  %v2699 = vpack.c.b16 %v2619, %v2603
  %v2700 = vpack.c.b16 %v2620, %v2604
  %v2701 = vpack.c.b16 %v2621, %v2605
  %v2702 = vpack.c.b16 %v2622, %v2606
  %v2703 = vpack.c.b16 %v2623, %v2607
  %v2704 = vpack.c.b16 %v2624, %v2608
  %v2705 = vpack.c.b16 %v2641, %v2625
  %v2706 = vpack.c.b16 %v2642, %v2626
  %v2707 = vpack.c.b16 %v2643, %v2627
  %v2708 = vpack.c.b16 %v2644, %v2628
  %v2709 = vpack.c.b16 %v2645, %v2629
  %v2710 = vpack.c.b16 %v2646, %v2630
  %v2711 = vpack.c.b16 %v2647, %v2631
  %v2712 = vpack.c.b16 %v2648, %v2632
  %v2713 = vpack.c.b16 %v2649, %v2633
  %v2714 = vpack.c.b16 %v2650, %v2634
  %v2715 = vpack.c.b16 %v2651, %v2635
  %v2716 = vpack.c.b16 %v2652, %v2636
  %v2717 = vpack.c.b16 %v2653, %v2637
  %v2718 = vpack.c.b16 %v2654, %v2638
  %v2719 = vpack.c.b16 %v2655, %v2639
  %v2720 = vpack.c.b16 %v2656, %v2640
  %v2721 = vpack.c.b16 %v2657, %v2657
  %v2722 = vpack.c.b16 %v2658, %v2658
  %v2723 = vpack.c.b16 %v2659, %v2659
  %v2724 = vpack.c.b16 %v2660, %v2660
  %v2725 = vpack.c.b16 %v2661, %v2661
  %v2726 = vpack.c.b16 %v2662, %v2662
  %v2727 = vpack.c.b16 %v2663, %v2663
  %v2728 = vpack.c.b16 %v2664, %v2664
  %v2729 = vpack.c.b16 %v2665, %v2665
  %v2730 = vpack.c.b16 %v2666, %v2666
  %v2731 = vpack.c.b16 %v2667, %v2667
  %v2732 = vpack.c.b16 %v2668, %v2668
  %v2733 = vpack.c.b16 %v2669, %v2669
  %v2734 = vpack.c.b16 %v2670, %v2670
  %v2735 = vpack.c.b16 %v2671, %v2671
  %v2736 = vpack.c.b16 %v2672, %v2672
  %v2786 = vand.u32 %v2721, %v444
  %v2789 = vand.u32 %v2722, %v444
  %v2792 = vand.u32 %v2723, %v444
  %v2795 = vand.u32 %v2724, %v444
  %v2798 = vand.u32 %v2725, %v444
  %v2801 = vand.u32 %v2726, %v444
  %v2804 = vand.u32 %v2727, %v444
  %v2807 = vand.u32 %v2728, %v444
  %v2810 = vand.u32 %v2729, %v444
  %v2813 = vand.u32 %v2730, %v444
  %v2816 = vand.u32 %v2731, %v444
  %v2819 = vand.u32 %v2732, %v444
  %v2822 = vand.u32 %v2733, %v444
  %v2825 = vand.u32 %v2734, %v444
  %v2828 = vand.u32 %v2735, %v444
  %v2831 = vand.u32 %v2736, %v444
  %2833 = vmatprep.subr.bf16.mxu0 0
  %2834 = vmatpush1.bf16.msra.mxu0 0
  %2835 = vmatprep.subr.bf16.mxu0 0
  %2836 = vmatpush1.bf16.msra.mxu0 0
  %2837 = vmatprep.subr.bf16.mxu0 0
  %2838 = vmatpush1.bf16.msra.mxu0 0
  %2839 = vmatprep.subr.bf16.mxu0 0
  %2840 = vmatpush1.bf16.msra.mxu0 0
  %2841 = vmatprep.subr.bf16.mxu0 %v2789
  %2842 = vmatpush1.bf16.msra.mxu0 %v2786
  %2843 = vmatprep.subr.bf16.mxu0 %v2706
  %2844 = vmatpush1.bf16.msra.mxu0 %v2705
  %2845 = vmatprep.subr.bf16.mxu0 %v2690
  %2846 = vmatpush1.bf16.msra.mxu0 %v2689
  %2847 = vmatprep.subr.bf16.mxu0 %v2674
  %2848 = vmatpush1.bf16.msra.mxu0 %v2673
  %2849 = vmatprep.subr.bf16.mxu0 0
  %2850 = vmatpush2.bf16.msra.mxu0 0
  %2851 = vmatprep.subr.bf16.mxu0 0
  %2852 = vmatpush2.bf16.msra.mxu0 0
  %2853 = vmatprep.subr.bf16.mxu0 0
  %2854 = vmatpush2.bf16.msra.mxu0 0
  %2855 = vmatprep.subr.bf16.mxu0 0
  %2856 = vmatpush2.bf16.msra.mxu0 0
  %2857 = vmatprep.subr.bf16.mxu0 0
  %2858 = vmatpush2.bf16.msra.mxu0 0
  %2859 = vmatprep.subr.bf16.mxu0 0
  %2860 = vmatpush2.bf16.msra.mxu0 0
  %2861 = vmatprep.subr.bf16.mxu0 0
  %2862 = vmatpush2.bf16.msra.mxu0 0
  %2863 = vmatprep.subr.bf16.mxu0 0
  %2864 = vmatpush2.bf16.msra.mxu0 0
  %2865 = vmatprep.mubr.bf16.mxu0 0
  %2866 = vmatmul.mubr.bf16.gmra.mxu0 %v418
  %v2867 = vpop.f32.mrf.mxu0
  %v2868 = vadd.f32 0.0, %v2867
  %v2869 = vpop.f32.mrf.mxu0
  %v2870 = vadd.f32 0.0, %v2869
  %v2871 = vpop.f32.mrf.mxu0
  %v2872 = vadd.f32 0.0, %v2871
  %v2873 = vpop.f32.mrf.mxu0
  %v2874 = vadd.f32 0.0, %v2873
  %2875 = vmatprep.mubr.bf16.mxu0 0
  %2876 = vmatmul.mubr.bf16.gmra.mxu0 %v421
  %v2877 = vpop.f32.mrf.mxu0
  %v2878 = vadd.f32 0.0, %v2877
  %v2879 = vpop.f32.mrf.mxu0
  %v2880 = vadd.f32 0.0, %v2879
  %v2881 = vpop.f32.mrf.mxu0
  %v2882 = vadd.f32 0.0, %v2881
  %v2883 = vpop.f32.mrf.mxu0
  %v2884 = vadd.f32 0.0, %v2883
  %2885 = vmatprep.mubr.bf16.mxu0 0
  %2886 = vmatmul.mubr.bf16.gmra.mxu0 %v424
  %v2887 = vpop.f32.mrf.mxu0
  %v2888 = vadd.f32 0.0, %v2887
  %v2889 = vpop.f32.mrf.mxu0
  %v2890 = vadd.f32 0.0, %v2889
  %v2891 = vpop.f32.mrf.mxu0
  %v2892 = vadd.f32 0.0, %v2891
  %v2893 = vpop.f32.mrf.mxu0
  %v2894 = vadd.f32 0.0, %v2893
  %2895 = vmatprep.mubr.bf16.mxu0 0
  %2896 = vmatmul.mubr.bf16.gmra.mxu0 %v427
  %v2897 = vpop.f32.mrf.mxu0
  %v2898 = vadd.f32 0.0, %v2897
  %v2899 = vpop.f32.mrf.mxu0
  %v2900 = vadd.f32 0.0, %v2899
  %v2901 = vpop.f32.mrf.mxu0
  %v2902 = vadd.f32 0.0, %v2901
  %v2903 = vpop.f32.mrf.mxu0
  %v2904 = vadd.f32 0.0, %v2903
  %2905 = vmatprep.mubr.bf16.mxu0 0
  %2906 = vmatmul.mubr.bf16.gmra.mxu0 %v430
  %v2907 = vpop.f32.mrf.mxu0
  %v2908 = vadd.f32 0.0, %v2907
  %v2909 = vpop.f32.mrf.mxu0
  %v2910 = vadd.f32 0.0, %v2909
  %v2911 = vpop.f32.mrf.mxu0
  %v2912 = vadd.f32 0.0, %v2911
  %v2913 = vpop.f32.mrf.mxu0
  %v2914 = vadd.f32 0.0, %v2913
  %2915 = vmatprep.mubr.bf16.mxu0 0
  %2916 = vmatmul.mubr.bf16.gmra.mxu0 %v433
  %v2917 = vpop.f32.mrf.mxu0
  %v2918 = vadd.f32 0.0, %v2917
  %v2919 = vpop.f32.mrf.mxu0
  %v2920 = vadd.f32 0.0, %v2919
  %v2921 = vpop.f32.mrf.mxu0
  %v2922 = vadd.f32 0.0, %v2921
  %v2923 = vpop.f32.mrf.mxu0
  %v2924 = vadd.f32 0.0, %v2923
  %2925 = vmatprep.mubr.bf16.mxu0 0
  %2926 = vmatmul.mubr.bf16.gmra.mxu0 %v436
  %v2927 = vpop.f32.mrf.mxu0
  %v2928 = vadd.f32 0.0, %v2927
  %v2929 = vpop.f32.mrf.mxu0
  %v2930 = vadd.f32 0.0, %v2929
  %v2931 = vpop.f32.mrf.mxu0
  %v2932 = vadd.f32 0.0, %v2931
  %v2933 = vpop.f32.mrf.mxu0
  %v2934 = vadd.f32 0.0, %v2933
  %2935 = vmatprep.mubr.bf16.mxu0 0
  %2936 = vmatmul.mubr.bf16.gmra.mxu0 %v439
  %v2937 = vpop.f32.mrf.mxu0
  %v2938 = vadd.f32 0.0, %v2937
  %v2939 = vpop.f32.mrf.mxu0
  %v2940 = vadd.f32 0.0, %v2939
  %v2941 = vpop.f32.mrf.mxu0
  %v2942 = vadd.f32 0.0, %v2941
  %v2943 = vpop.f32.mrf.mxu0
  %v2944 = vadd.f32 0.0, %v2943
  %2945 = vdwg.mxu0
  %2946 = vmatprep.subr.bf16.mxu0 0
  %2947 = vmatpush1.bf16.msra.mxu0 0
  %2948 = vmatprep.subr.bf16.mxu0 0
  %2949 = vmatpush1.bf16.msra.mxu0 0
  %2950 = vmatprep.subr.bf16.mxu0 0
  %2951 = vmatpush1.bf16.msra.mxu0 0
  %2952 = vmatprep.subr.bf16.mxu0 0
  %2953 = vmatpush1.bf16.msra.mxu0 0
  %2954 = vmatprep.subr.bf16.mxu0 %v2795
  %2955 = vmatpush1.bf16.msra.mxu0 %v2792
  %2956 = vmatprep.subr.bf16.mxu0 %v2708
  %2957 = vmatpush1.bf16.msra.mxu0 %v2707
  %2958 = vmatprep.subr.bf16.mxu0 %v2692
  %2959 = vmatpush1.bf16.msra.mxu0 %v2691
  %2960 = vmatprep.subr.bf16.mxu0 %v2676
  %2961 = vmatpush1.bf16.msra.mxu0 %v2675
  %2962 = vmatprep.subr.bf16.mxu0 0
  %2963 = vmatpush2.bf16.msra.mxu0 0
  %2964 = vmatprep.subr.bf16.mxu0 0
  %2965 = vmatpush2.bf16.msra.mxu0 0
  %2966 = vmatprep.subr.bf16.mxu0 0
  %2967 = vmatpush2.bf16.msra.mxu0 0
  %2968 = vmatprep.subr.bf16.mxu0 0
  %2969 = vmatpush2.bf16.msra.mxu0 0
  %2970 = vmatprep.subr.bf16.mxu0 0
  %2971 = vmatpush2.bf16.msra.mxu0 0
  %2972 = vmatprep.subr.bf16.mxu0 0
  %2973 = vmatpush2.bf16.msra.mxu0 0
  %2974 = vmatprep.subr.bf16.mxu0 0
  %2975 = vmatpush2.bf16.msra.mxu0 0
  %2976 = vmatprep.subr.bf16.mxu0 0
  %2977 = vmatpush2.bf16.msra.mxu0 0
  %2978 = vmatprep.mubr.bf16.mxu0 0
  %2979 = vmatmul.mubr.bf16.gmra.mxu0 %v418
  %v2980 = vpop.f32.mrf.mxu0
  %v2981 = vadd.f32 0.0, %v2980
  %v2982 = vpop.f32.mrf.mxu0
  %v2983 = vadd.f32 0.0, %v2982
  %v2984 = vpop.f32.mrf.mxu0
  %v2985 = vadd.f32 0.0, %v2984
  %v2986 = vpop.f32.mrf.mxu0
  %v2987 = vadd.f32 0.0, %v2986
  %2988 = vmatprep.mubr.bf16.mxu0 0
  %2989 = vmatmul.mubr.bf16.gmra.mxu0 %v421
  %v2990 = vpop.f32.mrf.mxu0
  %v2991 = vadd.f32 0.0, %v2990
  %v2992 = vpop.f32.mrf.mxu0
  %v2993 = vadd.f32 0.0, %v2992
  %v2994 = vpop.f32.mrf.mxu0
  %v2995 = vadd.f32 0.0, %v2994
  %v2996 = vpop.f32.mrf.mxu0
  %v2997 = vadd.f32 0.0, %v2996
  %2998 = vmatprep.mubr.bf16.mxu0 0
  %2999 = vmatmul.mubr.bf16.gmra.mxu0 %v424
  %v3000 = vpop.f32.mrf.mxu0
  %v3001 = vadd.f32 0.0, %v3000
  %v3002 = vpop.f32.mrf.mxu0
  %v3003 = vadd.f32 0.0, %v3002
  %v3004 = vpop.f32.mrf.mxu0
  %v3005 = vadd.f32 0.0, %v3004
  %v3006 = vpop.f32.mrf.mxu0
  %v3007 = vadd.f32 0.0, %v3006
  %3008 = vmatprep.mubr.bf16.mxu0 0
  %3009 = vmatmul.mubr.bf16.gmra.mxu0 %v427
  %v3010 = vpop.f32.mrf.mxu0
  %v3011 = vadd.f32 0.0, %v3010
  %v3012 = vpop.f32.mrf.mxu0
  %v3013 = vadd.f32 0.0, %v3012
  %v3014 = vpop.f32.mrf.mxu0
  %v3015 = vadd.f32 0.0, %v3014
  %v3016 = vpop.f32.mrf.mxu0
  %v3017 = vadd.f32 0.0, %v3016
  %3018 = vmatprep.mubr.bf16.mxu0 0
  %3019 = vmatmul.mubr.bf16.gmra.mxu0 %v430
  %v3020 = vpop.f32.mrf.mxu0
  %v3021 = vadd.f32 0.0, %v3020
  %v3022 = vpop.f32.mrf.mxu0
  %v3023 = vadd.f32 0.0, %v3022
  %v3024 = vpop.f32.mrf.mxu0
  %v3025 = vadd.f32 0.0, %v3024
  %v3026 = vpop.f32.mrf.mxu0
  %v3027 = vadd.f32 0.0, %v3026
  %3028 = vmatprep.mubr.bf16.mxu0 0
  %3029 = vmatmul.mubr.bf16.gmra.mxu0 %v433
  %v3030 = vpop.f32.mrf.mxu0
  %v3031 = vadd.f32 0.0, %v3030
  %v3032 = vpop.f32.mrf.mxu0
  %v3033 = vadd.f32 0.0, %v3032
  %v3034 = vpop.f32.mrf.mxu0
  %v3035 = vadd.f32 0.0, %v3034
  %v3036 = vpop.f32.mrf.mxu0
  %v3037 = vadd.f32 0.0, %v3036
  %3038 = vmatprep.mubr.bf16.mxu0 0
  %3039 = vmatmul.mubr.bf16.gmra.mxu0 %v436
  %v3040 = vpop.f32.mrf.mxu0
  %v3041 = vadd.f32 0.0, %v3040
  %v3042 = vpop.f32.mrf.mxu0
  %v3043 = vadd.f32 0.0, %v3042
  %v3044 = vpop.f32.mrf.mxu0
  %v3045 = vadd.f32 0.0, %v3044
  %v3046 = vpop.f32.mrf.mxu0
  %v3047 = vadd.f32 0.0, %v3046
  %3048 = vmatprep.mubr.bf16.mxu0 0
  %3049 = vmatmul.mubr.bf16.gmra.mxu0 %v439
  %v3050 = vpop.f32.mrf.mxu0
  %v3051 = vadd.f32 0.0, %v3050
  %v3052 = vpop.f32.mrf.mxu0
  %v3053 = vadd.f32 0.0, %v3052
  %v3054 = vpop.f32.mrf.mxu0
  %v3055 = vadd.f32 0.0, %v3054
  %v3056 = vpop.f32.mrf.mxu0
  %v3057 = vadd.f32 0.0, %v3056
  %3058 = vdwg.mxu0
  %3059 = vmatprep.subr.bf16.mxu0 0
  %3060 = vmatpush1.bf16.msra.mxu0 0
  %3061 = vmatprep.subr.bf16.mxu0 0
  %3062 = vmatpush1.bf16.msra.mxu0 0
  %3063 = vmatprep.subr.bf16.mxu0 0
  %3064 = vmatpush1.bf16.msra.mxu0 0
  %3065 = vmatprep.subr.bf16.mxu0 0
  %3066 = vmatpush1.bf16.msra.mxu0 0
  %3067 = vmatprep.subr.bf16.mxu0 %v2801
  %3068 = vmatpush1.bf16.msra.mxu0 %v2798
  %3069 = vmatprep.subr.bf16.mxu0 %v2710
  %3070 = vmatpush1.bf16.msra.mxu0 %v2709
  %3071 = vmatprep.subr.bf16.mxu0 %v2694
  %3072 = vmatpush1.bf16.msra.mxu0 %v2693
  %3073 = vmatprep.subr.bf16.mxu0 %v2678
  %3074 = vmatpush1.bf16.msra.mxu0 %v2677
  %3075 = vmatprep.subr.bf16.mxu0 0
  %3076 = vmatpush2.bf16.msra.mxu0 0
  %3077 = vmatprep.subr.bf16.mxu0 0
  %3078 = vmatpush2.bf16.msra.mxu0 0
  %3079 = vmatprep.subr.bf16.mxu0 0
  %3080 = vmatpush2.bf16.msra.mxu0 0
  %3081 = vmatprep.subr.bf16.mxu0 0
  %3082 = vmatpush2.bf16.msra.mxu0 0
  %3083 = vmatprep.subr.bf16.mxu0 0
  %3084 = vmatpush2.bf16.msra.mxu0 0
  %3085 = vmatprep.subr.bf16.mxu0 0
  %3086 = vmatpush2.bf16.msra.mxu0 0
  %3087 = vmatprep.subr.bf16.mxu0 0
  %3088 = vmatpush2.bf16.msra.mxu0 0
  %3089 = vmatprep.subr.bf16.mxu0 0
  %3090 = vmatpush2.bf16.msra.mxu0 0
  %3091 = vmatprep.mubr.bf16.mxu0 0
  %3092 = vmatmul.mubr.bf16.gmra.mxu0 %v418
  %v3093 = vpop.f32.mrf.mxu0
  %v3094 = vadd.f32 0.0, %v3093
  %v3095 = vpop.f32.mrf.mxu0
  %v3096 = vadd.f32 0.0, %v3095
  %v3097 = vpop.f32.mrf.mxu0
  %v3098 = vadd.f32 0.0, %v3097
  %v3099 = vpop.f32.mrf.mxu0
  %v3100 = vadd.f32 0.0, %v3099
  %3101 = vmatprep.mubr.bf16.mxu0 0
  %3102 = vmatmul.mubr.bf16.gmra.mxu0 %v421
  %v3103 = vpop.f32.mrf.mxu0
  %v3104 = vadd.f32 0.0, %v3103
  %v3105 = vpop.f32.mrf.mxu0
  %v3106 = vadd.f32 0.0, %v3105
  %v3107 = vpop.f32.mrf.mxu0
  %v3108 = vadd.f32 0.0, %v3107
  %v3109 = vpop.f32.mrf.mxu0
  %v3110 = vadd.f32 0.0, %v3109
  %3111 = vmatprep.mubr.bf16.mxu0 0
  %3112 = vmatmul.mubr.bf16.gmra.mxu0 %v424
  %v3113 = vpop.f32.mrf.mxu0
  %v3114 = vadd.f32 0.0, %v3113
  %v3115 = vpop.f32.mrf.mxu0
  %v3116 = vadd.f32 0.0, %v3115
  %v3117 = vpop.f32.mrf.mxu0
  %v3118 = vadd.f32 0.0, %v3117
  %v3119 = vpop.f32.mrf.mxu0
  %v3120 = vadd.f32 0.0, %v3119
  %3121 = vmatprep.mubr.bf16.mxu0 0
  %3122 = vmatmul.mubr.bf16.gmra.mxu0 %v427
  %v3123 = vpop.f32.mrf.mxu0
  %v3124 = vadd.f32 0.0, %v3123
  %v3125 = vpop.f32.mrf.mxu0
  %v3126 = vadd.f32 0.0, %v3125
  %v3127 = vpop.f32.mrf.mxu0
  %v3128 = vadd.f32 0.0, %v3127
  %v3129 = vpop.f32.mrf.mxu0
  %v3130 = vadd.f32 0.0, %v3129
  %3131 = vmatprep.mubr.bf16.mxu0 0
  %3132 = vmatmul.mubr.bf16.gmra.mxu0 %v430
  %v3133 = vpop.f32.mrf.mxu0
  %v3134 = vadd.f32 0.0, %v3133
  %v3135 = vpop.f32.mrf.mxu0
  %v3136 = vadd.f32 0.0, %v3135
  %v3137 = vpop.f32.mrf.mxu0
  %v3138 = vadd.f32 0.0, %v3137
  %v3139 = vpop.f32.mrf.mxu0
  %v3140 = vadd.f32 0.0, %v3139
  %3141 = vmatprep.mubr.bf16.mxu0 0
  %3142 = vmatmul.mubr.bf16.gmra.mxu0 %v433
  %v3143 = vpop.f32.mrf.mxu0
  %v3144 = vadd.f32 0.0, %v3143
  %v3145 = vpop.f32.mrf.mxu0
  %v3146 = vadd.f32 0.0, %v3145
  %v3147 = vpop.f32.mrf.mxu0
  %v3148 = vadd.f32 0.0, %v3147
  %v3149 = vpop.f32.mrf.mxu0
  %v3150 = vadd.f32 0.0, %v3149
  %3151 = vmatprep.mubr.bf16.mxu0 0
  %3152 = vmatmul.mubr.bf16.gmra.mxu0 %v436
  %v3153 = vpop.f32.mrf.mxu0
  %v3154 = vadd.f32 0.0, %v3153
  %v3155 = vpop.f32.mrf.mxu0
  %v3156 = vadd.f32 0.0, %v3155
  %v3157 = vpop.f32.mrf.mxu0
  %v3158 = vadd.f32 0.0, %v3157
  %v3159 = vpop.f32.mrf.mxu0
  %v3160 = vadd.f32 0.0, %v3159
  %3161 = vmatprep.mubr.bf16.mxu0 0
  %3162 = vmatmul.mubr.bf16.gmra.mxu0 %v439
  %v3163 = vpop.f32.mrf.mxu0
  %v3164 = vadd.f32 0.0, %v3163
  %v3165 = vpop.f32.mrf.mxu0
  %v3166 = vadd.f32 0.0, %v3165
  %v3167 = vpop.f32.mrf.mxu0
  %v3168 = vadd.f32 0.0, %v3167
  %v3169 = vpop.f32.mrf.mxu0
  %v3170 = vadd.f32 0.0, %v3169
  %3171 = vdwg.mxu0
  %3172 = vmatprep.subr.bf16.mxu0 0
  %3173 = vmatpush1.bf16.msra.mxu0 0
  %3174 = vmatprep.subr.bf16.mxu0 0
  %3175 = vmatpush1.bf16.msra.mxu0 0
  %3176 = vmatprep.subr.bf16.mxu0 0
  %3177 = vmatpush1.bf16.msra.mxu0 0
  %3178 = vmatprep.subr.bf16.mxu0 0
  %3179 = vmatpush1.bf16.msra.mxu0 0
  %3180 = vmatprep.subr.bf16.mxu0 %v2807
  %3181 = vmatpush1.bf16.msra.mxu0 %v2804
  %3182 = vmatprep.subr.bf16.mxu0 %v2712
  %3183 = vmatpush1.bf16.msra.mxu0 %v2711
  %3184 = vmatprep.subr.bf16.mxu0 %v2696
  %3185 = vmatpush1.bf16.msra.mxu0 %v2695
  %3186 = vmatprep.subr.bf16.mxu0 %v2680
  %3187 = vmatpush1.bf16.msra.mxu0 %v2679
  %3188 = vmatprep.subr.bf16.mxu0 0
  %3189 = vmatpush2.bf16.msra.mxu0 0
  %3190 = vmatprep.subr.bf16.mxu0 0
  %3191 = vmatpush2.bf16.msra.mxu0 0
  %3192 = vmatprep.subr.bf16.mxu0 0
  %3193 = vmatpush2.bf16.msra.mxu0 0
  %3194 = vmatprep.subr.bf16.mxu0 0
  %3195 = vmatpush2.bf16.msra.mxu0 0
  %3196 = vmatprep.subr.bf16.mxu0 0
  %3197 = vmatpush2.bf16.msra.mxu0 0
  %3198 = vmatprep.subr.bf16.mxu0 0
  %3199 = vmatpush2.bf16.msra.mxu0 0
  %3200 = vmatprep.subr.bf16.mxu0 0
  %3201 = vmatpush2.bf16.msra.mxu0 0
  %3202 = vmatprep.subr.bf16.mxu0 0
  %3203 = vmatpush2.bf16.msra.mxu0 0
  %3204 = vmatprep.mubr.bf16.mxu0 0
  %3205 = vmatmul.mubr.bf16.gmra.mxu0 %v418
  %v3206 = vpop.f32.mrf.mxu0
  %v3207 = vadd.f32 0.0, %v3206
  %v3208 = vpop.f32.mrf.mxu0
  %v3209 = vadd.f32 0.0, %v3208
  %v3210 = vpop.f32.mrf.mxu0
  %v3211 = vadd.f32 0.0, %v3210
  %v3212 = vpop.f32.mrf.mxu0
  %v3213 = vadd.f32 0.0, %v3212
  %3214 = vmatprep.mubr.bf16.mxu0 0
  %3215 = vmatmul.mubr.bf16.gmra.mxu0 %v421
  %v3216 = vpop.f32.mrf.mxu0
  %v3217 = vadd.f32 0.0, %v3216
  %v3218 = vpop.f32.mrf.mxu0
  %v3219 = vadd.f32 0.0, %v3218
  %v3220 = vpop.f32.mrf.mxu0
  %v3221 = vadd.f32 0.0, %v3220
  %v3222 = vpop.f32.mrf.mxu0
  %v3223 = vadd.f32 0.0, %v3222
  %3224 = vmatprep.mubr.bf16.mxu0 0
  %3225 = vmatmul.mubr.bf16.gmra.mxu0 %v424
  %v3226 = vpop.f32.mrf.mxu0
  %v3227 = vadd.f32 0.0, %v3226
  %v3228 = vpop.f32.mrf.mxu0
  %v3229 = vadd.f32 0.0, %v3228
  %v3230 = vpop.f32.mrf.mxu0
  %v3231 = vadd.f32 0.0, %v3230
  %v3232 = vpop.f32.mrf.mxu0
  %v3233 = vadd.f32 0.0, %v3232
  %3234 = vmatprep.mubr.bf16.mxu0 0
  %3235 = vmatmul.mubr.bf16.gmra.mxu0 %v427
  %v3236 = vpop.f32.mrf.mxu0
  %v3237 = vadd.f32 0.0, %v3236
  %v3238 = vpop.f32.mrf.mxu0
  %v3239 = vadd.f32 0.0, %v3238
  %v3240 = vpop.f32.mrf.mxu0
  %v3241 = vadd.f32 0.0, %v3240
  %v3242 = vpop.f32.mrf.mxu0
  %v3243 = vadd.f32 0.0, %v3242
  %3244 = vmatprep.mubr.bf16.mxu0 0
  %3245 = vmatmul.mubr.bf16.gmra.mxu0 %v430
  %v3246 = vpop.f32.mrf.mxu0
  %v3247 = vadd.f32 0.0, %v3246
  %v3248 = vpop.f32.mrf.mxu0
  %v3249 = vadd.f32 0.0, %v3248
  %v3250 = vpop.f32.mrf.mxu0
  %v3251 = vadd.f32 0.0, %v3250
  %v3252 = vpop.f32.mrf.mxu0
  %v3253 = vadd.f32 0.0, %v3252
  %3254 = vmatprep.mubr.bf16.mxu0 0
  %3255 = vmatmul.mubr.bf16.gmra.mxu0 %v433
  %v3256 = vpop.f32.mrf.mxu0
  %v3257 = vadd.f32 0.0, %v3256
  %v3258 = vpop.f32.mrf.mxu0
  %v3259 = vadd.f32 0.0, %v3258
  %v3260 = vpop.f32.mrf.mxu0
  %v3261 = vadd.f32 0.0, %v3260
  %v3262 = vpop.f32.mrf.mxu0
  %v3263 = vadd.f32 0.0, %v3262
  %3264 = vmatprep.mubr.bf16.mxu0 0
  %3265 = vmatmul.mubr.bf16.gmra.mxu0 %v436
  %v3266 = vpop.f32.mrf.mxu0
  %v3267 = vadd.f32 0.0, %v3266
  %v3268 = vpop.f32.mrf.mxu0
  %v3269 = vadd.f32 0.0, %v3268
  %v3270 = vpop.f32.mrf.mxu0
  %v3271 = vadd.f32 0.0, %v3270
  %v3272 = vpop.f32.mrf.mxu0
  %v3273 = vadd.f32 0.0, %v3272
  %3274 = vmatprep.mubr.bf16.mxu0 0
  %3275 = vmatmul.mubr.bf16.gmra.mxu0 %v439
  %v3276 = vpop.f32.mrf.mxu0
  %v3277 = vadd.f32 0.0, %v3276
  %v3278 = vpop.f32.mrf.mxu0
  %v3279 = vadd.f32 0.0, %v3278
  %v3280 = vpop.f32.mrf.mxu0
  %v3281 = vadd.f32 0.0, %v3280
  %v3282 = vpop.f32.mrf.mxu0
  %v3283 = vadd.f32 0.0, %v3282
  %3284 = vdwg.mxu0
  %3285 = vmatprep.subr.bf16.mxu0 0
  %3286 = vmatpush1.bf16.msra.mxu0 0
  %3287 = vmatprep.subr.bf16.mxu0 0
  %3288 = vmatpush1.bf16.msra.mxu0 0
  %3289 = vmatprep.subr.bf16.mxu0 0
  %3290 = vmatpush1.bf16.msra.mxu0 0
  %3291 = vmatprep.subr.bf16.mxu0 0
  %3292 = vmatpush1.bf16.msra.mxu0 0
  %3293 = vmatprep.subr.bf16.mxu0 %v2813
  %3294 = vmatpush1.bf16.msra.mxu0 %v2810
  %3295 = vmatprep.subr.bf16.mxu0 %v2714
  %3296 = vmatpush1.bf16.msra.mxu0 %v2713
  %3297 = vmatprep.subr.bf16.mxu0 %v2698
  %3298 = vmatpush1.bf16.msra.mxu0 %v2697
  %3299 = vmatprep.subr.bf16.mxu0 %v2682
  %3300 = vmatpush1.bf16.msra.mxu0 %v2681
  %3301 = vmatprep.subr.bf16.mxu0 0
  %3302 = vmatpush2.bf16.msra.mxu0 0
  %3303 = vmatprep.subr.bf16.mxu0 0
  %3304 = vmatpush2.bf16.msra.mxu0 0
  %3305 = vmatprep.subr.bf16.mxu0 0
  %3306 = vmatpush2.bf16.msra.mxu0 0
  %3307 = vmatprep.subr.bf16.mxu0 0
  %3308 = vmatpush2.bf16.msra.mxu0 0
  %3309 = vmatprep.subr.bf16.mxu0 0
  %3310 = vmatpush2.bf16.msra.mxu0 0
  %3311 = vmatprep.subr.bf16.mxu0 0
  %3312 = vmatpush2.bf16.msra.mxu0 0
  %3313 = vmatprep.subr.bf16.mxu0 0
  %3314 = vmatpush2.bf16.msra.mxu0 0
  %3315 = vmatprep.subr.bf16.mxu0 0
  %3316 = vmatpush2.bf16.msra.mxu0 0
  %3317 = vmatprep.mubr.bf16.mxu0 0
  %3318 = vmatmul.mubr.bf16.gmra.mxu0 %v418
  %v3319 = vpop.f32.mrf.mxu0
  %v3320 = vadd.f32 0.0, %v3319
  %v3321 = vpop.f32.mrf.mxu0
  %v3322 = vadd.f32 0.0, %v3321
  %v3323 = vpop.f32.mrf.mxu0
  %v3324 = vadd.f32 0.0, %v3323
  %v3325 = vpop.f32.mrf.mxu0
  %v3326 = vadd.f32 0.0, %v3325
  %3327 = vmatprep.mubr.bf16.mxu0 0
  %3328 = vmatmul.mubr.bf16.gmra.mxu0 %v421
  %v3329 = vpop.f32.mrf.mxu0
  %v3330 = vadd.f32 0.0, %v3329
  %v3331 = vpop.f32.mrf.mxu0
  %v3332 = vadd.f32 0.0, %v3331
  %v3333 = vpop.f32.mrf.mxu0
  %v3334 = vadd.f32 0.0, %v3333
  %v3335 = vpop.f32.mrf.mxu0
  %v3336 = vadd.f32 0.0, %v3335
  %3337 = vmatprep.mubr.bf16.mxu0 0
  %3338 = vmatmul.mubr.bf16.gmra.mxu0 %v424
  %v3339 = vpop.f32.mrf.mxu0
  %v3340 = vadd.f32 0.0, %v3339
  %v3341 = vpop.f32.mrf.mxu0
  %v3342 = vadd.f32 0.0, %v3341
  %v3343 = vpop.f32.mrf.mxu0
  %v3344 = vadd.f32 0.0, %v3343
  %v3345 = vpop.f32.mrf.mxu0
  %v3346 = vadd.f32 0.0, %v3345
  %3347 = vmatprep.mubr.bf16.mxu0 0
  %3348 = vmatmul.mubr.bf16.gmra.mxu0 %v427
  %v3349 = vpop.f32.mrf.mxu0
  %v3350 = vadd.f32 0.0, %v3349
  %v3351 = vpop.f32.mrf.mxu0
  %v3352 = vadd.f32 0.0, %v3351
  %v3353 = vpop.f32.mrf.mxu0
  %v3354 = vadd.f32 0.0, %v3353
  %v3355 = vpop.f32.mrf.mxu0
  %v3356 = vadd.f32 0.0, %v3355
  %3357 = vmatprep.mubr.bf16.mxu0 0
  %3358 = vmatmul.mubr.bf16.gmra.mxu0 %v430
  %v3359 = vpop.f32.mrf.mxu0
  %v3360 = vadd.f32 0.0, %v3359
  %v3361 = vpop.f32.mrf.mxu0
  %v3362 = vadd.f32 0.0, %v3361
  %v3363 = vpop.f32.mrf.mxu0
  %v3364 = vadd.f32 0.0, %v3363
  %v3365 = vpop.f32.mrf.mxu0
  %v3366 = vadd.f32 0.0, %v3365
  %3367 = vmatprep.mubr.bf16.mxu0 0
  %3368 = vmatmul.mubr.bf16.gmra.mxu0 %v433
  %v3369 = vpop.f32.mrf.mxu0
  %v3370 = vadd.f32 0.0, %v3369
  %v3371 = vpop.f32.mrf.mxu0
  %v3372 = vadd.f32 0.0, %v3371
  %v3373 = vpop.f32.mrf.mxu0
  %v3374 = vadd.f32 0.0, %v3373
  %v3375 = vpop.f32.mrf.mxu0
  %v3376 = vadd.f32 0.0, %v3375
  %3377 = vmatprep.mubr.bf16.mxu0 0
  %3378 = vmatmul.mubr.bf16.gmra.mxu0 %v436
  %v3379 = vpop.f32.mrf.mxu0
  %v3380 = vadd.f32 0.0, %v3379
  %v3381 = vpop.f32.mrf.mxu0
  %v3382 = vadd.f32 0.0, %v3381
  %v3383 = vpop.f32.mrf.mxu0
  %v3384 = vadd.f32 0.0, %v3383
  %v3385 = vpop.f32.mrf.mxu0
  %v3386 = vadd.f32 0.0, %v3385
  %3387 = vmatprep.mubr.bf16.mxu0 0
  %3388 = vmatmul.mubr.bf16.gmra.mxu0 %v439
  %v3389 = vpop.f32.mrf.mxu0
  %v3390 = vadd.f32 0.0, %v3389
  %v3391 = vpop.f32.mrf.mxu0
  %v3392 = vadd.f32 0.0, %v3391
  %v3393 = vpop.f32.mrf.mxu0
  %v3394 = vadd.f32 0.0, %v3393
  %v3395 = vpop.f32.mrf.mxu0
  %v3396 = vadd.f32 0.0, %v3395
  %3397 = vdwg.mxu0
  %3398 = vmatprep.subr.bf16.mxu0 0
  %3399 = vmatpush1.bf16.msra.mxu0 0
  %3400 = vmatprep.subr.bf16.mxu0 0
  %3401 = vmatpush1.bf16.msra.mxu0 0
  %3402 = vmatprep.subr.bf16.mxu0 0
  %3403 = vmatpush1.bf16.msra.mxu0 0
  %3404 = vmatprep.subr.bf16.mxu0 0
  %3405 = vmatpush1.bf16.msra.mxu0 0
  %3406 = vmatprep.subr.bf16.mxu0 %v2819
  %3407 = vmatpush1.bf16.msra.mxu0 %v2816
  %3408 = vmatprep.subr.bf16.mxu0 %v2716
  %3409 = vmatpush1.bf16.msra.mxu0 %v2715
  %3410 = vmatprep.subr.bf16.mxu0 %v2700
  %3411 = vmatpush1.bf16.msra.mxu0 %v2699
  %3412 = vmatprep.subr.bf16.mxu0 %v2684
  %3413 = vmatpush1.bf16.msra.mxu0 %v2683
  %3414 = vmatprep.subr.bf16.mxu0 0
  %3415 = vmatpush2.bf16.msra.mxu0 0
  %3416 = vmatprep.subr.bf16.mxu0 0
  %3417 = vmatpush2.bf16.msra.mxu0 0
  %3418 = vmatprep.subr.bf16.mxu0 0
  %3419 = vmatpush2.bf16.msra.mxu0 0
  %3420 = vmatprep.subr.bf16.mxu0 0
  %3421 = vmatpush2.bf16.msra.mxu0 0
  %3422 = vmatprep.subr.bf16.mxu0 0
  %3423 = vmatpush2.bf16.msra.mxu0 0
  %3424 = vmatprep.subr.bf16.mxu0 0
  %3425 = vmatpush2.bf16.msra.mxu0 0
  %3426 = vmatprep.subr.bf16.mxu0 0
  %3427 = vmatpush2.bf16.msra.mxu0 0
  %3428 = vmatprep.subr.bf16.mxu0 0
  %3429 = vmatpush2.bf16.msra.mxu0 0
  %3430 = vmatprep.mubr.bf16.mxu0 0
  %3431 = vmatmul.mubr.bf16.gmra.mxu0 %v418
  %v3432 = vpop.f32.mrf.mxu0
  %v3433 = vadd.f32 0.0, %v3432
  %v3434 = vpop.f32.mrf.mxu0
  %v3435 = vadd.f32 0.0, %v3434
  %v3436 = vpop.f32.mrf.mxu0
  %v3437 = vadd.f32 0.0, %v3436
  %v3438 = vpop.f32.mrf.mxu0
  %v3439 = vadd.f32 0.0, %v3438
  %3440 = vmatprep.mubr.bf16.mxu0 0
  %3441 = vmatmul.mubr.bf16.gmra.mxu0 %v421
  %v3442 = vpop.f32.mrf.mxu0
  %v3443 = vadd.f32 0.0, %v3442
  %v3444 = vpop.f32.mrf.mxu0
  %v3445 = vadd.f32 0.0, %v3444
  %v3446 = vpop.f32.mrf.mxu0
  %v3447 = vadd.f32 0.0, %v3446
  %v3448 = vpop.f32.mrf.mxu0
  %v3449 = vadd.f32 0.0, %v3448
  %3450 = vmatprep.mubr.bf16.mxu0 0
  %3451 = vmatmul.mubr.bf16.gmra.mxu0 %v424
  %v3452 = vpop.f32.mrf.mxu0
  %v3453 = vadd.f32 0.0, %v3452
  %v3454 = vpop.f32.mrf.mxu0
  %v3455 = vadd.f32 0.0, %v3454
  %v3456 = vpop.f32.mrf.mxu0
  %v3457 = vadd.f32 0.0, %v3456
  %v3458 = vpop.f32.mrf.mxu0
  %v3459 = vadd.f32 0.0, %v3458
  %3460 = vmatprep.mubr.bf16.mxu0 0
  %3461 = vmatmul.mubr.bf16.gmra.mxu0 %v427
  %v3462 = vpop.f32.mrf.mxu0
  %v3463 = vadd.f32 0.0, %v3462
  %v3464 = vpop.f32.mrf.mxu0
  %v3465 = vadd.f32 0.0, %v3464
  %v3466 = vpop.f32.mrf.mxu0
  %v3467 = vadd.f32 0.0, %v3466
  %v3468 = vpop.f32.mrf.mxu0
  %v3469 = vadd.f32 0.0, %v3468
  %3470 = vmatprep.mubr.bf16.mxu0 0
  %3471 = vmatmul.mubr.bf16.gmra.mxu0 %v430
  %v3472 = vpop.f32.mrf.mxu0
  %v3473 = vadd.f32 0.0, %v3472
  %v3474 = vpop.f32.mrf.mxu0
  %v3475 = vadd.f32 0.0, %v3474
  %v3476 = vpop.f32.mrf.mxu0
  %v3477 = vadd.f32 0.0, %v3476
  %v3478 = vpop.f32.mrf.mxu0
  %v3479 = vadd.f32 0.0, %v3478
  %3480 = vmatprep.mubr.bf16.mxu0 0
  %3481 = vmatmul.mubr.bf16.gmra.mxu0 %v433
  %v3482 = vpop.f32.mrf.mxu0
  %v3483 = vadd.f32 0.0, %v3482
  %v3484 = vpop.f32.mrf.mxu0
  %v3485 = vadd.f32 0.0, %v3484
  %v3486 = vpop.f32.mrf.mxu0
  %v3487 = vadd.f32 0.0, %v3486
  %v3488 = vpop.f32.mrf.mxu0
  %v3489 = vadd.f32 0.0, %v3488
  %3490 = vmatprep.mubr.bf16.mxu0 0
  %3491 = vmatmul.mubr.bf16.gmra.mxu0 %v436
  %v3492 = vpop.f32.mrf.mxu0
  %v3493 = vadd.f32 0.0, %v3492
  %v3494 = vpop.f32.mrf.mxu0
  %v3495 = vadd.f32 0.0, %v3494
  %v3496 = vpop.f32.mrf.mxu0
  %v3497 = vadd.f32 0.0, %v3496
  %v3498 = vpop.f32.mrf.mxu0
  %v3499 = vadd.f32 0.0, %v3498
  %3500 = vmatprep.mubr.bf16.mxu0 0
  %3501 = vmatmul.mubr.bf16.gmra.mxu0 %v439
  %v3502 = vpop.f32.mrf.mxu0
  %v3503 = vadd.f32 0.0, %v3502
  %v3504 = vpop.f32.mrf.mxu0
  %v3505 = vadd.f32 0.0, %v3504
  %v3506 = vpop.f32.mrf.mxu0
  %v3507 = vadd.f32 0.0, %v3506
  %v3508 = vpop.f32.mrf.mxu0
  %v3509 = vadd.f32 0.0, %v3508
  %3510 = vdwg.mxu0
  %3511 = vmatprep.subr.bf16.mxu0 0
  %3512 = vmatpush1.bf16.msra.mxu0 0
  %3513 = vmatprep.subr.bf16.mxu0 0
  %3514 = vmatpush1.bf16.msra.mxu0 0
  %3515 = vmatprep.subr.bf16.mxu0 0
  %3516 = vmatpush1.bf16.msra.mxu0 0
  %3517 = vmatprep.subr.bf16.mxu0 0
  %3518 = vmatpush1.bf16.msra.mxu0 0
  %3519 = vmatprep.subr.bf16.mxu0 %v2825
  %3520 = vmatpush1.bf16.msra.mxu0 %v2822
  %3521 = vmatprep.subr.bf16.mxu0 %v2718
  %3522 = vmatpush1.bf16.msra.mxu0 %v2717
  %3523 = vmatprep.subr.bf16.mxu0 %v2702
  %3524 = vmatpush1.bf16.msra.mxu0 %v2701
  %3525 = vmatprep.subr.bf16.mxu0 %v2686
  %3526 = vmatpush1.bf16.msra.mxu0 %v2685
  %3527 = vmatprep.subr.bf16.mxu0 0
  %3528 = vmatpush2.bf16.msra.mxu0 0
  %3529 = vmatprep.subr.bf16.mxu0 0
  %3530 = vmatpush2.bf16.msra.mxu0 0
  %3531 = vmatprep.subr.bf16.mxu0 0
  %3532 = vmatpush2.bf16.msra.mxu0 0
  %3533 = vmatprep.subr.bf16.mxu0 0
  %3534 = vmatpush2.bf16.msra.mxu0 0
  %3535 = vmatprep.subr.bf16.mxu0 0
  %3536 = vmatpush2.bf16.msra.mxu0 0
  %3537 = vmatprep.subr.bf16.mxu0 0
  %3538 = vmatpush2.bf16.msra.mxu0 0
  %3539 = vmatprep.subr.bf16.mxu0 0
  %3540 = vmatpush2.bf16.msra.mxu0 0
  %3541 = vmatprep.subr.bf16.mxu0 0
  %3542 = vmatpush2.bf16.msra.mxu0 0
  %3543 = vmatprep.mubr.bf16.mxu0 0
  %3544 = vmatmul.mubr.bf16.gmra.mxu0 %v418
  %v3545 = vpop.f32.mrf.mxu0
  %v3546 = vadd.f32 0.0, %v3545
  %v3547 = vpop.f32.mrf.mxu0
  %v3548 = vadd.f32 0.0, %v3547
  %v3549 = vpop.f32.mrf.mxu0
  %v3550 = vadd.f32 0.0, %v3549
  %v3551 = vpop.f32.mrf.mxu0
  %v3552 = vadd.f32 0.0, %v3551
  %3553 = vmatprep.mubr.bf16.mxu0 0
  %3554 = vmatmul.mubr.bf16.gmra.mxu0 %v421
  %v3555 = vpop.f32.mrf.mxu0
  %v3556 = vadd.f32 0.0, %v3555
  %v3557 = vpop.f32.mrf.mxu0
  %v3558 = vadd.f32 0.0, %v3557
  %v3559 = vpop.f32.mrf.mxu0
  %v3560 = vadd.f32 0.0, %v3559
  %v3561 = vpop.f32.mrf.mxu0
  %v3562 = vadd.f32 0.0, %v3561
  %3563 = vmatprep.mubr.bf16.mxu0 0
  %3564 = vmatmul.mubr.bf16.gmra.mxu0 %v424
  %v3565 = vpop.f32.mrf.mxu0
  %v3566 = vadd.f32 0.0, %v3565
  %v3567 = vpop.f32.mrf.mxu0
  %v3568 = vadd.f32 0.0, %v3567
  %v3569 = vpop.f32.mrf.mxu0
  %v3570 = vadd.f32 0.0, %v3569
  %v3571 = vpop.f32.mrf.mxu0
  %v3572 = vadd.f32 0.0, %v3571
  %3573 = vmatprep.mubr.bf16.mxu0 0
  %3574 = vmatmul.mubr.bf16.gmra.mxu0 %v427
  %v3575 = vpop.f32.mrf.mxu0
  %v3576 = vadd.f32 0.0, %v3575
  %v3577 = vpop.f32.mrf.mxu0
  %v3578 = vadd.f32 0.0, %v3577
  %v3579 = vpop.f32.mrf.mxu0
  %v3580 = vadd.f32 0.0, %v3579
  %v3581 = vpop.f32.mrf.mxu0
  %v3582 = vadd.f32 0.0, %v3581
  %3583 = vmatprep.mubr.bf16.mxu0 0
  %3584 = vmatmul.mubr.bf16.gmra.mxu0 %v430
  %v3585 = vpop.f32.mrf.mxu0
  %v3586 = vadd.f32 0.0, %v3585
  %v3587 = vpop.f32.mrf.mxu0
  %v3588 = vadd.f32 0.0, %v3587
  %v3589 = vpop.f32.mrf.mxu0
  %v3590 = vadd.f32 0.0, %v3589
  %v3591 = vpop.f32.mrf.mxu0
  %v3592 = vadd.f32 0.0, %v3591
  %3593 = vmatprep.mubr.bf16.mxu0 0
  %3594 = vmatmul.mubr.bf16.gmra.mxu0 %v433
  %v3595 = vpop.f32.mrf.mxu0
  %v3596 = vadd.f32 0.0, %v3595
  %v3597 = vpop.f32.mrf.mxu0
  %v3598 = vadd.f32 0.0, %v3597
  %v3599 = vpop.f32.mrf.mxu0
  %v3600 = vadd.f32 0.0, %v3599
  %v3601 = vpop.f32.mrf.mxu0
  %v3602 = vadd.f32 0.0, %v3601
  %3603 = vmatprep.mubr.bf16.mxu0 0
  %3604 = vmatmul.mubr.bf16.gmra.mxu0 %v436
  %v3605 = vpop.f32.mrf.mxu0
  %v3606 = vadd.f32 0.0, %v3605
  %v3607 = vpop.f32.mrf.mxu0
  %v3608 = vadd.f32 0.0, %v3607
  %v3609 = vpop.f32.mrf.mxu0
  %v3610 = vadd.f32 0.0, %v3609
  %v3611 = vpop.f32.mrf.mxu0
  %v3612 = vadd.f32 0.0, %v3611
  %3613 = vmatprep.mubr.bf16.mxu0 0
  %3614 = vmatmul.mubr.bf16.gmra.mxu0 %v439
  %v3615 = vpop.f32.mrf.mxu0
  %v3616 = vadd.f32 0.0, %v3615
  %v3617 = vpop.f32.mrf.mxu0
  %v3618 = vadd.f32 0.0, %v3617
  %v3619 = vpop.f32.mrf.mxu0
  %v3620 = vadd.f32 0.0, %v3619
  %v3621 = vpop.f32.mrf.mxu0
  %v3622 = vadd.f32 0.0, %v3621
  %3623 = vdwg.mxu0
  %3624 = vmatprep.subr.bf16.mxu0 0
  %3625 = vmatpush1.bf16.msra.mxu0 0
  %3626 = vmatprep.subr.bf16.mxu0 0
  %3627 = vmatpush1.bf16.msra.mxu0 0
  %3628 = vmatprep.subr.bf16.mxu0 0
  %3629 = vmatpush1.bf16.msra.mxu0 0
  %3630 = vmatprep.subr.bf16.mxu0 0
  %3631 = vmatpush1.bf16.msra.mxu0 0
  %3632 = vmatprep.subr.bf16.mxu0 %v2831
  %3633 = vmatpush1.bf16.msra.mxu0 %v2828
  %3634 = vmatprep.subr.bf16.mxu0 %v2720
  %3635 = vmatpush1.bf16.msra.mxu0 %v2719
  %3636 = vmatprep.subr.bf16.mxu0 %v2704
  %3637 = vmatpush1.bf16.msra.mxu0 %v2703
  %3638 = vmatprep.subr.bf16.mxu0 %v2688
  %3639 = vmatpush1.bf16.msra.mxu0 %v2687
  %3640 = vmatprep.subr.bf16.mxu0 0
  %3641 = vmatpush2.bf16.msra.mxu0 0
  %3642 = vmatprep.subr.bf16.mxu0 0
  %3643 = vmatpush2.bf16.msra.mxu0 0
  %3644 = vmatprep.subr.bf16.mxu0 0
  %3645 = vmatpush2.bf16.msra.mxu0 0
  %3646 = vmatprep.subr.bf16.mxu0 0
  %3647 = vmatpush2.bf16.msra.mxu0 0
  %3648 = vmatprep.subr.bf16.mxu0 0
  %3649 = vmatpush2.bf16.msra.mxu0 0
  %3650 = vmatprep.subr.bf16.mxu0 0
  %3651 = vmatpush2.bf16.msra.mxu0 0
  %3652 = vmatprep.subr.bf16.mxu0 0
  %3653 = vmatpush2.bf16.msra.mxu0 0
  %3654 = vmatprep.subr.bf16.mxu0 0
  %3655 = vmatpush2.bf16.msra.mxu0 0
  %3656 = vmatprep.mubr.bf16.mxu0 0
  %3657 = vmatmul.mubr.bf16.gmra.mxu0 %v418
  %v3658 = vpop.f32.mrf.mxu0
  %v3659 = vadd.f32 0.0, %v3658
  %v3660 = vpop.f32.mrf.mxu0
  %v3661 = vadd.f32 0.0, %v3660
  %v3662 = vpop.f32.mrf.mxu0
  %v3663 = vadd.f32 0.0, %v3662
  %v3664 = vpop.f32.mrf.mxu0
  %v3665 = vadd.f32 0.0, %v3664
  %3666 = vmatprep.mubr.bf16.mxu0 0
  %3667 = vmatmul.mubr.bf16.gmra.mxu0 %v421
  %v3668 = vpop.f32.mrf.mxu0
  %v3669 = vadd.f32 0.0, %v3668
  %v3670 = vpop.f32.mrf.mxu0
  %v3671 = vadd.f32 0.0, %v3670
  %v3672 = vpop.f32.mrf.mxu0
  %v3673 = vadd.f32 0.0, %v3672
  %v3674 = vpop.f32.mrf.mxu0
  %v3675 = vadd.f32 0.0, %v3674
  %3676 = vmatprep.mubr.bf16.mxu0 0
  %3677 = vmatmul.mubr.bf16.gmra.mxu0 %v424
  %v3678 = vpop.f32.mrf.mxu0
  %v3679 = vadd.f32 0.0, %v3678
  %v3680 = vpop.f32.mrf.mxu0
  %v3681 = vadd.f32 0.0, %v3680
  %v3682 = vpop.f32.mrf.mxu0
  %v3683 = vadd.f32 0.0, %v3682
  %v3684 = vpop.f32.mrf.mxu0
  %v3685 = vadd.f32 0.0, %v3684
  %3686 = vmatprep.mubr.bf16.mxu0 0
  %3687 = vmatmul.mubr.bf16.gmra.mxu0 %v427
  %v3688 = vpop.f32.mrf.mxu0
  %v3689 = vadd.f32 0.0, %v3688
  %v3690 = vpop.f32.mrf.mxu0
  %v3691 = vadd.f32 0.0, %v3690
  %v3692 = vpop.f32.mrf.mxu0
  %v3693 = vadd.f32 0.0, %v3692
  %v3694 = vpop.f32.mrf.mxu0
  %v3695 = vadd.f32 0.0, %v3694
  %3696 = vmatprep.mubr.bf16.mxu0 0
  %3697 = vmatmul.mubr.bf16.gmra.mxu0 %v430
  %v3698 = vpop.f32.mrf.mxu0
  %v3699 = vadd.f32 0.0, %v3698
  %v3700 = vpop.f32.mrf.mxu0
  %v3701 = vadd.f32 0.0, %v3700
  %v3702 = vpop.f32.mrf.mxu0
  %v3703 = vadd.f32 0.0, %v3702
  %v3704 = vpop.f32.mrf.mxu0
  %v3705 = vadd.f32 0.0, %v3704
  %3706 = vmatprep.mubr.bf16.mxu0 0
  %3707 = vmatmul.mubr.bf16.gmra.mxu0 %v433
  %v3708 = vpop.f32.mrf.mxu0
  %v3709 = vadd.f32 0.0, %v3708
  %v3710 = vpop.f32.mrf.mxu0
  %v3711 = vadd.f32 0.0, %v3710
  %v3712 = vpop.f32.mrf.mxu0
  %v3713 = vadd.f32 0.0, %v3712
  %v3714 = vpop.f32.mrf.mxu0
  %v3715 = vadd.f32 0.0, %v3714
  %3716 = vmatprep.mubr.bf16.mxu0 0
  %3717 = vmatmul.mubr.bf16.gmra.mxu0 %v436
  %v3718 = vpop.f32.mrf.mxu0
  %v3719 = vadd.f32 0.0, %v3718
  %v3720 = vpop.f32.mrf.mxu0
  %v3721 = vadd.f32 0.0, %v3720
  %v3722 = vpop.f32.mrf.mxu0
  %v3723 = vadd.f32 0.0, %v3722
  %v3724 = vpop.f32.mrf.mxu0
  %v3725 = vadd.f32 0.0, %v3724
  %3726 = vmatprep.mubr.bf16.mxu0 0
  %3727 = vmatmul.mubr.bf16.gmra.mxu0 %v439
  %v3728 = vpop.f32.mrf.mxu0
  %v3729 = vadd.f32 0.0, %v3728
  %v3730 = vpop.f32.mrf.mxu0
  %v3731 = vadd.f32 0.0, %v3730
  %v3732 = vpop.f32.mrf.mxu0
  %v3733 = vadd.f32 0.0, %v3732
  %v3734 = vpop.f32.mrf.mxu0
  %v3735 = vadd.f32 0.0, %v3734
  %3736 = vdwg.mxu0
  %v3737 = vmax.f32 %v2868, 0.0
  %v3738 = vmax.f32 %v2870, 0.0
  %v3739 = vmax.f32 %v2981, 0.0
  %v3740 = vmax.f32 %v2983, 0.0
  %v3741 = vmax.f32 %v3094, 0.0
  %v3742 = vmax.f32 %v3096, 0.0
  %v3743 = vmax.f32 %v3207, 0.0
  %v3744 = vmax.f32 %v3209, 0.0
  %v3745 = vmax.f32 %v3320, 0.0
  %v3746 = vmax.f32 %v3322, 0.0
  %v3747 = vmax.f32 %v3433, 0.0
  %v3748 = vmax.f32 %v3435, 0.0
  %v3749 = vmax.f32 %v3546, 0.0
  %v3750 = vmax.f32 %v3548, 0.0
  %v3751 = vmax.f32 %v3659, 0.0
  %v3752 = vmax.f32 %v3661, 0.0
  %v3753 = vmax.f32 %v2872, 0.0
  %v3754 = vmax.f32 %v2874, 0.0
  %v3755 = vmax.f32 %v2985, 0.0
  %v3756 = vmax.f32 %v2987, 0.0
  %v3757 = vmax.f32 %v3098, 0.0
  %v3758 = vmax.f32 %v3100, 0.0
  %v3759 = vmax.f32 %v3211, 0.0
  %v3760 = vmax.f32 %v3213, 0.0
  %v3761 = vmax.f32 %v3324, 0.0
  %v3762 = vmax.f32 %v3326, 0.0
  %v3763 = vmax.f32 %v3437, 0.0
  %v3764 = vmax.f32 %v3439, 0.0
  %v3765 = vmax.f32 %v3550, 0.0
  %v3766 = vmax.f32 %v3552, 0.0
  %v3767 = vmax.f32 %v3663, 0.0
  %v3768 = vmax.f32 %v3665, 0.0
  %v3769 = vmax.f32 %v2878, 0.0
  %v3770 = vmax.f32 %v2880, 0.0
  %v3771 = vmax.f32 %v2991, 0.0
  %v3772 = vmax.f32 %v2993, 0.0
  %v3773 = vmax.f32 %v3104, 0.0
  %v3774 = vmax.f32 %v3106, 0.0
  %v3775 = vmax.f32 %v3217, 0.0
  %v3776 = vmax.f32 %v3219, 0.0
  %v3777 = vmax.f32 %v3330, 0.0
  %v3778 = vmax.f32 %v3332, 0.0
  %v3779 = vmax.f32 %v3443, 0.0
  %v3780 = vmax.f32 %v3445, 0.0
  %v3781 = vmax.f32 %v3556, 0.0
  %v3782 = vmax.f32 %v3558, 0.0
  %v3783 = vmax.f32 %v3669, 0.0
  %v3784 = vmax.f32 %v3671, 0.0
  %v3785 = vmax.f32 %v2882, 0.0
  %v3786 = vmax.f32 %v2884, 0.0
  %v3787 = vmax.f32 %v2995, 0.0
  %v3788 = vmax.f32 %v2997, 0.0
  %v3789 = vmax.f32 %v3108, 0.0
  %v3790 = vmax.f32 %v3110, 0.0
  %v3791 = vmax.f32 %v3221, 0.0
  %v3792 = vmax.f32 %v3223, 0.0
  %v3793 = vmax.f32 %v3334, 0.0
  %v3794 = vmax.f32 %v3336, 0.0
  %v3795 = vmax.f32 %v3447, 0.0
  %v3796 = vmax.f32 %v3449, 0.0
  %v3797 = vmax.f32 %v3560, 0.0
  %v3798 = vmax.f32 %v3562, 0.0
  %v3799 = vmax.f32 %v3673, 0.0
  %v3800 = vmax.f32 %v3675, 0.0
  %v3801 = vmax.f32 %v2888, 0.0
  %v3802 = vmax.f32 %v2890, 0.0
  %v3803 = vmax.f32 %v3001, 0.0
  %v3804 = vmax.f32 %v3003, 0.0
  %v3805 = vmax.f32 %v3114, 0.0
  %v3806 = vmax.f32 %v3116, 0.0
  %v3807 = vmax.f32 %v3227, 0.0
  %v3808 = vmax.f32 %v3229, 0.0
  %v3809 = vmax.f32 %v3340, 0.0
  %v3810 = vmax.f32 %v3342, 0.0
  %v3811 = vmax.f32 %v3453, 0.0
  %v3812 = vmax.f32 %v3455, 0.0
  %v3813 = vmax.f32 %v3566, 0.0
  %v3814 = vmax.f32 %v3568, 0.0
  %v3815 = vmax.f32 %v3679, 0.0
  %v3816 = vmax.f32 %v3681, 0.0
  %v3817 = vmax.f32 %v2892, 0.0
  %v3818 = vmax.f32 %v2894, 0.0
  %v3819 = vmax.f32 %v3005, 0.0
  %v3820 = vmax.f32 %v3007, 0.0
  %v3821 = vmax.f32 %v3118, 0.0
  %v3822 = vmax.f32 %v3120, 0.0
  %v3823 = vmax.f32 %v3231, 0.0
  %v3824 = vmax.f32 %v3233, 0.0
  %v3825 = vmax.f32 %v3344, 0.0
  %v3826 = vmax.f32 %v3346, 0.0
  %v3827 = vmax.f32 %v3457, 0.0
  %v3828 = vmax.f32 %v3459, 0.0
  %v3829 = vmax.f32 %v3570, 0.0
  %v3830 = vmax.f32 %v3572, 0.0
  %v3831 = vmax.f32 %v3683, 0.0
  %v3832 = vmax.f32 %v3685, 0.0
  %v3833 = vmax.f32 %v2898, 0.0
  %v3834 = vmax.f32 %v2900, 0.0
  %v3835 = vmax.f32 %v3011, 0.0
  %v3836 = vmax.f32 %v3013, 0.0
  %v3837 = vmax.f32 %v3124, 0.0
  %v3838 = vmax.f32 %v3126, 0.0
  %v3839 = vmax.f32 %v3237, 0.0
  %v3840 = vmax.f32 %v3239, 0.0
  %v3841 = vmax.f32 %v3350, 0.0
  %v3842 = vmax.f32 %v3352, 0.0
  %v3843 = vmax.f32 %v3463, 0.0
  %v3844 = vmax.f32 %v3465, 0.0
  %v3845 = vmax.f32 %v3576, 0.0
  %v3846 = vmax.f32 %v3578, 0.0
  %v3847 = vmax.f32 %v3689, 0.0
  %v3848 = vmax.f32 %v3691, 0.0
  %v3849 = vmax.f32 %v2902, 0.0
  %v3850 = vmax.f32 %v2904, 0.0
  %v3851 = vmax.f32 %v3015, 0.0
  %v3852 = vmax.f32 %v3017, 0.0
  %v3853 = vmax.f32 %v3128, 0.0
  %v3854 = vmax.f32 %v3130, 0.0
  %v3855 = vmax.f32 %v3241, 0.0
  %v3856 = vmax.f32 %v3243, 0.0
  %v3857 = vmax.f32 %v3354, 0.0
  %v3858 = vmax.f32 %v3356, 0.0
  %v3859 = vmax.f32 %v3467, 0.0
  %v3860 = vmax.f32 %v3469, 0.0
  %v3861 = vmax.f32 %v3580, 0.0
  %v3862 = vmax.f32 %v3582, 0.0
  %v3863 = vmax.f32 %v3693, 0.0
  %v3864 = vmax.f32 %v3695, 0.0
  %v3865 = vmax.f32 %v2908, 0.0
  %v3866 = vmax.f32 %v2910, 0.0
  %v3867 = vmax.f32 %v3021, 0.0
  %v3868 = vmax.f32 %v3023, 0.0
  %v3869 = vmax.f32 %v3134, 0.0
  %v3870 = vmax.f32 %v3136, 0.0
  %v3871 = vmax.f32 %v3247, 0.0
  %v3872 = vmax.f32 %v3249, 0.0
  %v3873 = vmax.f32 %v3360, 0.0
  %v3874 = vmax.f32 %v3362, 0.0
  %v3875 = vmax.f32 %v3473, 0.0
  %v3876 = vmax.f32 %v3475, 0.0
  %v3877 = vmax.f32 %v3586, 0.0
  %v3878 = vmax.f32 %v3588, 0.0
  %v3879 = vmax.f32 %v3699, 0.0
  %v3880 = vmax.f32 %v3701, 0.0
  %v3881 = vmax.f32 %v2912, 0.0
  %v3882 = vmax.f32 %v2914, 0.0
  %v3883 = vmax.f32 %v3025, 0.0
  %v3884 = vmax.f32 %v3027, 0.0
  %v3885 = vmax.f32 %v3138, 0.0
  %v3886 = vmax.f32 %v3140, 0.0
  %v3887 = vmax.f32 %v3251, 0.0
  %v3888 = vmax.f32 %v3253, 0.0
  %v3889 = vmax.f32 %v3364, 0.0
  %v3890 = vmax.f32 %v3366, 0.0
  %v3891 = vmax.f32 %v3477, 0.0
  %v3892 = vmax.f32 %v3479, 0.0
  %v3893 = vmax.f32 %v3590, 0.0
  %v3894 = vmax.f32 %v3592, 0.0
  %v3895 = vmax.f32 %v3703, 0.0
  %v3896 = vmax.f32 %v3705, 0.0
  %v3897 = vmax.f32 %v2918, 0.0
  %v3898 = vmax.f32 %v2920, 0.0
  %v3899 = vmax.f32 %v3031, 0.0
  %v3900 = vmax.f32 %v3033, 0.0
  %v3901 = vmax.f32 %v3144, 0.0
  %v3902 = vmax.f32 %v3146, 0.0
  %v3903 = vmax.f32 %v3257, 0.0
  %v3904 = vmax.f32 %v3259, 0.0
  %v3905 = vmax.f32 %v3370, 0.0
  %v3906 = vmax.f32 %v3372, 0.0
  %v3907 = vmax.f32 %v3483, 0.0
  %v3908 = vmax.f32 %v3485, 0.0
  %v3909 = vmax.f32 %v3596, 0.0
  %v3910 = vmax.f32 %v3598, 0.0
  %v3911 = vmax.f32 %v3709, 0.0
  %v3912 = vmax.f32 %v3711, 0.0
  %v3913 = vmax.f32 %v2922, 0.0
  %v3914 = vmax.f32 %v2924, 0.0
  %v3915 = vmax.f32 %v3035, 0.0
  %v3916 = vmax.f32 %v3037, 0.0
  %v3917 = vmax.f32 %v3148, 0.0
  %v3918 = vmax.f32 %v3150, 0.0
  %v3919 = vmax.f32 %v3261, 0.0
  %v3920 = vmax.f32 %v3263, 0.0
  %v3921 = vmax.f32 %v3374, 0.0
  %v3922 = vmax.f32 %v3376, 0.0
  %v3923 = vmax.f32 %v3487, 0.0
  %v3924 = vmax.f32 %v3489, 0.0
  %v3925 = vmax.f32 %v3600, 0.0
  %v3926 = vmax.f32 %v3602, 0.0
  %v3927 = vmax.f32 %v3713, 0.0
  %v3928 = vmax.f32 %v3715, 0.0
  %v3929 = vmax.f32 %v2928, 0.0
  %v3930 = vmax.f32 %v2930, 0.0
  %v3931 = vmax.f32 %v3041, 0.0
  %v3932 = vmax.f32 %v3043, 0.0
  %v3933 = vmax.f32 %v3154, 0.0
  %v3934 = vmax.f32 %v3156, 0.0
  %v3935 = vmax.f32 %v3267, 0.0
  %v3936 = vmax.f32 %v3269, 0.0
  %v3937 = vmax.f32 %v3380, 0.0
  %v3938 = vmax.f32 %v3382, 0.0
  %v3939 = vmax.f32 %v3493, 0.0
  %v3940 = vmax.f32 %v3495, 0.0
  %v3941 = vmax.f32 %v3606, 0.0
  %v3942 = vmax.f32 %v3608, 0.0
  %v3943 = vmax.f32 %v3719, 0.0
  %v3944 = vmax.f32 %v3721, 0.0
  %v3945 = vmax.f32 %v2932, 0.0
  %v3946 = vmax.f32 %v2934, 0.0
  %v3947 = vmax.f32 %v3045, 0.0
  %v3948 = vmax.f32 %v3047, 0.0
  %v3949 = vmax.f32 %v3158, 0.0
  %v3950 = vmax.f32 %v3160, 0.0
  %v3951 = vmax.f32 %v3271, 0.0
  %v3952 = vmax.f32 %v3273, 0.0
  %v3953 = vmax.f32 %v3384, 0.0
  %v3954 = vmax.f32 %v3386, 0.0
  %v3955 = vmax.f32 %v3497, 0.0
  %v3956 = vmax.f32 %v3499, 0.0
  %v3957 = vmax.f32 %v3610, 0.0
  %v3958 = vmax.f32 %v3612, 0.0
  %v3959 = vmax.f32 %v3723, 0.0
  %v3960 = vmax.f32 %v3725, 0.0
  %v3961 = vmax.f32 %v2938, 0.0
  %v3962 = vmax.f32 %v2940, 0.0
  %v3963 = vmax.f32 %v3051, 0.0
  %v3964 = vmax.f32 %v3053, 0.0
  %v3965 = vmax.f32 %v3164, 0.0
  %v3966 = vmax.f32 %v3166, 0.0
  %v3967 = vmax.f32 %v3277, 0.0
  %v3968 = vmax.f32 %v3279, 0.0
  %v3969 = vmax.f32 %v3390, 0.0
  %v3970 = vmax.f32 %v3392, 0.0
  %v3971 = vmax.f32 %v3503, 0.0
  %v3972 = vmax.f32 %v3505, 0.0
  %v3973 = vmax.f32 %v3616, 0.0
  %v3974 = vmax.f32 %v3618, 0.0
  %v3975 = vmax.f32 %v3729, 0.0
  %v3976 = vmax.f32 %v3731, 0.0
  %v3977 = vmax.f32 %v2942, 0.0
  %v3978 = vmax.f32 %v2944, 0.0
  %v3979 = vmax.f32 %v3055, 0.0
  %v3980 = vmax.f32 %v3057, 0.0
  %v3981 = vmax.f32 %v3168, 0.0
  %v3982 = vmax.f32 %v3170, 0.0
  %v3983 = vmax.f32 %v3281, 0.0
  %v3984 = vmax.f32 %v3283, 0.0
  %v3985 = vmax.f32 %v3394, 0.0
  %v3986 = vmax.f32 %v3396, 0.0
  %v3987 = vmax.f32 %v3507, 0.0
  %v3988 = vmax.f32 %v3509, 0.0
  %v3989 = vmax.f32 %v3620, 0.0
  %v3990 = vmax.f32 %v3622, 0.0
  %v3991 = vmax.f32 %v3733, 0.0
  %v3992 = vmax.f32 %v3735, 0.0
  %v3993 = vpack.c.bf16 %v3753, %v3737
  %v3994 = vpack.c.bf16 %v3754, %v3738
  %v3995 = vpack.c.bf16 %v3755, %v3739
  %v3996 = vpack.c.bf16 %v3756, %v3740
  %v3997 = vpack.c.bf16 %v3757, %v3741
  %v3998 = vpack.c.bf16 %v3758, %v3742
  %v3999 = vpack.c.bf16 %v3759, %v3743
  %v4000 = vpack.c.bf16 %v3760, %v3744
  %v4001 = vpack.c.bf16 %v3761, %v3745
  %v4002 = vpack.c.bf16 %v3762, %v3746
  %v4003 = vpack.c.bf16 %v3763, %v3747
  %v4004 = vpack.c.bf16 %v3764, %v3748
  %v4005 = vpack.c.bf16 %v3765, %v3749
  %v4006 = vpack.c.bf16 %v3766, %v3750
  %v4007 = vpack.c.bf16 %v3767, %v3751
  %v4008 = vpack.c.bf16 %v3768, %v3752
  %v4009 = vpack.c.bf16 %v3785, %v3769
  %v4010 = vpack.c.bf16 %v3786, %v3770
  %v4011 = vpack.c.bf16 %v3787, %v3771
  %v4012 = vpack.c.bf16 %v3788, %v3772
  %v4013 = vpack.c.bf16 %v3789, %v3773
  %v4014 = vpack.c.bf16 %v3790, %v3774
  %v4015 = vpack.c.bf16 %v3791, %v3775
  %v4016 = vpack.c.bf16 %v3792, %v3776
  %v4017 = vpack.c.bf16 %v3793, %v3777
  %v4018 = vpack.c.bf16 %v3794, %v3778
  %v4019 = vpack.c.bf16 %v3795, %v3779
  %v4020 = vpack.c.bf16 %v3796, %v3780
  %v4021 = vpack.c.bf16 %v3797, %v3781
  %v4022 = vpack.c.bf16 %v3798, %v3782
  %v4023 = vpack.c.bf16 %v3799, %v3783
  %v4024 = vpack.c.bf16 %v3800, %v3784
  %v4025 = vpack.c.bf16 %v3817, %v3801
  %v4026 = vpack.c.bf16 %v3818, %v3802
  %v4027 = vpack.c.bf16 %v3819, %v3803
  %v4028 = vpack.c.bf16 %v3820, %v3804
  %v4029 = vpack.c.bf16 %v3821, %v3805
  %v4030 = vpack.c.bf16 %v3822, %v3806
  %v4031 = vpack.c.bf16 %v3823, %v3807
  %v4032 = vpack.c.bf16 %v3824, %v3808
  %v4033 = vpack.c.bf16 %v3825, %v3809
  %v4034 = vpack.c.bf16 %v3826, %v3810
  %v4035 = vpack.c.bf16 %v3827, %v3811
  %v4036 = vpack.c.bf16 %v3828, %v3812
  %v4037 = vpack.c.bf16 %v3829, %v3813
  %v4038 = vpack.c.bf16 %v3830, %v3814
  %v4039 = vpack.c.bf16 %v3831, %v3815
  %v4040 = vpack.c.bf16 %v3832, %v3816
  %v4041 = vpack.c.bf16 %v3849, %v3833
  %v4042 = vpack.c.bf16 %v3850, %v3834
  %v4043 = vpack.c.bf16 %v3851, %v3835
  %v4044 = vpack.c.bf16 %v3852, %v3836
  %v4045 = vpack.c.bf16 %v3853, %v3837
  %v4046 = vpack.c.bf16 %v3854, %v3838
  %v4047 = vpack.c.bf16 %v3855, %v3839
  %v4048 = vpack.c.bf16 %v3856, %v3840
  %v4049 = vpack.c.bf16 %v3857, %v3841
  %v4050 = vpack.c.bf16 %v3858, %v3842
  %v4051 = vpack.c.bf16 %v3859, %v3843
  %v4052 = vpack.c.bf16 %v3860, %v3844
  %v4053 = vpack.c.bf16 %v3861, %v3845
  %v4054 = vpack.c.bf16 %v3862, %v3846
  %v4055 = vpack.c.bf16 %v3863, %v3847
  %v4056 = vpack.c.bf16 %v3864, %v3848
  %v4057 = vpack.c.bf16 %v3881, %v3865
  %v4058 = vpack.c.bf16 %v3882, %v3866
  %v4059 = vpack.c.bf16 %v3883, %v3867
  %v4060 = vpack.c.bf16 %v3884, %v3868
  %v4061 = vpack.c.bf16 %v3885, %v3869
  %v4062 = vpack.c.bf16 %v3886, %v3870
  %v4063 = vpack.c.bf16 %v3887, %v3871
  %v4064 = vpack.c.bf16 %v3888, %v3872
  %v4065 = vpack.c.bf16 %v3889, %v3873
  %v4066 = vpack.c.bf16 %v3890, %v3874
  %v4067 = vpack.c.bf16 %v3891, %v3875
  %v4068 = vpack.c.bf16 %v3892, %v3876
  %v4069 = vpack.c.bf16 %v3893, %v3877
  %v4070 = vpack.c.bf16 %v3894, %v3878
  %v4071 = vpack.c.bf16 %v3895, %v3879
  %v4072 = vpack.c.bf16 %v3896, %v3880
  %v4073 = vpack.c.bf16 %v3913, %v3897
  %v4074 = vpack.c.bf16 %v3914, %v3898
  %v4075 = vpack.c.bf16 %v3915, %v3899
  %v4076 = vpack.c.bf16 %v3916, %v3900
  %v4077 = vpack.c.bf16 %v3917, %v3901
  %v4078 = vpack.c.bf16 %v3918, %v3902
  %v4079 = vpack.c.bf16 %v3919, %v3903
  %v4080 = vpack.c.bf16 %v3920, %v3904
  %v4081 = vpack.c.bf16 %v3921, %v3905
  %v4082 = vpack.c.bf16 %v3922, %v3906
  %v4083 = vpack.c.bf16 %v3923, %v3907
  %v4084 = vpack.c.bf16 %v3924, %v3908
  %v4085 = vpack.c.bf16 %v3925, %v3909
  %v4086 = vpack.c.bf16 %v3926, %v3910
  %v4087 = vpack.c.bf16 %v3927, %v3911
  %v4088 = vpack.c.bf16 %v3928, %v3912
  %v4089 = vpack.c.bf16 %v3945, %v3929
  %v4090 = vpack.c.bf16 %v3946, %v3930
  %v4091 = vpack.c.bf16 %v3947, %v3931
  %v4092 = vpack.c.bf16 %v3948, %v3932
  %v4093 = vpack.c.bf16 %v3949, %v3933
  %v4094 = vpack.c.bf16 %v3950, %v3934
  %v4095 = vpack.c.bf16 %v3951, %v3935
  %v4096 = vpack.c.bf16 %v3952, %v3936
  %v4097 = vpack.c.bf16 %v3953, %v3937
  %v4098 = vpack.c.bf16 %v3954, %v3938
  %v4099 = vpack.c.bf16 %v3955, %v3939
  %v4100 = vpack.c.bf16 %v3956, %v3940
  %v4101 = vpack.c.bf16 %v3957, %v3941
  %v4102 = vpack.c.bf16 %v3958, %v3942
  %v4103 = vpack.c.bf16 %v3959, %v3943
  %v4104 = vpack.c.bf16 %v3960, %v3944
  %v4105 = vpack.c.bf16 %v3977, %v3961
  %v4106 = vpack.c.bf16 %v3978, %v3962
  %v4107 = vpack.c.bf16 %v3979, %v3963
  %v4108 = vpack.c.bf16 %v3980, %v3964
  %v4109 = vpack.c.bf16 %v3981, %v3965
  %v4110 = vpack.c.bf16 %v3982, %v3966
  %v4111 = vpack.c.bf16 %v3983, %v3967
  %v4112 = vpack.c.bf16 %v3984, %v3968
  %v4113 = vpack.c.bf16 %v3985, %v3969
  %v4114 = vpack.c.bf16 %v3986, %v3970
  %v4115 = vpack.c.bf16 %v3987, %v3971
  %v4116 = vpack.c.bf16 %v3988, %v3972
  %v4117 = vpack.c.bf16 %v3989, %v3973
  %v4118 = vpack.c.bf16 %v3990, %v3974
  %v4119 = vpack.c.bf16 %v3991, %v3975
  %v4120 = vpack.c.bf16 %v3992, %v3976
  %v4121 = vmax.bf16 %v3993, %v4025
  %v4122 = vmax.bf16 %v3994, %v4026
  %v4123 = vmax.bf16 %v3995, %v4027
  %v4124 = vmax.bf16 %v3996, %v4028
  %v4125 = vmax.bf16 %v3997, %v4029
  %v4126 = vmax.bf16 %v3998, %v4030
  %v4127 = vmax.bf16 %v3999, %v4031
  %v4128 = vmax.bf16 %v4000, %v4032
  %v4129 = vmax.bf16 %v4001, %v4033
  %v4130 = vmax.bf16 %v4002, %v4034
  %v4131 = vmax.bf16 %v4003, %v4035
  %v4132 = vmax.bf16 %v4004, %v4036
  %v4133 = vmax.bf16 %v4005, %v4037
  %v4134 = vmax.bf16 %v4006, %v4038
  %v4135 = vmax.bf16 %v4007, %v4039
  %v4136 = vmax.bf16 %v4008, %v4040
  %v4137 = vmax.bf16 %v4009, %v4041
  %v4138 = vmax.bf16 %v4010, %v4042
  %v4139 = vmax.bf16 %v4011, %v4043
  %v4140 = vmax.bf16 %v4012, %v4044
  %v4141 = vmax.bf16 %v4013, %v4045
  %v4142 = vmax.bf16 %v4014, %v4046
  %v4143 = vmax.bf16 %v4015, %v4047
  %v4144 = vmax.bf16 %v4016, %v4048
  %v4145 = vmax.bf16 %v4017, %v4049
  %v4146 = vmax.bf16 %v4018, %v4050
  %v4147 = vmax.bf16 %v4019, %v4051
  %v4148 = vmax.bf16 %v4020, %v4052
  %v4149 = vmax.bf16 %v4021, %v4053
  %v4150 = vmax.bf16 %v4022, %v4054
  %v4151 = vmax.bf16 %v4023, %v4055
  %v4152 = vmax.bf16 %v4024, %v4056
  %v4153 = vmax.bf16 %v4025, %v4057
  %v4154 = vmax.bf16 %v4026, %v4058
  %v4155 = vmax.bf16 %v4027, %v4059
  %v4156 = vmax.bf16 %v4028, %v4060
  %v4157 = vmax.bf16 %v4029, %v4061
  %v4158 = vmax.bf16 %v4030, %v4062
  %v4159 = vmax.bf16 %v4031, %v4063
  %v4160 = vmax.bf16 %v4032, %v4064
  %v4161 = vmax.bf16 %v4033, %v4065
  %v4162 = vmax.bf16 %v4034, %v4066
  %v4163 = vmax.bf16 %v4035, %v4067
  %v4164 = vmax.bf16 %v4036, %v4068
  %v4165 = vmax.bf16 %v4037, %v4069
  %v4166 = vmax.bf16 %v4038, %v4070
  %v4167 = vmax.bf16 %v4039, %v4071
  %v4168 = vmax.bf16 %v4040, %v4072
  %v4169 = vmax.bf16 %v4041, %v4073
  %v4170 = vmax.bf16 %v4042, %v4074
  %v4171 = vmax.bf16 %v4043, %v4075
  %v4172 = vmax.bf16 %v4044, %v4076
  %v4173 = vmax.bf16 %v4045, %v4077
  %v4174 = vmax.bf16 %v4046, %v4078
  %v4175 = vmax.bf16 %v4047, %v4079
  %v4176 = vmax.bf16 %v4048, %v4080
  %v4177 = vmax.bf16 %v4049, %v4081
  %v4178 = vmax.bf16 %v4050, %v4082
  %v4179 = vmax.bf16 %v4051, %v4083
  %v4180 = vmax.bf16 %v4052, %v4084
  %v4181 = vmax.bf16 %v4053, %v4085
  %v4182 = vmax.bf16 %v4054, %v4086
  %v4183 = vmax.bf16 %v4055, %v4087
  %v4184 = vmax.bf16 %v4056, %v4088
  %v4185 = vmax.bf16 %v4057, %v4089
  %v4186 = vmax.bf16 %v4058, %v4090
  %v4187 = vmax.bf16 %v4059, %v4091
  %v4188 = vmax.bf16 %v4060, %v4092
  %v4189 = vmax.bf16 %v4061, %v4093
  %v4190 = vmax.bf16 %v4062, %v4094
  %v4191 = vmax.bf16 %v4063, %v4095
  %v4192 = vmax.bf16 %v4064, %v4096
  %v4193 = vmax.bf16 %v4065, %v4097
  %v4194 = vmax.bf16 %v4066, %v4098
  %v4195 = vmax.bf16 %v4067, %v4099
  %v4196 = vmax.bf16 %v4068, %v4100
  %v4197 = vmax.bf16 %v4069, %v4101
  %v4198 = vmax.bf16 %v4070, %v4102
  %v4199 = vmax.bf16 %v4071, %v4103
  %v4200 = vmax.bf16 %v4072, %v4104
  %v4201 = vmax.bf16 %v4073, %v4105
  %v4202 = vmax.bf16 %v4074, %v4106
  %v4203 = vmax.bf16 %v4075, %v4107
  %v4204 = vmax.bf16 %v4076, %v4108
  %v4205 = vmax.bf16 %v4077, %v4109
  %v4206 = vmax.bf16 %v4078, %v4110
  %v4207 = vmax.bf16 %v4079, %v4111
  %v4208 = vmax.bf16 %v4080, %v4112
  %v4209 = vmax.bf16 %v4081, %v4113
  %v4210 = vmax.bf16 %v4082, %v4114
  %v4211 = vmax.bf16 %v4083, %v4115
  %v4212 = vmax.bf16 %v4084, %v4116
  %v4213 = vmax.bf16 %v4085, %v4117
  %v4214 = vmax.bf16 %v4086, %v4118
  %v4215 = vmax.bf16 %v4087, %v4119
  %v4216 = vmax.bf16 %v4088, %v4120
  %4313 = vrot.lane.b32.xlu0 %v4121, 127
  %v4314 = vpop.permute.xlu0 %4313
  %4315 = vrot.lane.b32.xlu0 %v4122, 127
  %v4316 = vpop.permute.xlu0 %4315
  %4317 = vrot.lane.b32.xlu0 %v4123, 127
  %v4318 = vpop.permute.xlu0 %4317
  %4319 = vrot.lane.b32.xlu0 %v4124, 127
  %v4320 = vpop.permute.xlu0 %4319
  %4321 = vrot.lane.b32.xlu0 %v4125, 127
  %v4322 = vpop.permute.xlu0 %4321
  %4323 = vrot.lane.b32.xlu0 %v4126, 127
  %v4324 = vpop.permute.xlu0 %4323
  %4325 = vrot.lane.b32.xlu0 %v4127, 127
  %v4326 = vpop.permute.xlu0 %4325
  %4327 = vrot.lane.b32.xlu0 %v4128, 127
  %v4328 = vpop.permute.xlu0 %4327
  %4329 = vrot.lane.b32.xlu0 %v4129, 127
  %v4330 = vpop.permute.xlu0 %4329
  %4331 = vrot.lane.b32.xlu0 %v4130, 127
  %v4332 = vpop.permute.xlu0 %4331
  %4333 = vrot.lane.b32.xlu0 %v4131, 127
  %v4334 = vpop.permute.xlu0 %4333
  %4335 = vrot.lane.b32.xlu0 %v4132, 127
  %v4336 = vpop.permute.xlu0 %4335
  %4337 = vrot.lane.b32.xlu0 %v4133, 127
  %v4338 = vpop.permute.xlu0 %4337
  %4339 = vrot.lane.b32.xlu0 %v4134, 127
  %v4340 = vpop.permute.xlu0 %4339
  %4341 = vrot.lane.b32.xlu0 %v4135, 127
  %v4342 = vpop.permute.xlu0 %4341
  %4343 = vrot.lane.b32.xlu0 %v4136, 127
  %v4344 = vpop.permute.xlu0 %4343
  %4345 = vrot.lane.b32.xlu0 %v4137, 127
  %v4346 = vpop.permute.xlu0 %4345
  %4347 = vrot.lane.b32.xlu0 %v4138, 127
  %v4348 = vpop.permute.xlu0 %4347
  %4349 = vrot.lane.b32.xlu0 %v4139, 127
  %v4350 = vpop.permute.xlu0 %4349
  %4351 = vrot.lane.b32.xlu0 %v4140, 127
  %v4352 = vpop.permute.xlu0 %4351
  %4353 = vrot.lane.b32.xlu0 %v4141, 127
  %v4354 = vpop.permute.xlu0 %4353
  %4355 = vrot.lane.b32.xlu0 %v4142, 127
  %v4356 = vpop.permute.xlu0 %4355
  %4357 = vrot.lane.b32.xlu0 %v4143, 127
  %v4358 = vpop.permute.xlu0 %4357
  %4359 = vrot.lane.b32.xlu0 %v4144, 127
  %v4360 = vpop.permute.xlu0 %4359
  %4361 = vrot.lane.b32.xlu0 %v4145, 127
  %v4362 = vpop.permute.xlu0 %4361
  %4363 = vrot.lane.b32.xlu0 %v4146, 127
  %v4364 = vpop.permute.xlu0 %4363
  %4365 = vrot.lane.b32.xlu0 %v4147, 127
  %v4366 = vpop.permute.xlu0 %4365
  %4367 = vrot.lane.b32.xlu0 %v4148, 127
  %v4368 = vpop.permute.xlu0 %4367
  %4369 = vrot.lane.b32.xlu0 %v4149, 127
  %v4370 = vpop.permute.xlu0 %4369
  %4371 = vrot.lane.b32.xlu0 %v4150, 127
  %v4372 = vpop.permute.xlu0 %4371
  %4373 = vrot.lane.b32.xlu0 %v4151, 127
  %v4374 = vpop.permute.xlu0 %4373
  %4375 = vrot.lane.b32.xlu0 %v4152, 127
  %v4376 = vpop.permute.xlu0 %4375
  %4377 = vrot.lane.b32.xlu0 %v4153, 127
  %v4378 = vpop.permute.xlu0 %4377
  %4379 = vrot.lane.b32.xlu0 %v4154, 127
  %v4380 = vpop.permute.xlu0 %4379
  %4381 = vrot.lane.b32.xlu0 %v4155, 127
  %v4382 = vpop.permute.xlu0 %4381
  %4383 = vrot.lane.b32.xlu0 %v4156, 127
  %v4384 = vpop.permute.xlu0 %4383
  %4385 = vrot.lane.b32.xlu0 %v4157, 127
  %v4386 = vpop.permute.xlu0 %4385
  %4387 = vrot.lane.b32.xlu0 %v4158, 127
  %v4388 = vpop.permute.xlu0 %4387
  %4389 = vrot.lane.b32.xlu0 %v4159, 127
  %v4390 = vpop.permute.xlu0 %4389
  %4391 = vrot.lane.b32.xlu0 %v4160, 127
  %v4392 = vpop.permute.xlu0 %4391
  %4393 = vrot.lane.b32.xlu0 %v4161, 127
  %v4394 = vpop.permute.xlu0 %4393
  %4395 = vrot.lane.b32.xlu0 %v4162, 127
  %v4396 = vpop.permute.xlu0 %4395
  %4397 = vrot.lane.b32.xlu0 %v4163, 127
  %v4398 = vpop.permute.xlu0 %4397
  %4399 = vrot.lane.b32.xlu0 %v4164, 127
  %v4400 = vpop.permute.xlu0 %4399
  %4401 = vrot.lane.b32.xlu0 %v4165, 127
  %v4402 = vpop.permute.xlu0 %4401
  %4403 = vrot.lane.b32.xlu0 %v4166, 127
  %v4404 = vpop.permute.xlu0 %4403
  %4405 = vrot.lane.b32.xlu0 %v4167, 127
  %v4406 = vpop.permute.xlu0 %4405
  %4407 = vrot.lane.b32.xlu0 %v4168, 127
  %v4408 = vpop.permute.xlu0 %4407
  %4409 = vrot.lane.b32.xlu0 %v4169, 127
  %v4410 = vpop.permute.xlu0 %4409
  %4411 = vrot.lane.b32.xlu0 %v4170, 127
  %v4412 = vpop.permute.xlu0 %4411
  %4413 = vrot.lane.b32.xlu0 %v4171, 127
  %v4414 = vpop.permute.xlu0 %4413
  %4415 = vrot.lane.b32.xlu0 %v4172, 127
  %v4416 = vpop.permute.xlu0 %4415
  %4417 = vrot.lane.b32.xlu0 %v4173, 127
  %v4418 = vpop.permute.xlu0 %4417
  %4419 = vrot.lane.b32.xlu0 %v4174, 127
  %v4420 = vpop.permute.xlu0 %4419
  %4421 = vrot.lane.b32.xlu0 %v4175, 127
  %v4422 = vpop.permute.xlu0 %4421
  %4423 = vrot.lane.b32.xlu0 %v4176, 127
  %v4424 = vpop.permute.xlu0 %4423
  %4425 = vrot.lane.b32.xlu0 %v4177, 127
  %v4426 = vpop.permute.xlu0 %4425
  %4427 = vrot.lane.b32.xlu0 %v4178, 127
  %v4428 = vpop.permute.xlu0 %4427
  %4429 = vrot.lane.b32.xlu0 %v4179, 127
  %v4430 = vpop.permute.xlu0 %4429
  %4431 = vrot.lane.b32.xlu0 %v4180, 127
  %v4432 = vpop.permute.xlu0 %4431
  %4433 = vrot.lane.b32.xlu0 %v4181, 127
  %v4434 = vpop.permute.xlu0 %4433
  %4435 = vrot.lane.b32.xlu0 %v4182, 127
  %v4436 = vpop.permute.xlu0 %4435
  %4437 = vrot.lane.b32.xlu0 %v4183, 127
  %v4438 = vpop.permute.xlu0 %4437
  %4439 = vrot.lane.b32.xlu0 %v4184, 127
  %v4440 = vpop.permute.xlu0 %4439
  %4441 = vrot.lane.b32.xlu0 %v4185, 127
  %v4442 = vpop.permute.xlu0 %4441
  %4443 = vrot.lane.b32.xlu0 %v4186, 127
  %v4444 = vpop.permute.xlu0 %4443
  %4445 = vrot.lane.b32.xlu0 %v4187, 127
  %v4446 = vpop.permute.xlu0 %4445
  %4447 = vrot.lane.b32.xlu0 %v4188, 127
  %v4448 = vpop.permute.xlu0 %4447
  %4449 = vrot.lane.b32.xlu0 %v4189, 127
  %v4450 = vpop.permute.xlu0 %4449
  %4451 = vrot.lane.b32.xlu0 %v4190, 127
  %v4452 = vpop.permute.xlu0 %4451
  %4453 = vrot.lane.b32.xlu0 %v4191, 127
  %v4454 = vpop.permute.xlu0 %4453
  %4455 = vrot.lane.b32.xlu0 %v4192, 127
  %v4456 = vpop.permute.xlu0 %4455
  %4457 = vrot.lane.b32.xlu0 %v4193, 127
  %v4458 = vpop.permute.xlu0 %4457
  %4459 = vrot.lane.b32.xlu0 %v4194, 127
  %v4460 = vpop.permute.xlu0 %4459
  %4461 = vrot.lane.b32.xlu0 %v4195, 127
  %v4462 = vpop.permute.xlu0 %4461
  %4463 = vrot.lane.b32.xlu0 %v4196, 127
  %v4464 = vpop.permute.xlu0 %4463
  %4465 = vrot.lane.b32.xlu0 %v4197, 127
  %v4466 = vpop.permute.xlu0 %4465
  %4467 = vrot.lane.b32.xlu0 %v4198, 127
  %v4468 = vpop.permute.xlu0 %4467
  %4469 = vrot.lane.b32.xlu0 %v4199, 127
  %v4470 = vpop.permute.xlu0 %4469
  %4471 = vrot.lane.b32.xlu0 %v4200, 127
  %v4472 = vpop.permute.xlu0 %4471
  %4473 = vrot.lane.b32.xlu0 %v4201, 127
  %v4474 = vpop.permute.xlu0 %4473
  %4475 = vrot.lane.b32.xlu0 %v4202, 127
  %v4476 = vpop.permute.xlu0 %4475
  %4477 = vrot.lane.b32.xlu0 %v4203, 127
  %v4478 = vpop.permute.xlu0 %4477
  %4479 = vrot.lane.b32.xlu0 %v4204, 127
  %v4480 = vpop.permute.xlu0 %4479
  %4481 = vrot.lane.b32.xlu0 %v4205, 127
  %v4482 = vpop.permute.xlu0 %4481
  %4483 = vrot.lane.b32.xlu0 %v4206, 127
  %v4484 = vpop.permute.xlu0 %4483
  %4485 = vrot.lane.b32.xlu0 %v4207, 127
  %v4486 = vpop.permute.xlu0 %4485
  %4487 = vrot.lane.b32.xlu0 %v4208, 127
  %v4488 = vpop.permute.xlu0 %4487
  %4489 = vrot.lane.b32.xlu0 %v4209, 127
  %v4490 = vpop.permute.xlu0 %4489
  %4491 = vrot.lane.b32.xlu0 %v4210, 127
  %v4492 = vpop.permute.xlu0 %4491
  %4493 = vrot.lane.b32.xlu0 %v4211, 127
  %v4494 = vpop.permute.xlu0 %4493
  %4495 = vrot.lane.b32.xlu0 %v4212, 127
  %v4496 = vpop.permute.xlu0 %4495
  %4497 = vrot.lane.b32.xlu0 %v4213, 127
  %v4498 = vpop.permute.xlu0 %4497
  %4499 = vrot.lane.b32.xlu0 %v4214, 127
  %v4500 = vpop.permute.xlu0 %4499
  %4501 = vrot.lane.b32.xlu0 %v4215, 127
  %v4502 = vpop.permute.xlu0 %4501
  %4503 = vrot.lane.b32.xlu0 %v4216, 127
  %v4504 = vpop.permute.xlu0 %4503
  %v4505 = vsel %vm2165, %v4314, %v4316
  %v4506 = vsel %vm2165, %v4316, %v4318
  %v4507 = vsel %vm2165, %v4318, %v4320
  %v4508 = vsel %vm2165, %v4320, %v4322
  %v4509 = vsel %vm2165, %v4322, %v4324
  %v4510 = vsel %vm2165, %v4324, %v4326
  %v4511 = vsel %vm2165, %v4326, %v4328
  %v4512 = vsel %vm2165, %v4328, %v4330
  %v4513 = vsel %vm2165, %v4330, %v4332
  %v4514 = vsel %vm2165, %v4332, %v4334
  %v4515 = vsel %vm2165, %v4334, %v4336
  %v4516 = vsel %vm2165, %v4336, %v4338
  %v4517 = vsel %vm2165, %v4338, %v4340
  %v4518 = vsel %vm2165, %v4340, %v4342
  %v4519 = vsel %vm2165, %v4342, %v4344
  %v4520 = vsel %vm2165, %v4346, %v4348
  %v4521 = vsel %vm2165, %v4348, %v4350
  %v4522 = vsel %vm2165, %v4350, %v4352
  %v4523 = vsel %vm2165, %v4352, %v4354
  %v4524 = vsel %vm2165, %v4354, %v4356
  %v4525 = vsel %vm2165, %v4356, %v4358
  %v4526 = vsel %vm2165, %v4358, %v4360
  %v4527 = vsel %vm2165, %v4360, %v4362
  %v4528 = vsel %vm2165, %v4362, %v4364
  %v4529 = vsel %vm2165, %v4364, %v4366
  %v4530 = vsel %vm2165, %v4366, %v4368
  %v4531 = vsel %vm2165, %v4368, %v4370
  %v4532 = vsel %vm2165, %v4370, %v4372
  %v4533 = vsel %vm2165, %v4372, %v4374
  %v4534 = vsel %vm2165, %v4374, %v4376
  %v4535 = vsel %vm2165, %v4378, %v4380
  %v4536 = vsel %vm2165, %v4380, %v4382
  %v4537 = vsel %vm2165, %v4382, %v4384
  %v4538 = vsel %vm2165, %v4384, %v4386
  %v4539 = vsel %vm2165, %v4386, %v4388
  %v4540 = vsel %vm2165, %v4388, %v4390
  %v4541 = vsel %vm2165, %v4390, %v4392
  %v4542 = vsel %vm2165, %v4392, %v4394
  %v4543 = vsel %vm2165, %v4394, %v4396
  %v4544 = vsel %vm2165, %v4396, %v4398
  %v4545 = vsel %vm2165, %v4398, %v4400
  %v4546 = vsel %vm2165, %v4400, %v4402
  %v4547 = vsel %vm2165, %v4402, %v4404
  %v4548 = vsel %vm2165, %v4404, %v4406
  %v4549 = vsel %vm2165, %v4406, %v4408
  %v4550 = vsel %vm2165, %v4410, %v4412
  %v4551 = vsel %vm2165, %v4412, %v4414
  %v4552 = vsel %vm2165, %v4414, %v4416
  %v4553 = vsel %vm2165, %v4416, %v4418
  %v4554 = vsel %vm2165, %v4418, %v4420
  %v4555 = vsel %vm2165, %v4420, %v4422
  %v4556 = vsel %vm2165, %v4422, %v4424
  %v4557 = vsel %vm2165, %v4424, %v4426
  %v4558 = vsel %vm2165, %v4426, %v4428
  %v4559 = vsel %vm2165, %v4428, %v4430
  %v4560 = vsel %vm2165, %v4430, %v4432
  %v4561 = vsel %vm2165, %v4432, %v4434
  %v4562 = vsel %vm2165, %v4434, %v4436
  %v4563 = vsel %vm2165, %v4436, %v4438
  %v4564 = vsel %vm2165, %v4438, %v4440
  %v4565 = vsel %vm2165, %v4442, %v4444
  %v4566 = vsel %vm2165, %v4444, %v4446
  %v4567 = vsel %vm2165, %v4446, %v4448
  %v4568 = vsel %vm2165, %v4448, %v4450
  %v4569 = vsel %vm2165, %v4450, %v4452
  %v4570 = vsel %vm2165, %v4452, %v4454
  %v4571 = vsel %vm2165, %v4454, %v4456
  %v4572 = vsel %vm2165, %v4456, %v4458
  %v4573 = vsel %vm2165, %v4458, %v4460
  %v4574 = vsel %vm2165, %v4460, %v4462
  %v4575 = vsel %vm2165, %v4462, %v4464
  %v4576 = vsel %vm2165, %v4464, %v4466
  %v4577 = vsel %vm2165, %v4466, %v4468
  %v4578 = vsel %vm2165, %v4468, %v4470
  %v4579 = vsel %vm2165, %v4470, %v4472
  %v4580 = vsel %vm2165, %v4474, %v4476
  %v4581 = vsel %vm2165, %v4476, %v4478
  %v4582 = vsel %vm2165, %v4478, %v4480
  %v4583 = vsel %vm2165, %v4480, %v4482
  %v4584 = vsel %vm2165, %v4482, %v4484
  %v4585 = vsel %vm2165, %v4484, %v4486
  %v4586 = vsel %vm2165, %v4486, %v4488
  %v4587 = vsel %vm2165, %v4488, %v4490
  %v4588 = vsel %vm2165, %v4490, %v4492
  %v4589 = vsel %vm2165, %v4492, %v4494
  %v4590 = vsel %vm2165, %v4494, %v4496
  %v4591 = vsel %vm2165, %v4496, %v4498
  %v4592 = vsel %vm2165, %v4498, %v4500
  %v4593 = vsel %vm2165, %v4500, %v4502
  %v4594 = vsel %vm2165, %v4502, %v4504
  %v4691 = vmax.bf16 %v4121, %v4505
  %v4692 = vmax.bf16 %v4122, %v4506
  %v4693 = vmax.bf16 %v4123, %v4507
  %v4694 = vmax.bf16 %v4124, %v4508
  %v4695 = vmax.bf16 %v4125, %v4509
  %v4696 = vmax.bf16 %v4126, %v4510
  %v4697 = vmax.bf16 %v4127, %v4511
  %v4698 = vmax.bf16 %v4128, %v4512
  %v4699 = vmax.bf16 %v4129, %v4513
  %v4700 = vmax.bf16 %v4130, %v4514
  %v4701 = vmax.bf16 %v4131, %v4515
  %v4702 = vmax.bf16 %v4132, %v4516
  %v4703 = vmax.bf16 %v4133, %v4517
  %v4704 = vmax.bf16 %v4134, %v4518
  %v4705 = vmax.bf16 %v4135, %v4519
  %v4706 = vmax.bf16 %v4136, %v4344
  %v4707 = vmax.bf16 %v4137, %v4520
  %v4708 = vmax.bf16 %v4138, %v4521
  %v4709 = vmax.bf16 %v4139, %v4522
  %v4710 = vmax.bf16 %v4140, %v4523
  %v4711 = vmax.bf16 %v4141, %v4524
  %v4712 = vmax.bf16 %v4142, %v4525
  %v4713 = vmax.bf16 %v4143, %v4526
  %v4714 = vmax.bf16 %v4144, %v4527
  %v4715 = vmax.bf16 %v4145, %v4528
  %v4716 = vmax.bf16 %v4146, %v4529
  %v4717 = vmax.bf16 %v4147, %v4530
  %v4718 = vmax.bf16 %v4148, %v4531
  %v4719 = vmax.bf16 %v4149, %v4532
  %v4720 = vmax.bf16 %v4150, %v4533
  %v4721 = vmax.bf16 %v4151, %v4534
  %v4722 = vmax.bf16 %v4152, %v4376
  %v4723 = vmax.bf16 %v4153, %v4535
  %v4724 = vmax.bf16 %v4154, %v4536
  %v4725 = vmax.bf16 %v4155, %v4537
  %v4726 = vmax.bf16 %v4156, %v4538
  %v4727 = vmax.bf16 %v4157, %v4539
  %v4728 = vmax.bf16 %v4158, %v4540
  %v4729 = vmax.bf16 %v4159, %v4541
  %v4730 = vmax.bf16 %v4160, %v4542
  %v4731 = vmax.bf16 %v4161, %v4543
  %v4732 = vmax.bf16 %v4162, %v4544
  %v4733 = vmax.bf16 %v4163, %v4545
  %v4734 = vmax.bf16 %v4164, %v4546
  %v4735 = vmax.bf16 %v4165, %v4547
  %v4736 = vmax.bf16 %v4166, %v4548
  %v4737 = vmax.bf16 %v4167, %v4549
  %v4738 = vmax.bf16 %v4168, %v4408
  %v4739 = vmax.bf16 %v4169, %v4550
  %v4740 = vmax.bf16 %v4170, %v4551
  %v4741 = vmax.bf16 %v4171, %v4552
  %v4742 = vmax.bf16 %v4172, %v4553
  %v4743 = vmax.bf16 %v4173, %v4554
  %v4744 = vmax.bf16 %v4174, %v4555
  %v4745 = vmax.bf16 %v4175, %v4556
  %v4746 = vmax.bf16 %v4176, %v4557
  %v4747 = vmax.bf16 %v4177, %v4558
  %v4748 = vmax.bf16 %v4178, %v4559
  %v4749 = vmax.bf16 %v4179, %v4560
  %v4750 = vmax.bf16 %v4180, %v4561
  %v4751 = vmax.bf16 %v4181, %v4562
  %v4752 = vmax.bf16 %v4182, %v4563
  %v4753 = vmax.bf16 %v4183, %v4564
  %v4754 = vmax.bf16 %v4184, %v4440
  %v4755 = vmax.bf16 %v4185, %v4565
  %v4756 = vmax.bf16 %v4186, %v4566
  %v4757 = vmax.bf16 %v4187, %v4567
  %v4758 = vmax.bf16 %v4188, %v4568
  %v4759 = vmax.bf16 %v4189, %v4569
  %v4760 = vmax.bf16 %v4190, %v4570
  %v4761 = vmax.bf16 %v4191, %v4571
  %v4762 = vmax.bf16 %v4192, %v4572
  %v4763 = vmax.bf16 %v4193, %v4573
  %v4764 = vmax.bf16 %v4194, %v4574
  %v4765 = vmax.bf16 %v4195, %v4575
  %v4766 = vmax.bf16 %v4196, %v4576
  %v4767 = vmax.bf16 %v4197, %v4577
  %v4768 = vmax.bf16 %v4198, %v4578
  %v4769 = vmax.bf16 %v4199, %v4579
  %v4770 = vmax.bf16 %v4200, %v4472
  %v4771 = vmax.bf16 %v4201, %v4580
  %v4772 = vmax.bf16 %v4202, %v4581
  %v4773 = vmax.bf16 %v4203, %v4582
  %v4774 = vmax.bf16 %v4204, %v4583
  %v4775 = vmax.bf16 %v4205, %v4584
  %v4776 = vmax.bf16 %v4206, %v4585
  %v4777 = vmax.bf16 %v4207, %v4586
  %v4778 = vmax.bf16 %v4208, %v4587
  %v4779 = vmax.bf16 %v4209, %v4588
  %v4780 = vmax.bf16 %v4210, %v4589
  %v4781 = vmax.bf16 %v4211, %v4590
  %v4782 = vmax.bf16 %v4212, %v4591
  %v4783 = vmax.bf16 %v4213, %v4592
  %v4784 = vmax.bf16 %v4214, %v4593
  %v4785 = vmax.bf16 %v4215, %v4594
  %v4786 = vmax.bf16 %v4216, %v4504
  %v4787 = vld [vmem:[%s2] sm:$0xf]
  %v4788 = vld [vmem:[%s2 + $0x4] sm:$0xf]
  %v4789 = vld [vmem:[%s2 + $0x8] sm:$0xf]
  %v4790 = vld [vmem:[%s2 + $0xc] sm:$0xf]
  %v4791 = vld [vmem:[%s2 + $0x10] sm:$0xf]
  %v4792 = vld [vmem:[%s2 + $0x14] sm:$0xf]
  %v4793 = vld [vmem:[%s2 + $0x18] sm:$0xf]
  %v4794 = vld [vmem:[%s2 + $0x1c] sm:$0xf]
  %v4795 = vld [vmem:[%s2 + $0x20] sm:$0xf]
  %v4796 = vld [vmem:[%s2 + $0x24] sm:$0xf]
  %v4797 = vld [vmem:[%s2 + $0x28] sm:$0xf]
  %v4798 = vld [vmem:[%s2 + $0x2c] sm:$0xf]
  %v4799 = vld [vmem:[%s2 + $0x30] sm:$0xf]
  %v4800 = vld [vmem:[%s2 + $0x34] sm:$0xf]
  %v4801 = vld [vmem:[%s2 + $0x38] sm:$0xf]
  %v4802 = vld [vmem:[%s2 + $0x3c] sm:$0xf]
  %v4803 = vld [vmem:[%s2 + $0x40] sm:$0xf]
  %v4804 = vld [vmem:[%s2 + $0x44] sm:$0xf]
  %v4805 = vld [vmem:[%s2 + $0x48] sm:$0xf]
  %v4806 = vld [vmem:[%s2 + $0x4c] sm:$0xf]
  %v4807 = vld [vmem:[%s2 + $0x50] sm:$0xf]
  %v4808 = vld [vmem:[%s2 + $0x54] sm:$0xf]
  %v4809 = vld [vmem:[%s2 + $0x58] sm:$0xf]
  %v4810 = vld [vmem:[%s2 + $0x5c] sm:$0xf]
  %v4811 = vld [vmem:[%s2 + $0x60] sm:$0xf]
  %v4812 = vld [vmem:[%s2 + $0x64] sm:$0xf]
  %v4813 = vld [vmem:[%s2 + $0x68] sm:$0xf]
  %v4814 = vld [vmem:[%s2 + $0x6c] sm:$0xf]
  %v4815 = vld [vmem:[%s2 + $0x70] sm:$0xf]
  %v4816 = vld [vmem:[%s2 + $0x74] sm:$0xf]
  %v4817 = vld [vmem:[%s2 + $0x78] sm:$0xf]
  %v4818 = vld [vmem:[%s2 + $0x7c] sm:$0xf]
  %v4819 = vld [vmem:[%s2 + $0x80] sm:$0xf]
  %v4820 = vld [vmem:[%s2 + $0x84] sm:$0xf]
  %v4821 = vld [vmem:[%s2 + $0x88] sm:$0xf]
  %v4822 = vld [vmem:[%s2 + $0x8c] sm:$0xf]
  %v4823 = vld [vmem:[%s2 + $0x90] sm:$0xf]
  %v4824 = vld [vmem:[%s2 + $0x94] sm:$0xf]
  %v4825 = vld [vmem:[%s2 + $0x98] sm:$0xf]
  %v4826 = vld [vmem:[%s2 + $0x9c] sm:$0xf]
  %v4827 = vld [vmem:[%s2 + $0xa0] sm:$0xf]
  %v4828 = vld [vmem:[%s2 + $0xa4] sm:$0xf]
  %v4829 = vld [vmem:[%s2 + $0xa8] sm:$0xf]
  %v4830 = vld [vmem:[%s2 + $0xac] sm:$0xf]
  %v4831 = vld [vmem:[%s2 + $0xb0] sm:$0xf]
  %v4832 = vld [vmem:[%s2 + $0xb4] sm:$0xf]
  %v4833 = vld [vmem:[%s2 + $0xb8] sm:$0xf]
  %v4834 = vld [vmem:[%s2 + $0xbc] sm:$0xf]
  %v4835 = vld [vmem:[%s2 + $0xc0] sm:$0xf]
  %v4836 = vld [vmem:[%s2 + $0xc4] sm:$0xf]
  %v4837 = vld [vmem:[%s2 + $0xc8] sm:$0xf]
  %v4838 = vld [vmem:[%s2 + $0xcc] sm:$0xf]
  %v4839 = vld [vmem:[%s2 + $0xd0] sm:$0xf]
  %v4840 = vld [vmem:[%s2 + $0xd4] sm:$0xf]
  %v4841 = vld [vmem:[%s2 + $0xd8] sm:$0xf]
  %v4842 = vld [vmem:[%s2 + $0xdc] sm:$0xf]
  %v4843 = vld [vmem:[%s2 + $0xe0] sm:$0xf]
  %v4844 = vld [vmem:[%s2 + $0xe4] sm:$0xf]
  %v4845 = vld [vmem:[%s2 + $0xe8] sm:$0xf]
  %v4846 = vld [vmem:[%s2 + $0xec] sm:$0xf]
  %v4847 = vld [vmem:[%s2 + $0xf0] sm:$0xf]
  %v4848 = vld [vmem:[%s2 + $0xf4] sm:$0xf]
  %v4849 = vld [vmem:[%s2 + $0xf8] sm:$0xf]
  %v4850 = vld [vmem:[%s2 + $0xfc] sm:$0xf]
  %v4851 = vld [vmem:[%s2 + $0x100] sm:$0xf]
  %v4852 = vld [vmem:[%s2 + $0x104] sm:$0xf]
  %v4853 = vld [vmem:[%s2 + $0x108] sm:$0xf]
  %v4854 = vld [vmem:[%s2 + $0x10c] sm:$0xf]
  %v4855 = vld [vmem:[%s2 + $0x110] sm:$0xf]
  %v4856 = vld [vmem:[%s2 + $0x114] sm:$0xf]
  %v4857 = vld [vmem:[%s2 + $0x118] sm:$0xf]
  %v4858 = vld [vmem:[%s2 + $0x11c] sm:$0xf]
  %v4859 = vld [vmem:[%s2 + $0x120] sm:$0xf]
  %v4860 = vld [vmem:[%s2 + $0x124] sm:$0xf]
  %v4861 = vld [vmem:[%s2 + $0x128] sm:$0xf]
  %v4862 = vld [vmem:[%s2 + $0x12c] sm:$0xf]
  %v4863 = vld [vmem:[%s2 + $0x130] sm:$0xf]
  %v4864 = vld [vmem:[%s2 + $0x134] sm:$0xf]
  %v4865 = vld [vmem:[%s2 + $0x138] sm:$0xf]
  %v4866 = vld [vmem:[%s2 + $0x13c] sm:$0xf]
  %v4867 = vld [vmem:[%s2 + $0x140] sm:$0xf]
  %v4868 = vld [vmem:[%s2 + $0x144] sm:$0xf]
  %v4869 = vld [vmem:[%s2 + $0x148] sm:$0xf]
  %v4870 = vld [vmem:[%s2 + $0x14c] sm:$0xf]
  %v4871 = vld [vmem:[%s2 + $0x150] sm:$0xf]
  %v4872 = vld [vmem:[%s2 + $0x154] sm:$0xf]
  %v4873 = vld [vmem:[%s2 + $0x158] sm:$0xf]
  %v4874 = vld [vmem:[%s2 + $0x15c] sm:$0xf]
  %v4875 = vld [vmem:[%s2 + $0x160] sm:$0xf]
  %v4876 = vld [vmem:[%s2 + $0x164] sm:$0xf]
  %v4877 = vld [vmem:[%s2 + $0x168] sm:$0xf]
  %v4878 = vld [vmem:[%s2 + $0x16c] sm:$0xf]
  %v4879 = vld [vmem:[%s2 + $0x170] sm:$0xf]
  %v4880 = vld [vmem:[%s2 + $0x174] sm:$0xf]
  %v4881 = vld [vmem:[%s2 + $0x178] sm:$0xf]
  %v4882 = vld [vmem:[%s2 + $0x17c] sm:$0xf]
  %v4883 = vld [vmem:[%s2 + $0x180] sm:$0xf]
  %v4884 = vld [vmem:[%s2 + $0x184] sm:$0xf]
  %v4885 = vld [vmem:[%s2 + $0x188] sm:$0xf]
  %v4886 = vld [vmem:[%s2 + $0x18c] sm:$0xf]
  %v4887 = vld [vmem:[%s2 + $0x190] sm:$0xf]
  %v4888 = vld [vmem:[%s2 + $0x194] sm:$0xf]
  %v4889 = vld [vmem:[%s2 + $0x198] sm:$0xf]
  %v4890 = vld [vmem:[%s2 + $0x19c] sm:$0xf]
  %v4891 = vld [vmem:[%s2 + $0x1a0] sm:$0xf]
  %v4892 = vld [vmem:[%s2 + $0x1a4] sm:$0xf]
  %v4893 = vld [vmem:[%s2 + $0x1a8] sm:$0xf]
  %v4894 = vld [vmem:[%s2 + $0x1ac] sm:$0xf]
  %v4895 = vld [vmem:[%s2 + $0x1b0] sm:$0xf]
  %v4896 = vld [vmem:[%s2 + $0x1b4] sm:$0xf]
  %v4897 = vld [vmem:[%s2 + $0x1b8] sm:$0xf]
  %v4898 = vld [vmem:[%s2 + $0x1bc] sm:$0xf]
  %v4899 = vld [vmem:[%s2 + $0x1c0] sm:$0xf]
  %v4900 = vld [vmem:[%s2 + $0x1c4] sm:$0xf]
  %v4901 = vld [vmem:[%s2 + $0x1c8] sm:$0xf]
  %v4902 = vld [vmem:[%s2 + $0x1cc] sm:$0xf]
  %v4903 = vld [vmem:[%s2 + $0x1d0] sm:$0xf]
  %v4904 = vld [vmem:[%s2 + $0x1d4] sm:$0xf]
  %v4905 = vld [vmem:[%s2 + $0x1d8] sm:$0xf]
  %v4906 = vld [vmem:[%s2 + $0x1dc] sm:$0xf]
  %v4907 = vld [vmem:[%s2 + $0x1e0] sm:$0xf]
  %v4908 = vld [vmem:[%s2 + $0x1e4] sm:$0xf]
  %v4909 = vld [vmem:[%s2 + $0x1e8] sm:$0xf]
  %v4910 = vld [vmem:[%s2 + $0x1ec] sm:$0xf]
  %v4911 = vld [vmem:[%s2 + $0x1f0] sm:$0xf]
  %v4912 = vld [vmem:[%s2 + $0x1f4] sm:$0xf]
  %v4913 = vld [vmem:[%s2 + $0x1f8] sm:$0xf]
  %v4914 = vld [vmem:[%s2 + $0x1fc] sm:$0xf]
  %v4915 = vld [vmem:[%s2 + $0x200] sm:$0xf]
  %v4916 = vld [vmem:[%s2 + $0x204] sm:$0xf]
  %v4917 = vld [vmem:[%s2 + $0x208] sm:$0xf]
  %v4918 = vld [vmem:[%s2 + $0x20c] sm:$0xf]
  %v4919 = vld [vmem:[%s2 + $0x210] sm:$0xf]
  %v4920 = vld [vmem:[%s2 + $0x214] sm:$0xf]
  %v4921 = vld [vmem:[%s2 + $0x218] sm:$0xf]
  %v4922 = vld [vmem:[%s2 + $0x21c] sm:$0xf]
  %v4923 = vld [vmem:[%s2 + $0x220] sm:$0xf]
  %v4924 = vld [vmem:[%s2 + $0x224] sm:$0xf]
  %v4925 = vld [vmem:[%s2 + $0x228] sm:$0xf]
  %v4926 = vld [vmem:[%s2 + $0x22c] sm:$0xf]
  %v4927 = vld [vmem:[%s2 + $0x230] sm:$0xf]
  %v4928 = vld [vmem:[%s2 + $0x234] sm:$0xf]
  %v4929 = vld [vmem:[%s2 + $0x238] sm:$0xf]
  %v4930 = vld [vmem:[%s2 + $0x23c] sm:$0xf]
  %v4931 = vld [vmem:[%s2 + $0x240] sm:$0xf]
  %v4932 = vld [vmem:[%s2 + $0x244] sm:$0xf]
  %v4933 = vld [vmem:[%s2 + $0x248] sm:$0xf]
  %v4934 = vld [vmem:[%s2 + $0x24c] sm:$0xf]
  %v4935 = vld [vmem:[%s2 + $0x250] sm:$0xf]
  %v4936 = vld [vmem:[%s2 + $0x254] sm:$0xf]
  %v4937 = vld [vmem:[%s2 + $0x258] sm:$0xf]
  %v4938 = vld [vmem:[%s2 + $0x25c] sm:$0xf]
  %v4939 = vld [vmem:[%s2 + $0x260] sm:$0xf]
  %v4940 = vld [vmem:[%s2 + $0x264] sm:$0xf]
  %v4941 = vld [vmem:[%s2 + $0x268] sm:$0xf]
  %v4942 = vld [vmem:[%s2 + $0x26c] sm:$0xf]
  %v4943 = vld [vmem:[%s2 + $0x270] sm:$0xf]
  %v4944 = vld [vmem:[%s2 + $0x274] sm:$0xf]
  %v4945 = vld [vmem:[%s2 + $0x278] sm:$0xf]
  %v4946 = vld [vmem:[%s2 + $0x27c] sm:$0xf]
  %v4947 = vld [vmem:[%s2 + $0x280] sm:$0xf]
  %v4948 = vld [vmem:[%s2 + $0x284] sm:$0xf]
  %v4949 = vld [vmem:[%s2 + $0x288] sm:$0xf]
  %v4950 = vld [vmem:[%s2 + $0x28c] sm:$0xf]
  %v4951 = vld [vmem:[%s2 + $0x290] sm:$0xf]
  %v4952 = vld [vmem:[%s2 + $0x294] sm:$0xf]
  %v4953 = vld [vmem:[%s2 + $0x298] sm:$0xf]
  %v4954 = vld [vmem:[%s2 + $0x29c] sm:$0xf]
  %v4955 = vld [vmem:[%s2 + $0x2a0] sm:$0xf]
  %v4956 = vld [vmem:[%s2 + $0x2a4] sm:$0xf]
  %v4957 = vld [vmem:[%s2 + $0x2a8] sm:$0xf]
  %v4958 = vld [vmem:[%s2 + $0x2ac] sm:$0xf]
  %v4959 = vld [vmem:[%s2 + $0x2b0] sm:$0xf]
  %v4960 = vld [vmem:[%s2 + $0x2b4] sm:$0xf]
  %v4961 = vld [vmem:[%s2 + $0x2b8] sm:$0xf]
  %v4962 = vld [vmem:[%s2 + $0x2bc] sm:$0xf]
  %v4963 = vld [vmem:[%s2 + $0x2c0] sm:$0xf]
  %v4964 = vld [vmem:[%s2 + $0x2c4] sm:$0xf]
  %v4965 = vld [vmem:[%s2 + $0x2c8] sm:$0xf]
  %v4966 = vld [vmem:[%s2 + $0x2cc] sm:$0xf]
  %v4967 = vld [vmem:[%s2 + $0x2d0] sm:$0xf]
  %v4968 = vld [vmem:[%s2 + $0x2d4] sm:$0xf]
  %v4969 = vld [vmem:[%s2 + $0x2d8] sm:$0xf]
  %v4970 = vld [vmem:[%s2 + $0x2dc] sm:$0xf]
  %v4971 = vld [vmem:[%s2 + $0x2e0] sm:$0xf]
  %v4972 = vld [vmem:[%s2 + $0x2e4] sm:$0xf]
  %v4973 = vld [vmem:[%s2 + $0x2e8] sm:$0xf]
  %v4974 = vld [vmem:[%s2 + $0x2ec] sm:$0xf]
  %v4975 = vld [vmem:[%s2 + $0x2f0] sm:$0xf]
  %v4976 = vld [vmem:[%s2 + $0x2f4] sm:$0xf]
  %v4977 = vld [vmem:[%s2 + $0x2f8] sm:$0xf]
  %v4978 = vld [vmem:[%s2 + $0x2fc] sm:$0xf]
  %v4979 = vld [vmem:[%s2 + $0x300] sm:$0xf]
  %v4980 = vld [vmem:[%s2 + $0x304] sm:$0xf]
  %v4981 = vld [vmem:[%s2 + $0x308] sm:$0xf]
  %v4982 = vld [vmem:[%s2 + $0x30c] sm:$0xf]
  %v4983 = vld [vmem:[%s2 + $0x310] sm:$0xf]
  %v4984 = vld [vmem:[%s2 + $0x314] sm:$0xf]
  %v4985 = vld [vmem:[%s2 + $0x318] sm:$0xf]
  %v4986 = vld [vmem:[%s2 + $0x31c] sm:$0xf]
  %v4987 = vld [vmem:[%s2 + $0x320] sm:$0xf]
  %v4988 = vld [vmem:[%s2 + $0x324] sm:$0xf]
  %v4989 = vld [vmem:[%s2 + $0x328] sm:$0xf]
  %v4990 = vld [vmem:[%s2 + $0x32c] sm:$0xf]
  %v4991 = vld [vmem:[%s2 + $0x330] sm:$0xf]
  %v4992 = vld [vmem:[%s2 + $0x334] sm:$0xf]
  %v4993 = vld [vmem:[%s2 + $0x338] sm:$0xf]
  %v4994 = vld [vmem:[%s2 + $0x33c] sm:$0xf]
  %v4995 = vld [vmem:[%s2 + $0x340] sm:$0xf]
  %v4996 = vld [vmem:[%s2 + $0x344] sm:$0xf]
  %v4997 = vld [vmem:[%s2 + $0x348] sm:$0xf]
  %v4998 = vld [vmem:[%s2 + $0x34c] sm:$0xf]
  %v4999 = vld [vmem:[%s2 + $0x350] sm:$0xf]
  %v5000 = vld [vmem:[%s2 + $0x354] sm:$0xf]
  %v5001 = vld [vmem:[%s2 + $0x358] sm:$0xf]
  %v5002 = vld [vmem:[%s2 + $0x35c] sm:$0xf]
  %v5003 = vld [vmem:[%s2 + $0x360] sm:$0xf]
  %v5004 = vld [vmem:[%s2 + $0x364] sm:$0xf]
  %v5005 = vld [vmem:[%s2 + $0x368] sm:$0xf]
  %v5006 = vld [vmem:[%s2 + $0x36c] sm:$0xf]
  %v5007 = vld [vmem:[%s2 + $0x370] sm:$0xf]
  %v5008 = vld [vmem:[%s2 + $0x374] sm:$0xf]
  %v5009 = vld [vmem:[%s2 + $0x378] sm:$0xf]
  %v5010 = vld [vmem:[%s2 + $0x37c] sm:$0xf]
  %v5011 = vld [vmem:[%s2 + $0x380] sm:$0xf]
  %v5012 = vld [vmem:[%s2 + $0x384] sm:$0xf]
  %v5013 = vld [vmem:[%s2 + $0x388] sm:$0xf]
  %v5014 = vld [vmem:[%s2 + $0x38c] sm:$0xf]
  %v5015 = vld [vmem:[%s2 + $0x390] sm:$0xf]
  %v5016 = vld [vmem:[%s2 + $0x394] sm:$0xf]
  %v5017 = vld [vmem:[%s2 + $0x398] sm:$0xf]
  %v5018 = vld [vmem:[%s2 + $0x39c] sm:$0xf]
  %v5019 = vld [vmem:[%s2 + $0x3a0] sm:$0xf]
  %v5020 = vld [vmem:[%s2 + $0x3a4] sm:$0xf]
  %v5021 = vld [vmem:[%s2 + $0x3a8] sm:$0xf]
  %v5022 = vld [vmem:[%s2 + $0x3ac] sm:$0xf]
  %v5023 = vld [vmem:[%s2 + $0x3b0] sm:$0xf]
  %v5024 = vld [vmem:[%s2 + $0x3b4] sm:$0xf]
  %v5025 = vld [vmem:[%s2 + $0x3b8] sm:$0xf]
  %v5026 = vld [vmem:[%s2 + $0x3bc] sm:$0xf]
  %v5027 = vld [vmem:[%s2 + $0x3c0] sm:$0xf]
  %v5028 = vld [vmem:[%s2 + $0x3c4] sm:$0xf]
  %v5029 = vld [vmem:[%s2 + $0x3c8] sm:$0xf]
  %v5030 = vld [vmem:[%s2 + $0x3cc] sm:$0xf]
  %v5031 = vld [vmem:[%s2 + $0x3d0] sm:$0xf]
  %v5032 = vld [vmem:[%s2 + $0x3d4] sm:$0xf]
  %v5033 = vld [vmem:[%s2 + $0x3d8] sm:$0xf]
  %v5034 = vld [vmem:[%s2 + $0x3dc] sm:$0xf]
  %v5035 = vld [vmem:[%s3] sm:$0x1]
  %v5037 = vlaneseq
  %v5038 = vshrl.u32 %v5037, 7
  %v5039 = vsub.s32 0, %v5038
  %v5040 = vrot.slane %v5035, %v5039
  %v5290 = vunpack.c.l.b16 %v4787
  %v5291 = vunpack.c.l.b16 %v4788
  %v5292 = vunpack.c.l.b16 %v4789
  %v5293 = vunpack.c.l.b16 %v4790
  %v5294 = vunpack.c.l.b16 %v4791
  %v5295 = vunpack.c.l.b16 %v4792
  %v5296 = vunpack.c.l.b16 %v4793
  %v5297 = vunpack.c.l.b16 %v4794
  %v5298 = vunpack.c.l.b16 %v4795
  %v5299 = vunpack.c.l.b16 %v4796
  %v5300 = vunpack.c.l.b16 %v4797
  %v5301 = vunpack.c.l.b16 %v4798
  %v5302 = vunpack.c.l.b16 %v4799
  %v5303 = vunpack.c.l.b16 %v4800
  %v5304 = vunpack.c.l.b16 %v4801
  %v5305 = vunpack.c.l.b16 %v4802
  %v5306 = vunpack.c.l.b16 %v4803
  %v5307 = vunpack.c.l.b16 %v4804
  %v5308 = vunpack.c.l.b16 %v4805
  %v5309 = vunpack.c.l.b16 %v4806
  %v5310 = vunpack.c.l.b16 %v4807
  %v5311 = vunpack.c.l.b16 %v4808
  %v5312 = vunpack.c.l.b16 %v4809
  %v5313 = vunpack.c.l.b16 %v4810
  %v5314 = vunpack.c.l.b16 %v4811
  %v5315 = vunpack.c.l.b16 %v4812
  %v5316 = vunpack.c.l.b16 %v4813
  %v5317 = vunpack.c.l.b16 %v4814
  %v5318 = vunpack.c.l.b16 %v4815
  %v5319 = vunpack.c.l.b16 %v4816
  %v5320 = vunpack.c.l.b16 %v4817
  %v5321 = vunpack.c.l.b16 %v4818
  %v5322 = vunpack.c.l.b16 %v4819
  %v5323 = vunpack.c.l.b16 %v4820
  %v5324 = vunpack.c.l.b16 %v4821
  %v5325 = vunpack.c.l.b16 %v4822
  %v5326 = vunpack.c.l.b16 %v4823
  %v5327 = vunpack.c.l.b16 %v4824
  %v5328 = vunpack.c.l.b16 %v4825
  %v5329 = vunpack.c.l.b16 %v4826
  %v5330 = vunpack.c.l.b16 %v4827
  %v5331 = vunpack.c.l.b16 %v4828
  %v5332 = vunpack.c.l.b16 %v4829
  %v5333 = vunpack.c.l.b16 %v4830
  %v5334 = vunpack.c.l.b16 %v4831
  %v5335 = vunpack.c.l.b16 %v4832
  %v5336 = vunpack.c.l.b16 %v4833
  %v5337 = vunpack.c.l.b16 %v4834
  %v5338 = vunpack.c.l.b16 %v4835
  %v5339 = vunpack.c.l.b16 %v4836
  %v5340 = vunpack.c.l.b16 %v4837
  %v5341 = vunpack.c.l.b16 %v4838
  %v5342 = vunpack.c.l.b16 %v4839
  %v5343 = vunpack.c.l.b16 %v4840
  %v5344 = vunpack.c.l.b16 %v4841
  %v5345 = vunpack.c.l.b16 %v4842
  %v5346 = vunpack.c.l.b16 %v4843
  %v5347 = vunpack.c.l.b16 %v4844
  %v5348 = vunpack.c.l.b16 %v4845
  %v5349 = vunpack.c.l.b16 %v4846
  %v5350 = vunpack.c.l.b16 %v4847
  %v5351 = vunpack.c.l.b16 %v4848
  %v5352 = vunpack.c.l.b16 %v4849
  %v5353 = vunpack.c.l.b16 %v4850
  %v5354 = vunpack.c.l.b16 %v4851
  %v5355 = vunpack.c.l.b16 %v4852
  %v5356 = vunpack.c.l.b16 %v4853
  %v5357 = vunpack.c.l.b16 %v4854
  %v5358 = vunpack.c.l.b16 %v4855
  %v5359 = vunpack.c.l.b16 %v4856
  %v5360 = vunpack.c.l.b16 %v4857
  %v5361 = vunpack.c.l.b16 %v4858
  %v5362 = vunpack.c.l.b16 %v4859
  %v5363 = vunpack.c.l.b16 %v4860
  %v5364 = vunpack.c.l.b16 %v4861
  %v5365 = vunpack.c.l.b16 %v4862
  %v5366 = vunpack.c.l.b16 %v4863
  %v5367 = vunpack.c.l.b16 %v4864
  %v5368 = vunpack.c.l.b16 %v4865
  %v5369 = vunpack.c.l.b16 %v4866
  %v5370 = vunpack.c.l.b16 %v4867
  %v5371 = vunpack.c.l.b16 %v4868
  %v5372 = vunpack.c.l.b16 %v4869
  %v5373 = vunpack.c.l.b16 %v4870
  %v5374 = vunpack.c.l.b16 %v4871
  %v5375 = vunpack.c.l.b16 %v4872
  %v5376 = vunpack.c.l.b16 %v4873
  %v5377 = vunpack.c.l.b16 %v4874
  %v5378 = vunpack.c.l.b16 %v4875
  %v5379 = vunpack.c.l.b16 %v4876
  %v5380 = vunpack.c.l.b16 %v4877
  %v5381 = vunpack.c.l.b16 %v4878
  %v5382 = vunpack.c.l.b16 %v4879
  %v5383 = vunpack.c.l.b16 %v4880
  %v5384 = vunpack.c.l.b16 %v4881
  %v5385 = vunpack.c.l.b16 %v4882
  %v5386 = vunpack.c.l.b16 %v4883
  %v5387 = vunpack.c.l.b16 %v4884
  %v5388 = vunpack.c.l.b16 %v4885
  %v5389 = vunpack.c.l.b16 %v4886
  %v5390 = vunpack.c.l.b16 %v4887
  %v5391 = vunpack.c.l.b16 %v4888
  %v5392 = vunpack.c.l.b16 %v4889
  %v5393 = vunpack.c.l.b16 %v4890
  %v5394 = vunpack.c.l.b16 %v4891
  %v5395 = vunpack.c.l.b16 %v4892
  %v5396 = vunpack.c.l.b16 %v4893
  %v5397 = vunpack.c.l.b16 %v4894
  %v5398 = vunpack.c.l.b16 %v4895
  %v5399 = vunpack.c.l.b16 %v4896
  %v5400 = vunpack.c.l.b16 %v4897
  %v5401 = vunpack.c.l.b16 %v4898
  %v5402 = vunpack.c.l.b16 %v4899
  %v5403 = vunpack.c.l.b16 %v4900
  %v5404 = vunpack.c.l.b16 %v4901
  %v5405 = vunpack.c.l.b16 %v4902
  %v5406 = vunpack.c.l.b16 %v4903
  %v5407 = vunpack.c.l.b16 %v4904
  %v5408 = vunpack.c.l.b16 %v4905
  %v5409 = vunpack.c.l.b16 %v4906
  %v5410 = vunpack.c.l.b16 %v4907
  %v5411 = vunpack.c.l.b16 %v4908
  %v5412 = vunpack.c.l.b16 %v4909
  %v5413 = vunpack.c.l.b16 %v4910
  %v5414 = vunpack.c.l.b16 %v4911
  %v5415 = vunpack.c.l.b16 %v4912
  %v5416 = vunpack.c.l.b16 %v4913
  %v5417 = vunpack.c.l.b16 %v4914
  %v5418 = vunpack.c.l.b16 %v4915
  %v5419 = vunpack.c.l.b16 %v4916
  %v5420 = vunpack.c.l.b16 %v4917
  %v5421 = vunpack.c.l.b16 %v4918
  %v5422 = vunpack.c.l.b16 %v4919
  %v5423 = vunpack.c.l.b16 %v4920
  %v5424 = vunpack.c.l.b16 %v4921
  %v5425 = vunpack.c.l.b16 %v4922
  %v5426 = vunpack.c.l.b16 %v4923
  %v5427 = vunpack.c.l.b16 %v4924
  %v5428 = vunpack.c.l.b16 %v4925
  %v5429 = vunpack.c.l.b16 %v4926
  %v5430 = vunpack.c.l.b16 %v4927
  %v5431 = vunpack.c.l.b16 %v4928
  %v5432 = vunpack.c.l.b16 %v4929
  %v5433 = vunpack.c.l.b16 %v4930
  %v5434 = vunpack.c.l.b16 %v4931
  %v5435 = vunpack.c.l.b16 %v4932
  %v5436 = vunpack.c.l.b16 %v4933
  %v5437 = vunpack.c.l.b16 %v4934
  %v5438 = vunpack.c.l.b16 %v4935
  %v5439 = vunpack.c.l.b16 %v4936
  %v5440 = vunpack.c.l.b16 %v4937
  %v5441 = vunpack.c.l.b16 %v4938
  %v5442 = vunpack.c.l.b16 %v4939
  %v5443 = vunpack.c.l.b16 %v4940
  %v5444 = vunpack.c.l.b16 %v4941
  %v5445 = vunpack.c.l.b16 %v4942
  %v5446 = vunpack.c.l.b16 %v4943
  %v5447 = vunpack.c.l.b16 %v4944
  %v5448 = vunpack.c.l.b16 %v4945
  %v5449 = vunpack.c.l.b16 %v4946
  %v5450 = vunpack.c.l.b16 %v4947
  %v5451 = vunpack.c.l.b16 %v4948
  %v5452 = vunpack.c.l.b16 %v4949
  %v5453 = vunpack.c.l.b16 %v4950
  %v5454 = vunpack.c.l.b16 %v4951
  %v5455 = vunpack.c.l.b16 %v4952
  %v5456 = vunpack.c.l.b16 %v4953
  %v5457 = vunpack.c.l.b16 %v4954
  %v5458 = vunpack.c.l.b16 %v4955
  %v5459 = vunpack.c.l.b16 %v4956
  %v5460 = vunpack.c.l.b16 %v4957
  %v5461 = vunpack.c.l.b16 %v4958
  %v5462 = vunpack.c.l.b16 %v4959
  %v5463 = vunpack.c.l.b16 %v4960
  %v5464 = vunpack.c.l.b16 %v4961
  %v5465 = vunpack.c.l.b16 %v4962
  %v5466 = vunpack.c.l.b16 %v4963
  %v5467 = vunpack.c.l.b16 %v4964
  %v5468 = vunpack.c.l.b16 %v4965
  %v5469 = vunpack.c.l.b16 %v4966
  %v5470 = vunpack.c.l.b16 %v4967
  %v5471 = vunpack.c.l.b16 %v4968
  %v5472 = vunpack.c.l.b16 %v4969
  %v5473 = vunpack.c.l.b16 %v4970
  %v5474 = vunpack.c.l.b16 %v4971
  %v5475 = vunpack.c.l.b16 %v4972
  %v5476 = vunpack.c.l.b16 %v4973
  %v5477 = vunpack.c.l.b16 %v4974
  %v5478 = vunpack.c.l.b16 %v4975
  %v5479 = vunpack.c.l.b16 %v4976
  %v5480 = vunpack.c.l.b16 %v4977
  %v5481 = vunpack.c.l.b16 %v4978
  %v5482 = vunpack.c.l.b16 %v4979
  %v5483 = vunpack.c.l.b16 %v4980
  %v5484 = vunpack.c.l.b16 %v4981
  %v5485 = vunpack.c.l.b16 %v4982
  %v5486 = vunpack.c.l.b16 %v4983
  %v5487 = vunpack.c.l.b16 %v4984
  %v5488 = vunpack.c.l.b16 %v4985
  %v5489 = vunpack.c.l.b16 %v4986
  %v5490 = vunpack.c.l.b16 %v4987
  %v5491 = vunpack.c.l.b16 %v4988
  %v5492 = vunpack.c.l.b16 %v4989
  %v5493 = vunpack.c.l.b16 %v4990
  %v5494 = vunpack.c.l.b16 %v4991
  %v5495 = vunpack.c.l.b16 %v4992
  %v5496 = vunpack.c.l.b16 %v4993
  %v5497 = vunpack.c.l.b16 %v4994
  %v5498 = vunpack.c.l.b16 %v4995
  %v5499 = vunpack.c.l.b16 %v4996
  %v5500 = vunpack.c.l.b16 %v4997
  %v5501 = vunpack.c.l.b16 %v4998
  %v5502 = vunpack.c.l.b16 %v4999
  %v5503 = vunpack.c.l.b16 %v5000
  %v5504 = vunpack.c.l.b16 %v5001
  %v5505 = vunpack.c.l.b16 %v5002
  %v5506 = vunpack.c.l.b16 %v5003
  %v5507 = vunpack.c.l.b16 %v5004
  %v5508 = vunpack.c.l.b16 %v5005
  %v5509 = vunpack.c.l.b16 %v5006
  %v5510 = vunpack.c.l.b16 %v5007
  %v5511 = vunpack.c.l.b16 %v5008
  %v5512 = vunpack.c.l.b16 %v5009
  %v5513 = vunpack.c.l.b16 %v5010
  %v5514 = vunpack.c.l.b16 %v5011
  %v5515 = vunpack.c.l.b16 %v5012
  %v5516 = vunpack.c.l.b16 %v5013
  %v5517 = vunpack.c.l.b16 %v5014
  %v5518 = vunpack.c.l.b16 %v5015
  %v5519 = vunpack.c.l.b16 %v5016
  %v5520 = vunpack.c.l.b16 %v5017
  %v5521 = vunpack.c.l.b16 %v5018
  %v5522 = vunpack.c.l.b16 %v5019
  %v5523 = vunpack.c.l.b16 %v5020
  %v5524 = vunpack.c.l.b16 %v5021
  %v5525 = vunpack.c.l.b16 %v5022
  %v5526 = vunpack.c.l.b16 %v5023
  %v5527 = vunpack.c.l.b16 %v5024
  %v5528 = vunpack.c.l.b16 %v5025
  %v5529 = vunpack.c.l.b16 %v5026
  %v5530 = vunpack.c.l.b16 %v5027
  %v5531 = vunpack.c.l.b16 %v5028
  %v5532 = vunpack.c.l.b16 %v5029
  %v5533 = vunpack.c.l.b16 %v5030
  %v5534 = vunpack.c.l.b16 %v5031
  %v5535 = vunpack.c.l.b16 %v5032
  %v5536 = vunpack.c.l.b16 %v5033
  %v5537 = vunpack.c.l.b16 %v5034
  %v5538 = vpack.c.b16 %v5291, %v5290
  %v5539 = vpack.c.b16 %v5293, %v5292
  %v5540 = vpack.c.b16 %v5295, %v5294
  %v5541 = vpack.c.b16 %v5297, %v5296
  %v5542 = vpack.c.b16 %v5299, %v5298
  %v5543 = vpack.c.b16 %v5301, %v5300
  %v5544 = vpack.c.b16 %v5303, %v5302
  %v5545 = vpack.c.b16 %v5305, %v5304
  %v5546 = vpack.c.b16 %v5307, %v5306
  %v5547 = vpack.c.b16 %v5309, %v5308
  %v5548 = vpack.c.b16 %v5311, %v5310
  %v5549 = vpack.c.b16 %v5313, %v5312
  %v5550 = vpack.c.b16 %v5315, %v5314
  %v5551 = vpack.c.b16 %v5317, %v5316
  %v5552 = vpack.c.b16 %v5319, %v5318
  %v5553 = vpack.c.b16 %v5321, %v5320
  %v5554 = vpack.c.b16 %v5323, %v5322
  %v5555 = vpack.c.b16 %v5325, %v5324
  %v5556 = vpack.c.b16 %v5327, %v5326
  %v5557 = vpack.c.b16 %v5329, %v5328
  %v5558 = vpack.c.b16 %v5331, %v5330
  %v5559 = vpack.c.b16 %v5333, %v5332
  %v5560 = vpack.c.b16 %v5335, %v5334
  %v5561 = vpack.c.b16 %v5337, %v5336
  %v5562 = vpack.c.b16 %v5339, %v5338
  %v5563 = vpack.c.b16 %v5341, %v5340
  %v5564 = vpack.c.b16 %v5343, %v5342
  %v5565 = vpack.c.b16 %v5345, %v5344
  %v5566 = vpack.c.b16 %v5347, %v5346
  %v5567 = vpack.c.b16 %v5349, %v5348
  %v5568 = vpack.c.b16 %v5351, %v5350
  %v5569 = vpack.c.b16 %v5353, %v5352
  %v5570 = vpack.c.b16 %v5355, %v5354
  %v5571 = vpack.c.b16 %v5357, %v5356
  %v5572 = vpack.c.b16 %v5359, %v5358
  %v5573 = vpack.c.b16 %v5361, %v5360
  %v5574 = vpack.c.b16 %v5363, %v5362
  %v5575 = vpack.c.b16 %v5365, %v5364
  %v5576 = vpack.c.b16 %v5367, %v5366
  %v5577 = vpack.c.b16 %v5369, %v5368
  %v5578 = vpack.c.b16 %v5371, %v5370
  %v5579 = vpack.c.b16 %v5373, %v5372
  %v5580 = vpack.c.b16 %v5375, %v5374
  %v5581 = vpack.c.b16 %v5377, %v5376
  %v5582 = vpack.c.b16 %v5379, %v5378
  %v5583 = vpack.c.b16 %v5381, %v5380
  %v5584 = vpack.c.b16 %v5383, %v5382
  %v5585 = vpack.c.b16 %v5385, %v5384
  %v5586 = vpack.c.b16 %v5387, %v5386
  %v5587 = vpack.c.b16 %v5389, %v5388
  %v5588 = vpack.c.b16 %v5391, %v5390
  %v5589 = vpack.c.b16 %v5393, %v5392
  %v5590 = vpack.c.b16 %v5395, %v5394
  %v5591 = vpack.c.b16 %v5397, %v5396
  %v5592 = vpack.c.b16 %v5399, %v5398
  %v5593 = vpack.c.b16 %v5401, %v5400
  %v5594 = vpack.c.b16 %v5403, %v5402
  %v5595 = vpack.c.b16 %v5405, %v5404
  %v5596 = vpack.c.b16 %v5407, %v5406
  %v5597 = vpack.c.b16 %v5409, %v5408
  %v5598 = vpack.c.b16 %v5411, %v5410
  %v5599 = vpack.c.b16 %v5413, %v5412
  %v5600 = vpack.c.b16 %v5415, %v5414
  %v5601 = vpack.c.b16 %v5417, %v5416
  %v5602 = vpack.c.b16 %v5419, %v5418
  %v5603 = vpack.c.b16 %v5421, %v5420
  %v5604 = vpack.c.b16 %v5423, %v5422
  %v5605 = vpack.c.b16 %v5425, %v5424
  %v5606 = vpack.c.b16 %v5427, %v5426
  %v5607 = vpack.c.b16 %v5429, %v5428
  %v5608 = vpack.c.b16 %v5431, %v5430
  %v5609 = vpack.c.b16 %v5433, %v5432
  %v5610 = vpack.c.b16 %v5435, %v5434
  %v5611 = vpack.c.b16 %v5437, %v5436
  %v5612 = vpack.c.b16 %v5439, %v5438
  %v5613 = vpack.c.b16 %v5441, %v5440
  %v5614 = vpack.c.b16 %v5443, %v5442
  %v5615 = vpack.c.b16 %v5445, %v5444
  %v5616 = vpack.c.b16 %v5447, %v5446
  %v5617 = vpack.c.b16 %v5449, %v5448
  %v5618 = vpack.c.b16 %v5451, %v5450
  %v5619 = vpack.c.b16 %v5453, %v5452
  %v5620 = vpack.c.b16 %v5455, %v5454
  %v5621 = vpack.c.b16 %v5457, %v5456
  %v5622 = vpack.c.b16 %v5459, %v5458
  %v5623 = vpack.c.b16 %v5461, %v5460
  %v5624 = vpack.c.b16 %v5463, %v5462
  %v5625 = vpack.c.b16 %v5465, %v5464
  %v5626 = vpack.c.b16 %v5467, %v5466
  %v5627 = vpack.c.b16 %v5469, %v5468
  %v5628 = vpack.c.b16 %v5471, %v5470
  %v5629 = vpack.c.b16 %v5473, %v5472
  %v5630 = vpack.c.b16 %v5475, %v5474
  %v5631 = vpack.c.b16 %v5477, %v5476
  %v5632 = vpack.c.b16 %v5479, %v5478
  %v5633 = vpack.c.b16 %v5481, %v5480
  %v5634 = vpack.c.b16 %v5483, %v5482
  %v5635 = vpack.c.b16 %v5485, %v5484
  %v5636 = vpack.c.b16 %v5487, %v5486
  %v5637 = vpack.c.b16 %v5489, %v5488
  %v5638 = vpack.c.b16 %v5491, %v5490
  %v5639 = vpack.c.b16 %v5493, %v5492
  %v5640 = vpack.c.b16 %v5495, %v5494
  %v5641 = vpack.c.b16 %v5497, %v5496
  %v5642 = vpack.c.b16 %v5499, %v5498
  %v5643 = vpack.c.b16 %v5501, %v5500
  %v5644 = vpack.c.b16 %v5503, %v5502
  %v5645 = vpack.c.b16 %v5505, %v5504
  %v5646 = vpack.c.b16 %v5507, %v5506
  %v5647 = vpack.c.b16 %v5509, %v5508
  %v5648 = vpack.c.b16 %v5511, %v5510
  %v5649 = vpack.c.b16 %v5513, %v5512
  %v5650 = vpack.c.b16 %v5515, %v5514
  %v5651 = vpack.c.b16 %v5517, %v5516
  %v5652 = vpack.c.b16 %v5519, %v5518
  %v5653 = vpack.c.b16 %v5521, %v5520
  %v5654 = vpack.c.b16 %v5523, %v5522
  %v5655 = vpack.c.b16 %v5525, %v5524
  %v5656 = vpack.c.b16 %v5527, %v5526
  %v5657 = vpack.c.b16 %v5529, %v5528
  %v5658 = vpack.c.b16 %v5531, %v5530
  %v5659 = vpack.c.b16 %v5533, %v5532
  %v5660 = vpack.c.b16 %v5535, %v5534
  %v5661 = vpack.c.b16 %v5537, %v5536
  %vm5786 = vcmask 523264
  %v5788 = vsel %vm5786, %v2367, 0
  %v5791 = vsel %vm5786, %v2383, 0
  %v5794 = vsel %vm5786, %v2399, 0
  %v5797 = vsel %vm5786, %v2415, 0
  %v5800 = vsel %vm5786, %v2431, 0
  %v5803 = vsel %vm5786, %v2447, 0
  %v5806 = vsel %vm5786, %v4706, 0
  %v5809 = vsel %vm5786, %v4722, 0
  %v5812 = vsel %vm5786, %v4738, 0
  %v5815 = vsel %vm5786, %v4754, 0
  %v5818 = vsel %vm5786, %v4770, 0
  %v5821 = vsel %vm5786, %v4786, 0
  %5823 = vmatprep.subr.bf16.mxu0 0
  %5824 = vmatpush1.bf16.msra.mxu0 %v5545
  %5825 = vmatprep.subr.bf16.mxu0 0
  %5826 = vmatpush1.bf16.msra.mxu0 %v5544
  %5827 = vmatprep.subr.bf16.mxu0 0
  %5828 = vmatpush1.bf16.msra.mxu0 %v5543
  %5829 = vmatprep.subr.bf16.mxu0 0
  %5830 = vmatpush1.bf16.msra.mxu0 %v5542
  %5831 = vmatprep.subr.bf16.mxu0 0
  %5832 = vmatpush1.bf16.msra.mxu0 %v5541
  %5833 = vmatprep.subr.bf16.mxu0 0
  %5834 = vmatpush1.bf16.msra.mxu0 %v5540
  %5835 = vmatprep.subr.bf16.mxu0 0
  %5836 = vmatpush1.bf16.msra.mxu0 %v5539
  %5837 = vmatprep.subr.bf16.mxu0 0
  %5838 = vmatpush1.bf16.msra.mxu0 %v5538
  %5839 = vmatprep.subr.bf16.mxu0 0
  %5840 = vmatpush2.bf16.msra.mxu0 %v5553
  %5841 = vmatprep.subr.bf16.mxu0 0
  %5842 = vmatpush2.bf16.msra.mxu0 %v5552
  %5843 = vmatprep.subr.bf16.mxu0 0
  %5844 = vmatpush2.bf16.msra.mxu0 %v5551
  %5845 = vmatprep.subr.bf16.mxu0 0
  %5846 = vmatpush2.bf16.msra.mxu0 %v5550
  %5847 = vmatprep.subr.bf16.mxu0 0
  %5848 = vmatpush2.bf16.msra.mxu0 %v5549
  %5849 = vmatprep.subr.bf16.mxu0 0
  %5850 = vmatpush2.bf16.msra.mxu0 %v5548
  %5851 = vmatprep.subr.bf16.mxu0 0
  %5852 = vmatpush2.bf16.msra.mxu0 %v5547
  %5853 = vmatprep.subr.bf16.mxu0 0
  %5854 = vmatpush2.bf16.msra.mxu0 %v5546
  %5855 = vmatprep.mubr.bf16.mxu0 %v2353
  %5856 = vmatmul.mubr.bf16.gmra.mxu0 %v2352
  %v5857 = vpop.f32.mrf.mxu0
  %v5858 = vadd.f32 %v5040, %v5857
  %v5859 = vpop.f32.mrf.mxu0
  %v5860 = vpop.f32.mrf.mxu0
  %v5861 = vadd.f32 %v5040, %v5860
  %v5862 = vpop.f32.mrf.mxu0
  %5863 = vmatprep.mubr.bf16.mxu0 %v2369
  %5864 = vmatmul.mubr.bf16.gmra.mxu0 %v2368
  %v5865 = vpop.f32.mrf.mxu0
  %v5866 = vadd.f32 %v5040, %v5865
  %v5867 = vpop.f32.mrf.mxu0
  %v5868 = vpop.f32.mrf.mxu0
  %v5869 = vadd.f32 %v5040, %v5868
  %v5870 = vpop.f32.mrf.mxu0
  %5871 = vmatprep.mubr.bf16.mxu0 %v2385
  %5872 = vmatmul.mubr.bf16.gmra.mxu0 %v2384
  %v5873 = vpop.f32.mrf.mxu0
  %v5874 = vadd.f32 %v5040, %v5873
  %v5875 = vpop.f32.mrf.mxu0
  %v5876 = vpop.f32.mrf.mxu0
  %v5877 = vadd.f32 %v5040, %v5876
  %v5878 = vpop.f32.mrf.mxu0
  %5879 = vmatprep.mubr.bf16.mxu0 %v2401
  %5880 = vmatmul.mubr.bf16.gmra.mxu0 %v2400
  %v5881 = vpop.f32.mrf.mxu0
  %v5882 = vadd.f32 %v5040, %v5881
  %v5883 = vpop.f32.mrf.mxu0
  %v5884 = vpop.f32.mrf.mxu0
  %v5885 = vadd.f32 %v5040, %v5884
  %v5886 = vpop.f32.mrf.mxu0
  %5887 = vmatprep.mubr.bf16.mxu0 %v2417
  %5888 = vmatmul.mubr.bf16.gmra.mxu0 %v2416
  %v5889 = vpop.f32.mrf.mxu0
  %v5890 = vadd.f32 %v5040, %v5889
  %v5891 = vpop.f32.mrf.mxu0
  %v5892 = vpop.f32.mrf.mxu0
  %v5893 = vadd.f32 %v5040, %v5892
  %v5894 = vpop.f32.mrf.mxu0
  %5895 = vmatprep.mubr.bf16.mxu0 %v2433
  %5896 = vmatmul.mubr.bf16.gmra.mxu0 %v2432
  %v5897 = vpop.f32.mrf.mxu0
  %v5898 = vadd.f32 %v5040, %v5897
  %v5899 = vpop.f32.mrf.mxu0
  %v5900 = vpop.f32.mrf.mxu0
  %v5901 = vadd.f32 %v5040, %v5900
  %v5902 = vpop.f32.mrf.mxu0
  %5903 = vmatprep.mubr.bf16.mxu0 %v4692
  %5904 = vmatmul.mubr.bf16.gmra.mxu0 %v4691
  %v5905 = vpop.f32.mrf.mxu0
  %v5906 = vadd.f32 %v5040, %v5905
  %v5907 = vpop.f32.mrf.mxu0
  %v5908 = vpop.f32.mrf.mxu0
  %v5909 = vadd.f32 %v5040, %v5908
  %v5910 = vpop.f32.mrf.mxu0
  %5911 = vmatprep.mubr.bf16.mxu0 %v4708
  %5912 = vmatmul.mubr.bf16.gmra.mxu0 %v4707
  %v5913 = vpop.f32.mrf.mxu0
  %v5914 = vadd.f32 %v5040, %v5913
  %v5915 = vpop.f32.mrf.mxu0
  %v5916 = vpop.f32.mrf.mxu0
  %v5917 = vadd.f32 %v5040, %v5916
  %v5918 = vpop.f32.mrf.mxu0
  %5919 = vmatprep.mubr.bf16.mxu0 %v4724
  %5920 = vmatmul.mubr.bf16.gmra.mxu0 %v4723
  %v5921 = vpop.f32.mrf.mxu0
  %v5922 = vadd.f32 %v5040, %v5921
  %v5923 = vpop.f32.mrf.mxu0
  %v5924 = vpop.f32.mrf.mxu0
  %v5925 = vadd.f32 %v5040, %v5924
  %v5926 = vpop.f32.mrf.mxu0
  %5927 = vmatprep.mubr.bf16.mxu0 %v4740
  %5928 = vmatmul.mubr.bf16.gmra.mxu0 %v4739
  %v5929 = vpop.f32.mrf.mxu0
  %v5930 = vadd.f32 %v5040, %v5929
  %v5931 = vpop.f32.mrf.mxu0
  %v5932 = vpop.f32.mrf.mxu0
  %v5933 = vadd.f32 %v5040, %v5932
  %v5934 = vpop.f32.mrf.mxu0
  %5935 = vmatprep.mubr.bf16.mxu0 %v4756
  %5936 = vmatmul.mubr.bf16.gmra.mxu0 %v4755
  %v5937 = vpop.f32.mrf.mxu0
  %v5938 = vadd.f32 %v5040, %v5937
  %v5939 = vpop.f32.mrf.mxu0
  %v5940 = vpop.f32.mrf.mxu0
  %v5941 = vadd.f32 %v5040, %v5940
  %v5942 = vpop.f32.mrf.mxu0
  %5943 = vmatprep.mubr.bf16.mxu0 %v4772
  %5944 = vmatmul.mubr.bf16.gmra.mxu0 %v4771
  %v5945 = vpop.f32.mrf.mxu0
  %v5946 = vadd.f32 %v5040, %v5945
  %v5947 = vpop.f32.mrf.mxu0
  %v5948 = vpop.f32.mrf.mxu0
  %v5949 = vadd.f32 %v5040, %v5948
  %v5950 = vpop.f32.mrf.mxu0
  %5951 = vdwg.mxu0
  %5952 = vmatprep.subr.bf16.mxu0 0
  %5953 = vmatpush1.bf16.msra.mxu0 %v5561
  %5954 = vmatprep.subr.bf16.mxu0 0
  %5955 = vmatpush1.bf16.msra.mxu0 %v5560
  %5956 = vmatprep.subr.bf16.mxu0 0
  %5957 = vmatpush1.bf16.msra.mxu0 %v5559
  %5958 = vmatprep.subr.bf16.mxu0 0
  %5959 = vmatpush1.bf16.msra.mxu0 %v5558
  %5960 = vmatprep.subr.bf16.mxu0 0
  %5961 = vmatpush1.bf16.msra.mxu0 %v5557
  %5962 = vmatprep.subr.bf16.mxu0 0
  %5963 = vmatpush1.bf16.msra.mxu0 %v5556
  %5964 = vmatprep.subr.bf16.mxu0 0
  %5965 = vmatpush1.bf16.msra.mxu0 %v5555
  %5966 = vmatprep.subr.bf16.mxu0 0
  %5967 = vmatpush1.bf16.msra.mxu0 %v5554
  %5968 = vmatprep.subr.bf16.mxu0 0
  %5969 = vmatpush2.bf16.msra.mxu0 %v5569
  %5970 = vmatprep.subr.bf16.mxu0 0
  %5971 = vmatpush2.bf16.msra.mxu0 %v5568
  %5972 = vmatprep.subr.bf16.mxu0 0
  %5973 = vmatpush2.bf16.msra.mxu0 %v5567
  %5974 = vmatprep.subr.bf16.mxu0 0
  %5975 = vmatpush2.bf16.msra.mxu0 %v5566
  %5976 = vmatprep.subr.bf16.mxu0 0
  %5977 = vmatpush2.bf16.msra.mxu0 %v5565
  %5978 = vmatprep.subr.bf16.mxu0 0
  %5979 = vmatpush2.bf16.msra.mxu0 %v5564
  %5980 = vmatprep.subr.bf16.mxu0 0
  %5981 = vmatpush2.bf16.msra.mxu0 %v5563
  %5982 = vmatprep.subr.bf16.mxu0 0
  %5983 = vmatpush2.bf16.msra.mxu0 %v5562
  %5984 = vmatprep.mubr.bf16.mxu0 %v2355
  %5985 = vmatmul.mubr.bf16.gmra.mxu0 %v2354
  %v5986 = vpop.f32.mrf.mxu0
  %v5987 = vadd.f32 %v5858, %v5986
  %v5988 = vpop.f32.mrf.mxu0
  %v5989 = vpop.f32.mrf.mxu0
  %v5990 = vadd.f32 %v5861, %v5989
  %v5991 = vpop.f32.mrf.mxu0
  %5992 = vmatprep.mubr.bf16.mxu0 %v2371
  %5993 = vmatmul.mubr.bf16.gmra.mxu0 %v2370
  %v5994 = vpop.f32.mrf.mxu0
  %v5995 = vadd.f32 %v5866, %v5994
  %v5996 = vpop.f32.mrf.mxu0
  %v5997 = vpop.f32.mrf.mxu0
  %v5998 = vadd.f32 %v5869, %v5997
  %v5999 = vpop.f32.mrf.mxu0
  %6000 = vmatprep.mubr.bf16.mxu0 %v2387
  %6001 = vmatmul.mubr.bf16.gmra.mxu0 %v2386
  %v6002 = vpop.f32.mrf.mxu0
  %v6003 = vadd.f32 %v5874, %v6002
  %v6004 = vpop.f32.mrf.mxu0
  %v6005 = vpop.f32.mrf.mxu0
  %v6006 = vadd.f32 %v5877, %v6005
  %v6007 = vpop.f32.mrf.mxu0
  %6008 = vmatprep.mubr.bf16.mxu0 %v2403
  %6009 = vmatmul.mubr.bf16.gmra.mxu0 %v2402
  %v6010 = vpop.f32.mrf.mxu0
  %v6011 = vadd.f32 %v5882, %v6010
  %v6012 = vpop.f32.mrf.mxu0
  %v6013 = vpop.f32.mrf.mxu0
  %v6014 = vadd.f32 %v5885, %v6013
  %v6015 = vpop.f32.mrf.mxu0
  %6016 = vmatprep.mubr.bf16.mxu0 %v2419
  %6017 = vmatmul.mubr.bf16.gmra.mxu0 %v2418
  %v6018 = vpop.f32.mrf.mxu0
  %v6019 = vadd.f32 %v5890, %v6018
  %v6020 = vpop.f32.mrf.mxu0
  %v6021 = vpop.f32.mrf.mxu0
  %v6022 = vadd.f32 %v5893, %v6021
  %v6023 = vpop.f32.mrf.mxu0
  %6024 = vmatprep.mubr.bf16.mxu0 %v2435
  %6025 = vmatmul.mubr.bf16.gmra.mxu0 %v2434
  %v6026 = vpop.f32.mrf.mxu0
  %v6027 = vadd.f32 %v5898, %v6026
  %v6028 = vpop.f32.mrf.mxu0
  %v6029 = vpop.f32.mrf.mxu0
  %v6030 = vadd.f32 %v5901, %v6029
  %v6031 = vpop.f32.mrf.mxu0
  %6032 = vmatprep.mubr.bf16.mxu0 %v4694
  %6033 = vmatmul.mubr.bf16.gmra.mxu0 %v4693
  %v6034 = vpop.f32.mrf.mxu0
  %v6035 = vadd.f32 %v5906, %v6034
  %v6036 = vpop.f32.mrf.mxu0
  %v6037 = vpop.f32.mrf.mxu0
  %v6038 = vadd.f32 %v5909, %v6037
  %v6039 = vpop.f32.mrf.mxu0
  %6040 = vmatprep.mubr.bf16.mxu0 %v4710
  %6041 = vmatmul.mubr.bf16.gmra.mxu0 %v4709
  %v6042 = vpop.f32.mrf.mxu0
  %v6043 = vadd.f32 %v5914, %v6042
  %v6044 = vpop.f32.mrf.mxu0
  %v6045 = vpop.f32.mrf.mxu0
  %v6046 = vadd.f32 %v5917, %v6045
  %v6047 = vpop.f32.mrf.mxu0
  %6048 = vmatprep.mubr.bf16.mxu0 %v4726
  %6049 = vmatmul.mubr.bf16.gmra.mxu0 %v4725
  %v6050 = vpop.f32.mrf.mxu0
  %v6051 = vadd.f32 %v5922, %v6050
  %v6052 = vpop.f32.mrf.mxu0
  %v6053 = vpop.f32.mrf.mxu0
  %v6054 = vadd.f32 %v5925, %v6053
  %v6055 = vpop.f32.mrf.mxu0
  %6056 = vmatprep.mubr.bf16.mxu0 %v4742
  %6057 = vmatmul.mubr.bf16.gmra.mxu0 %v4741
  %v6058 = vpop.f32.mrf.mxu0
  %v6059 = vadd.f32 %v5930, %v6058
  %v6060 = vpop.f32.mrf.mxu0
  %v6061 = vpop.f32.mrf.mxu0
  %v6062 = vadd.f32 %v5933, %v6061
  %v6063 = vpop.f32.mrf.mxu0
  %6064 = vmatprep.mubr.bf16.mxu0 %v4758
  %6065 = vmatmul.mubr.bf16.gmra.mxu0 %v4757
  %v6066 = vpop.f32.mrf.mxu0
  %v6067 = vadd.f32 %v5938, %v6066
  %v6068 = vpop.f32.mrf.mxu0
  %v6069 = vpop.f32.mrf.mxu0
  %v6070 = vadd.f32 %v5941, %v6069
  %v6071 = vpop.f32.mrf.mxu0
  %6072 = vmatprep.mubr.bf16.mxu0 %v4774
  %6073 = vmatmul.mubr.bf16.gmra.mxu0 %v4773
  %v6074 = vpop.f32.mrf.mxu0
  %v6075 = vadd.f32 %v5946, %v6074
  %v6076 = vpop.f32.mrf.mxu0
  %v6077 = vpop.f32.mrf.mxu0
  %v6078 = vadd.f32 %v5949, %v6077
  %v6079 = vpop.f32.mrf.mxu0
  %6080 = vdwg.mxu0
  %6081 = vmatprep.subr.bf16.mxu0 0
  %6082 = vmatpush1.bf16.msra.mxu0 %v5577
  %6083 = vmatprep.subr.bf16.mxu0 0
  %6084 = vmatpush1.bf16.msra.mxu0 %v5576
  %6085 = vmatprep.subr.bf16.mxu0 0
  %6086 = vmatpush1.bf16.msra.mxu0 %v5575
  %6087 = vmatprep.subr.bf16.mxu0 0
  %6088 = vmatpush1.bf16.msra.mxu0 %v5574
  %6089 = vmatprep.subr.bf16.mxu0 0
  %6090 = vmatpush1.bf16.msra.mxu0 %v5573
  %6091 = vmatprep.subr.bf16.mxu0 0
  %6092 = vmatpush1.bf16.msra.mxu0 %v5572
  %6093 = vmatprep.subr.bf16.mxu0 0
  %6094 = vmatpush1.bf16.msra.mxu0 %v5571
  %6095 = vmatprep.subr.bf16.mxu0 0
  %6096 = vmatpush1.bf16.msra.mxu0 %v5570
  %6097 = vmatprep.subr.bf16.mxu0 0
  %6098 = vmatpush2.bf16.msra.mxu0 %v5585
  %6099 = vmatprep.subr.bf16.mxu0 0
  %6100 = vmatpush2.bf16.msra.mxu0 %v5584
  %6101 = vmatprep.subr.bf16.mxu0 0
  %6102 = vmatpush2.bf16.msra.mxu0 %v5583
  %6103 = vmatprep.subr.bf16.mxu0 0
  %6104 = vmatpush2.bf16.msra.mxu0 %v5582
  %6105 = vmatprep.subr.bf16.mxu0 0
  %6106 = vmatpush2.bf16.msra.mxu0 %v5581
  %6107 = vmatprep.subr.bf16.mxu0 0
  %6108 = vmatpush2.bf16.msra.mxu0 %v5580
  %6109 = vmatprep.subr.bf16.mxu0 0
  %6110 = vmatpush2.bf16.msra.mxu0 %v5579
  %6111 = vmatprep.subr.bf16.mxu0 0
  %6112 = vmatpush2.bf16.msra.mxu0 %v5578
  %6113 = vmatprep.mubr.bf16.mxu0 %v2357
  %6114 = vmatmul.mubr.bf16.gmra.mxu0 %v2356
  %v6115 = vpop.f32.mrf.mxu0
  %v6116 = vadd.f32 %v5987, %v6115
  %v6117 = vpop.f32.mrf.mxu0
  %v6118 = vpop.f32.mrf.mxu0
  %v6119 = vadd.f32 %v5990, %v6118
  %v6120 = vpop.f32.mrf.mxu0
  %6121 = vmatprep.mubr.bf16.mxu0 %v2373
  %6122 = vmatmul.mubr.bf16.gmra.mxu0 %v2372
  %v6123 = vpop.f32.mrf.mxu0
  %v6124 = vadd.f32 %v5995, %v6123
  %v6125 = vpop.f32.mrf.mxu0
  %v6126 = vpop.f32.mrf.mxu0
  %v6127 = vadd.f32 %v5998, %v6126
  %v6128 = vpop.f32.mrf.mxu0
  %6129 = vmatprep.mubr.bf16.mxu0 %v2389
  %6130 = vmatmul.mubr.bf16.gmra.mxu0 %v2388
  %v6131 = vpop.f32.mrf.mxu0
  %v6132 = vadd.f32 %v6003, %v6131
  %v6133 = vpop.f32.mrf.mxu0
  %v6134 = vpop.f32.mrf.mxu0
  %v6135 = vadd.f32 %v6006, %v6134
  %v6136 = vpop.f32.mrf.mxu0
  %6137 = vmatprep.mubr.bf16.mxu0 %v2405
  %6138 = vmatmul.mubr.bf16.gmra.mxu0 %v2404
  %v6139 = vpop.f32.mrf.mxu0
  %v6140 = vadd.f32 %v6011, %v6139
  %v6141 = vpop.f32.mrf.mxu0
  %v6142 = vpop.f32.mrf.mxu0
  %v6143 = vadd.f32 %v6014, %v6142
  %v6144 = vpop.f32.mrf.mxu0
  %6145 = vmatprep.mubr.bf16.mxu0 %v2421
  %6146 = vmatmul.mubr.bf16.gmra.mxu0 %v2420
  %v6147 = vpop.f32.mrf.mxu0
  %v6148 = vadd.f32 %v6019, %v6147
  %v6149 = vpop.f32.mrf.mxu0
  %v6150 = vpop.f32.mrf.mxu0
  %v6151 = vadd.f32 %v6022, %v6150
  %v6152 = vpop.f32.mrf.mxu0
  %6153 = vmatprep.mubr.bf16.mxu0 %v2437
  %6154 = vmatmul.mubr.bf16.gmra.mxu0 %v2436
  %v6155 = vpop.f32.mrf.mxu0
  %v6156 = vadd.f32 %v6027, %v6155
  %v6157 = vpop.f32.mrf.mxu0
  %v6158 = vpop.f32.mrf.mxu0
  %v6159 = vadd.f32 %v6030, %v6158
  %v6160 = vpop.f32.mrf.mxu0
  %6161 = vmatprep.mubr.bf16.mxu0 %v4696
  %6162 = vmatmul.mubr.bf16.gmra.mxu0 %v4695
  %v6163 = vpop.f32.mrf.mxu0
  %v6164 = vadd.f32 %v6035, %v6163
  %v6165 = vpop.f32.mrf.mxu0
  %v6166 = vpop.f32.mrf.mxu0
  %v6167 = vadd.f32 %v6038, %v6166
  %v6168 = vpop.f32.mrf.mxu0
  %6169 = vmatprep.mubr.bf16.mxu0 %v4712
  %6170 = vmatmul.mubr.bf16.gmra.mxu0 %v4711
  %v6171 = vpop.f32.mrf.mxu0
  %v6172 = vadd.f32 %v6043, %v6171
  %v6173 = vpop.f32.mrf.mxu0
  %v6174 = vpop.f32.mrf.mxu0
  %v6175 = vadd.f32 %v6046, %v6174
  %v6176 = vpop.f32.mrf.mxu0
  %6177 = vmatprep.mubr.bf16.mxu0 %v4728
  %6178 = vmatmul.mubr.bf16.gmra.mxu0 %v4727
  %v6179 = vpop.f32.mrf.mxu0
  %v6180 = vadd.f32 %v6051, %v6179
  %v6181 = vpop.f32.mrf.mxu0
  %v6182 = vpop.f32.mrf.mxu0
  %v6183 = vadd.f32 %v6054, %v6182
  %v6184 = vpop.f32.mrf.mxu0
  %6185 = vmatprep.mubr.bf16.mxu0 %v4744
  %6186 = vmatmul.mubr.bf16.gmra.mxu0 %v4743
  %v6187 = vpop.f32.mrf.mxu0
  %v6188 = vadd.f32 %v6059, %v6187
  %v6189 = vpop.f32.mrf.mxu0
  %v6190 = vpop.f32.mrf.mxu0
  %v6191 = vadd.f32 %v6062, %v6190
  %v6192 = vpop.f32.mrf.mxu0
  %6193 = vmatprep.mubr.bf16.mxu0 %v4760
  %6194 = vmatmul.mubr.bf16.gmra.mxu0 %v4759
  %v6195 = vpop.f32.mrf.mxu0
  %v6196 = vadd.f32 %v6067, %v6195
  %v6197 = vpop.f32.mrf.mxu0
  %v6198 = vpop.f32.mrf.mxu0
  %v6199 = vadd.f32 %v6070, %v6198
  %v6200 = vpop.f32.mrf.mxu0
  %6201 = vmatprep.mubr.bf16.mxu0 %v4776
  %6202 = vmatmul.mubr.bf16.gmra.mxu0 %v4775
  %v6203 = vpop.f32.mrf.mxu0
  %v6204 = vadd.f32 %v6075, %v6203
  %v6205 = vpop.f32.mrf.mxu0
  %v6206 = vpop.f32.mrf.mxu0
  %v6207 = vadd.f32 %v6078, %v6206
  %v6208 = vpop.f32.mrf.mxu0
  %6209 = vdwg.mxu0
  %6210 = vmatprep.subr.bf16.mxu0 0
  %6211 = vmatpush1.bf16.msra.mxu0 %v5593
  %6212 = vmatprep.subr.bf16.mxu0 0
  %6213 = vmatpush1.bf16.msra.mxu0 %v5592
  %6214 = vmatprep.subr.bf16.mxu0 0
  %6215 = vmatpush1.bf16.msra.mxu0 %v5591
  %6216 = vmatprep.subr.bf16.mxu0 0
  %6217 = vmatpush1.bf16.msra.mxu0 %v5590
  %6218 = vmatprep.subr.bf16.mxu0 0
  %6219 = vmatpush1.bf16.msra.mxu0 %v5589
  %6220 = vmatprep.subr.bf16.mxu0 0
  %6221 = vmatpush1.bf16.msra.mxu0 %v5588
  %6222 = vmatprep.subr.bf16.mxu0 0
  %6223 = vmatpush1.bf16.msra.mxu0 %v5587
  %6224 = vmatprep.subr.bf16.mxu0 0
  %6225 = vmatpush1.bf16.msra.mxu0 %v5586
  %6226 = vmatprep.subr.bf16.mxu0 0
  %6227 = vmatpush2.bf16.msra.mxu0 %v5601
  %6228 = vmatprep.subr.bf16.mxu0 0
  %6229 = vmatpush2.bf16.msra.mxu0 %v5600
  %6230 = vmatprep.subr.bf16.mxu0 0
  %6231 = vmatpush2.bf16.msra.mxu0 %v5599
  %6232 = vmatprep.subr.bf16.mxu0 0
  %6233 = vmatpush2.bf16.msra.mxu0 %v5598
  %6234 = vmatprep.subr.bf16.mxu0 0
  %6235 = vmatpush2.bf16.msra.mxu0 %v5597
  %6236 = vmatprep.subr.bf16.mxu0 0
  %6237 = vmatpush2.bf16.msra.mxu0 %v5596
  %6238 = vmatprep.subr.bf16.mxu0 0
  %6239 = vmatpush2.bf16.msra.mxu0 %v5595
  %6240 = vmatprep.subr.bf16.mxu0 0
  %6241 = vmatpush2.bf16.msra.mxu0 %v5594
  %6242 = vmatprep.mubr.bf16.mxu0 %v2359
  %6243 = vmatmul.mubr.bf16.gmra.mxu0 %v2358
  %v6244 = vpop.f32.mrf.mxu0
  %v6245 = vadd.f32 %v6116, %v6244
  %v6246 = vpop.f32.mrf.mxu0
  %v6247 = vpop.f32.mrf.mxu0
  %v6248 = vadd.f32 %v6119, %v6247
  %v6249 = vpop.f32.mrf.mxu0
  %6250 = vmatprep.mubr.bf16.mxu0 %v2375
  %6251 = vmatmul.mubr.bf16.gmra.mxu0 %v2374
  %v6252 = vpop.f32.mrf.mxu0
  %v6253 = vadd.f32 %v6124, %v6252
  %v6254 = vpop.f32.mrf.mxu0
  %v6255 = vpop.f32.mrf.mxu0
  %v6256 = vadd.f32 %v6127, %v6255
  %v6257 = vpop.f32.mrf.mxu0
  %6258 = vmatprep.mubr.bf16.mxu0 %v2391
  %6259 = vmatmul.mubr.bf16.gmra.mxu0 %v2390
  %v6260 = vpop.f32.mrf.mxu0
  %v6261 = vadd.f32 %v6132, %v6260
  %v6262 = vpop.f32.mrf.mxu0
  %v6263 = vpop.f32.mrf.mxu0
  %v6264 = vadd.f32 %v6135, %v6263
  %v6265 = vpop.f32.mrf.mxu0
  %6266 = vmatprep.mubr.bf16.mxu0 %v2407
  %6267 = vmatmul.mubr.bf16.gmra.mxu0 %v2406
  %v6268 = vpop.f32.mrf.mxu0
  %v6269 = vadd.f32 %v6140, %v6268
  %v6270 = vpop.f32.mrf.mxu0
  %v6271 = vpop.f32.mrf.mxu0
  %v6272 = vadd.f32 %v6143, %v6271
  %v6273 = vpop.f32.mrf.mxu0
  %6274 = vmatprep.mubr.bf16.mxu0 %v2423
  %6275 = vmatmul.mubr.bf16.gmra.mxu0 %v2422
  %v6276 = vpop.f32.mrf.mxu0
  %v6277 = vadd.f32 %v6148, %v6276
  %v6278 = vpop.f32.mrf.mxu0
  %v6279 = vpop.f32.mrf.mxu0
  %v6280 = vadd.f32 %v6151, %v6279
  %v6281 = vpop.f32.mrf.mxu0
  %6282 = vmatprep.mubr.bf16.mxu0 %v2439
  %6283 = vmatmul.mubr.bf16.gmra.mxu0 %v2438
  %v6284 = vpop.f32.mrf.mxu0
  %v6285 = vadd.f32 %v6156, %v6284
  %v6286 = vpop.f32.mrf.mxu0
  %v6287 = vpop.f32.mrf.mxu0
  %v6288 = vadd.f32 %v6159, %v6287
  %v6289 = vpop.f32.mrf.mxu0
  %6290 = vmatprep.mubr.bf16.mxu0 %v4698
  %6291 = vmatmul.mubr.bf16.gmra.mxu0 %v4697
  %v6292 = vpop.f32.mrf.mxu0
  %v6293 = vadd.f32 %v6164, %v6292
  %v6294 = vpop.f32.mrf.mxu0
  %v6295 = vpop.f32.mrf.mxu0
  %v6296 = vadd.f32 %v6167, %v6295
  %v6297 = vpop.f32.mrf.mxu0
  %6298 = vmatprep.mubr.bf16.mxu0 %v4714
  %6299 = vmatmul.mubr.bf16.gmra.mxu0 %v4713
  %v6300 = vpop.f32.mrf.mxu0
  %v6301 = vadd.f32 %v6172, %v6300
  %v6302 = vpop.f32.mrf.mxu0
  %v6303 = vpop.f32.mrf.mxu0
  %v6304 = vadd.f32 %v6175, %v6303
  %v6305 = vpop.f32.mrf.mxu0
  %6306 = vmatprep.mubr.bf16.mxu0 %v4730
  %6307 = vmatmul.mubr.bf16.gmra.mxu0 %v4729
  %v6308 = vpop.f32.mrf.mxu0
  %v6309 = vadd.f32 %v6180, %v6308
  %v6310 = vpop.f32.mrf.mxu0
  %v6311 = vpop.f32.mrf.mxu0
  %v6312 = vadd.f32 %v6183, %v6311
  %v6313 = vpop.f32.mrf.mxu0
  %6314 = vmatprep.mubr.bf16.mxu0 %v4746
  %6315 = vmatmul.mubr.bf16.gmra.mxu0 %v4745
  %v6316 = vpop.f32.mrf.mxu0
  %v6317 = vadd.f32 %v6188, %v6316
  %v6318 = vpop.f32.mrf.mxu0
  %v6319 = vpop.f32.mrf.mxu0
  %v6320 = vadd.f32 %v6191, %v6319
  %v6321 = vpop.f32.mrf.mxu0
  %6322 = vmatprep.mubr.bf16.mxu0 %v4762
  %6323 = vmatmul.mubr.bf16.gmra.mxu0 %v4761
  %v6324 = vpop.f32.mrf.mxu0
  %v6325 = vadd.f32 %v6196, %v6324
  %v6326 = vpop.f32.mrf.mxu0
  %v6327 = vpop.f32.mrf.mxu0
  %v6328 = vadd.f32 %v6199, %v6327
  %v6329 = vpop.f32.mrf.mxu0
  %6330 = vmatprep.mubr.bf16.mxu0 %v4778
  %6331 = vmatmul.mubr.bf16.gmra.mxu0 %v4777
  %v6332 = vpop.f32.mrf.mxu0
  %v6333 = vadd.f32 %v6204, %v6332
  %v6334 = vpop.f32.mrf.mxu0
  %v6335 = vpop.f32.mrf.mxu0
  %v6336 = vadd.f32 %v6207, %v6335
  %v6337 = vpop.f32.mrf.mxu0
  %6338 = vdwg.mxu0
  %6339 = vmatprep.subr.bf16.mxu0 0
  %6340 = vmatpush1.bf16.msra.mxu0 %v5609
  %6341 = vmatprep.subr.bf16.mxu0 0
  %6342 = vmatpush1.bf16.msra.mxu0 %v5608
  %6343 = vmatprep.subr.bf16.mxu0 0
  %6344 = vmatpush1.bf16.msra.mxu0 %v5607
  %6345 = vmatprep.subr.bf16.mxu0 0
  %6346 = vmatpush1.bf16.msra.mxu0 %v5606
  %6347 = vmatprep.subr.bf16.mxu0 0
  %6348 = vmatpush1.bf16.msra.mxu0 %v5605
  %6349 = vmatprep.subr.bf16.mxu0 0
  %6350 = vmatpush1.bf16.msra.mxu0 %v5604
  %6351 = vmatprep.subr.bf16.mxu0 0
  %6352 = vmatpush1.bf16.msra.mxu0 %v5603
  %6353 = vmatprep.subr.bf16.mxu0 0
  %6354 = vmatpush1.bf16.msra.mxu0 %v5602
  %6355 = vmatprep.subr.bf16.mxu0 0
  %6356 = vmatpush2.bf16.msra.mxu0 %v5617
  %6357 = vmatprep.subr.bf16.mxu0 0
  %6358 = vmatpush2.bf16.msra.mxu0 %v5616
  %6359 = vmatprep.subr.bf16.mxu0 0
  %6360 = vmatpush2.bf16.msra.mxu0 %v5615
  %6361 = vmatprep.subr.bf16.mxu0 0
  %6362 = vmatpush2.bf16.msra.mxu0 %v5614
  %6363 = vmatprep.subr.bf16.mxu0 0
  %6364 = vmatpush2.bf16.msra.mxu0 %v5613
  %6365 = vmatprep.subr.bf16.mxu0 0
  %6366 = vmatpush2.bf16.msra.mxu0 %v5612
  %6367 = vmatprep.subr.bf16.mxu0 0
  %6368 = vmatpush2.bf16.msra.mxu0 %v5611
  %6369 = vmatprep.subr.bf16.mxu0 0
  %6370 = vmatpush2.bf16.msra.mxu0 %v5610
  %6371 = vmatprep.mubr.bf16.mxu0 %v2361
  %6372 = vmatmul.mubr.bf16.gmra.mxu0 %v2360
  %v6373 = vpop.f32.mrf.mxu0
  %v6374 = vadd.f32 %v6245, %v6373
  %v6375 = vpop.f32.mrf.mxu0
  %v6376 = vpop.f32.mrf.mxu0
  %v6377 = vadd.f32 %v6248, %v6376
  %v6378 = vpop.f32.mrf.mxu0
  %6379 = vmatprep.mubr.bf16.mxu0 %v2377
  %6380 = vmatmul.mubr.bf16.gmra.mxu0 %v2376
  %v6381 = vpop.f32.mrf.mxu0
  %v6382 = vadd.f32 %v6253, %v6381
  %v6383 = vpop.f32.mrf.mxu0
  %v6384 = vpop.f32.mrf.mxu0
  %v6385 = vadd.f32 %v6256, %v6384
  %v6386 = vpop.f32.mrf.mxu0
  %6387 = vmatprep.mubr.bf16.mxu0 %v2393
  %6388 = vmatmul.mubr.bf16.gmra.mxu0 %v2392
  %v6389 = vpop.f32.mrf.mxu0
  %v6390 = vadd.f32 %v6261, %v6389
  %v6391 = vpop.f32.mrf.mxu0
  %v6392 = vpop.f32.mrf.mxu0
  %v6393 = vadd.f32 %v6264, %v6392
  %v6394 = vpop.f32.mrf.mxu0
  %6395 = vmatprep.mubr.bf16.mxu0 %v2409
  %6396 = vmatmul.mubr.bf16.gmra.mxu0 %v2408
  %v6397 = vpop.f32.mrf.mxu0
  %v6398 = vadd.f32 %v6269, %v6397
  %v6399 = vpop.f32.mrf.mxu0
  %v6400 = vpop.f32.mrf.mxu0
  %v6401 = vadd.f32 %v6272, %v6400
  %v6402 = vpop.f32.mrf.mxu0
  %6403 = vmatprep.mubr.bf16.mxu0 %v2425
  %6404 = vmatmul.mubr.bf16.gmra.mxu0 %v2424
  %v6405 = vpop.f32.mrf.mxu0
  %v6406 = vadd.f32 %v6277, %v6405
  %v6407 = vpop.f32.mrf.mxu0
  %v6408 = vpop.f32.mrf.mxu0
  %v6409 = vadd.f32 %v6280, %v6408
  %v6410 = vpop.f32.mrf.mxu0
  %6411 = vmatprep.mubr.bf16.mxu0 %v2441
  %6412 = vmatmul.mubr.bf16.gmra.mxu0 %v2440
  %v6413 = vpop.f32.mrf.mxu0
  %v6414 = vadd.f32 %v6285, %v6413
  %v6415 = vpop.f32.mrf.mxu0
  %v6416 = vpop.f32.mrf.mxu0
  %v6417 = vadd.f32 %v6288, %v6416
  %v6418 = vpop.f32.mrf.mxu0
  %6419 = vmatprep.mubr.bf16.mxu0 %v4700
  %6420 = vmatmul.mubr.bf16.gmra.mxu0 %v4699
  %v6421 = vpop.f32.mrf.mxu0
  %v6422 = vadd.f32 %v6293, %v6421
  %v6423 = vpop.f32.mrf.mxu0
  %v6424 = vpop.f32.mrf.mxu0
  %v6425 = vadd.f32 %v6296, %v6424
  %v6426 = vpop.f32.mrf.mxu0
  %6427 = vmatprep.mubr.bf16.mxu0 %v4716
  %6428 = vmatmul.mubr.bf16.gmra.mxu0 %v4715
  %v6429 = vpop.f32.mrf.mxu0
  %v6430 = vadd.f32 %v6301, %v6429
  %v6431 = vpop.f32.mrf.mxu0
  %v6432 = vpop.f32.mrf.mxu0
  %v6433 = vadd.f32 %v6304, %v6432
  %v6434 = vpop.f32.mrf.mxu0
  %6435 = vmatprep.mubr.bf16.mxu0 %v4732
  %6436 = vmatmul.mubr.bf16.gmra.mxu0 %v4731
  %v6437 = vpop.f32.mrf.mxu0
  %v6438 = vadd.f32 %v6309, %v6437
  %v6439 = vpop.f32.mrf.mxu0
  %v6440 = vpop.f32.mrf.mxu0
  %v6441 = vadd.f32 %v6312, %v6440
  %v6442 = vpop.f32.mrf.mxu0
  %6443 = vmatprep.mubr.bf16.mxu0 %v4748
  %6444 = vmatmul.mubr.bf16.gmra.mxu0 %v4747
  %v6445 = vpop.f32.mrf.mxu0
  %v6446 = vadd.f32 %v6317, %v6445
  %v6447 = vpop.f32.mrf.mxu0
  %v6448 = vpop.f32.mrf.mxu0
  %v6449 = vadd.f32 %v6320, %v6448
  %v6450 = vpop.f32.mrf.mxu0
  %6451 = vmatprep.mubr.bf16.mxu0 %v4764
  %6452 = vmatmul.mubr.bf16.gmra.mxu0 %v4763
  %v6453 = vpop.f32.mrf.mxu0
  %v6454 = vadd.f32 %v6325, %v6453
  %v6455 = vpop.f32.mrf.mxu0
  %v6456 = vpop.f32.mrf.mxu0
  %v6457 = vadd.f32 %v6328, %v6456
  %v6458 = vpop.f32.mrf.mxu0
  %6459 = vmatprep.mubr.bf16.mxu0 %v4780
  %6460 = vmatmul.mubr.bf16.gmra.mxu0 %v4779
  %v6461 = vpop.f32.mrf.mxu0
  %v6462 = vadd.f32 %v6333, %v6461
  %v6463 = vpop.f32.mrf.mxu0
  %v6464 = vpop.f32.mrf.mxu0
  %v6465 = vadd.f32 %v6336, %v6464
  %v6466 = vpop.f32.mrf.mxu0
  %6467 = vdwg.mxu0
  %6468 = vmatprep.subr.bf16.mxu0 0
  %6469 = vmatpush1.bf16.msra.mxu0 %v5625
  %6470 = vmatprep.subr.bf16.mxu0 0
  %6471 = vmatpush1.bf16.msra.mxu0 %v5624
  %6472 = vmatprep.subr.bf16.mxu0 0
  %6473 = vmatpush1.bf16.msra.mxu0 %v5623
  %6474 = vmatprep.subr.bf16.mxu0 0
  %6475 = vmatpush1.bf16.msra.mxu0 %v5622
  %6476 = vmatprep.subr.bf16.mxu0 0
  %6477 = vmatpush1.bf16.msra.mxu0 %v5621
  %6478 = vmatprep.subr.bf16.mxu0 0
  %6479 = vmatpush1.bf16.msra.mxu0 %v5620
  %6480 = vmatprep.subr.bf16.mxu0 0
  %6481 = vmatpush1.bf16.msra.mxu0 %v5619
  %6482 = vmatprep.subr.bf16.mxu0 0
  %6483 = vmatpush1.bf16.msra.mxu0 %v5618
  %6484 = vmatprep.subr.bf16.mxu0 0
  %6485 = vmatpush2.bf16.msra.mxu0 %v5633
  %6486 = vmatprep.subr.bf16.mxu0 0
  %6487 = vmatpush2.bf16.msra.mxu0 %v5632
  %6488 = vmatprep.subr.bf16.mxu0 0
  %6489 = vmatpush2.bf16.msra.mxu0 %v5631
  %6490 = vmatprep.subr.bf16.mxu0 0
  %6491 = vmatpush2.bf16.msra.mxu0 %v5630
  %6492 = vmatprep.subr.bf16.mxu0 0
  %6493 = vmatpush2.bf16.msra.mxu0 %v5629
  %6494 = vmatprep.subr.bf16.mxu0 0
  %6495 = vmatpush2.bf16.msra.mxu0 %v5628
  %6496 = vmatprep.subr.bf16.mxu0 0
  %6497 = vmatpush2.bf16.msra.mxu0 %v5627
  %6498 = vmatprep.subr.bf16.mxu0 0
  %6499 = vmatpush2.bf16.msra.mxu0 %v5626
  %6500 = vmatprep.mubr.bf16.mxu0 %v2363
  %6501 = vmatmul.mubr.bf16.gmra.mxu0 %v2362
  %v6502 = vpop.f32.mrf.mxu0
  %v6503 = vadd.f32 %v6374, %v6502
  %v6504 = vpop.f32.mrf.mxu0
  %v6505 = vpop.f32.mrf.mxu0
  %v6506 = vadd.f32 %v6377, %v6505
  %v6507 = vpop.f32.mrf.mxu0
  %6508 = vmatprep.mubr.bf16.mxu0 %v2379
  %6509 = vmatmul.mubr.bf16.gmra.mxu0 %v2378
  %v6510 = vpop.f32.mrf.mxu0
  %v6511 = vadd.f32 %v6382, %v6510
  %v6512 = vpop.f32.mrf.mxu0
  %v6513 = vpop.f32.mrf.mxu0
  %v6514 = vadd.f32 %v6385, %v6513
  %v6515 = vpop.f32.mrf.mxu0
  %6516 = vmatprep.mubr.bf16.mxu0 %v2395
  %6517 = vmatmul.mubr.bf16.gmra.mxu0 %v2394
  %v6518 = vpop.f32.mrf.mxu0
  %v6519 = vadd.f32 %v6390, %v6518
  %v6520 = vpop.f32.mrf.mxu0
  %v6521 = vpop.f32.mrf.mxu0
  %v6522 = vadd.f32 %v6393, %v6521
  %v6523 = vpop.f32.mrf.mxu0
  %6524 = vmatprep.mubr.bf16.mxu0 %v2411
  %6525 = vmatmul.mubr.bf16.gmra.mxu0 %v2410
  %v6526 = vpop.f32.mrf.mxu0
  %v6527 = vadd.f32 %v6398, %v6526
  %v6528 = vpop.f32.mrf.mxu0
  %v6529 = vpop.f32.mrf.mxu0
  %v6530 = vadd.f32 %v6401, %v6529
  %v6531 = vpop.f32.mrf.mxu0
  %6532 = vmatprep.mubr.bf16.mxu0 %v2427
  %6533 = vmatmul.mubr.bf16.gmra.mxu0 %v2426
  %v6534 = vpop.f32.mrf.mxu0
  %v6535 = vadd.f32 %v6406, %v6534
  %v6536 = vpop.f32.mrf.mxu0
  %v6537 = vpop.f32.mrf.mxu0
  %v6538 = vadd.f32 %v6409, %v6537
  %v6539 = vpop.f32.mrf.mxu0
  %6540 = vmatprep.mubr.bf16.mxu0 %v2443
  %6541 = vmatmul.mubr.bf16.gmra.mxu0 %v2442
  %v6542 = vpop.f32.mrf.mxu0
  %v6543 = vadd.f32 %v6414, %v6542
  %v6544 = vpop.f32.mrf.mxu0
  %v6545 = vpop.f32.mrf.mxu0
  %v6546 = vadd.f32 %v6417, %v6545
  %v6547 = vpop.f32.mrf.mxu0
  %6548 = vmatprep.mubr.bf16.mxu0 %v4702
  %6549 = vmatmul.mubr.bf16.gmra.mxu0 %v4701
  %v6550 = vpop.f32.mrf.mxu0
  %v6551 = vadd.f32 %v6422, %v6550
  %v6552 = vpop.f32.mrf.mxu0
  %v6553 = vpop.f32.mrf.mxu0
  %v6554 = vadd.f32 %v6425, %v6553
  %v6555 = vpop.f32.mrf.mxu0
  %6556 = vmatprep.mubr.bf16.mxu0 %v4718
  %6557 = vmatmul.mubr.bf16.gmra.mxu0 %v4717
  %v6558 = vpop.f32.mrf.mxu0
  %v6559 = vadd.f32 %v6430, %v6558
  %v6560 = vpop.f32.mrf.mxu0
  %v6561 = vpop.f32.mrf.mxu0
  %v6562 = vadd.f32 %v6433, %v6561
  %v6563 = vpop.f32.mrf.mxu0
  %6564 = vmatprep.mubr.bf16.mxu0 %v4734
  %6565 = vmatmul.mubr.bf16.gmra.mxu0 %v4733
  %v6566 = vpop.f32.mrf.mxu0
  %v6567 = vadd.f32 %v6438, %v6566
  %v6568 = vpop.f32.mrf.mxu0
  %v6569 = vpop.f32.mrf.mxu0
  %v6570 = vadd.f32 %v6441, %v6569
  %v6571 = vpop.f32.mrf.mxu0
  %6572 = vmatprep.mubr.bf16.mxu0 %v4750
  %6573 = vmatmul.mubr.bf16.gmra.mxu0 %v4749
  %v6574 = vpop.f32.mrf.mxu0
  %v6575 = vadd.f32 %v6446, %v6574
  %v6576 = vpop.f32.mrf.mxu0
  %v6577 = vpop.f32.mrf.mxu0
  %v6578 = vadd.f32 %v6449, %v6577
  %v6579 = vpop.f32.mrf.mxu0
  %6580 = vmatprep.mubr.bf16.mxu0 %v4766
  %6581 = vmatmul.mubr.bf16.gmra.mxu0 %v4765
  %v6582 = vpop.f32.mrf.mxu0
  %v6583 = vadd.f32 %v6454, %v6582
  %v6584 = vpop.f32.mrf.mxu0
  %v6585 = vpop.f32.mrf.mxu0
  %v6586 = vadd.f32 %v6457, %v6585
  %v6587 = vpop.f32.mrf.mxu0
  %6588 = vmatprep.mubr.bf16.mxu0 %v4782
  %6589 = vmatmul.mubr.bf16.gmra.mxu0 %v4781
  %v6590 = vpop.f32.mrf.mxu0
  %v6591 = vadd.f32 %v6462, %v6590
  %v6592 = vpop.f32.mrf.mxu0
  %v6593 = vpop.f32.mrf.mxu0
  %v6594 = vadd.f32 %v6465, %v6593
  %v6595 = vpop.f32.mrf.mxu0
  %6596 = vdwg.mxu0
  %6597 = vmatprep.subr.bf16.mxu0 0
  %6598 = vmatpush1.bf16.msra.mxu0 %v5641
  %6599 = vmatprep.subr.bf16.mxu0 0
  %6600 = vmatpush1.bf16.msra.mxu0 %v5640
  %6601 = vmatprep.subr.bf16.mxu0 0
  %6602 = vmatpush1.bf16.msra.mxu0 %v5639
  %6603 = vmatprep.subr.bf16.mxu0 0
  %6604 = vmatpush1.bf16.msra.mxu0 %v5638
  %6605 = vmatprep.subr.bf16.mxu0 0
  %6606 = vmatpush1.bf16.msra.mxu0 %v5637
  %6607 = vmatprep.subr.bf16.mxu0 0
  %6608 = vmatpush1.bf16.msra.mxu0 %v5636
  %6609 = vmatprep.subr.bf16.mxu0 0
  %6610 = vmatpush1.bf16.msra.mxu0 %v5635
  %6611 = vmatprep.subr.bf16.mxu0 0
  %6612 = vmatpush1.bf16.msra.mxu0 %v5634
  %6613 = vmatprep.subr.bf16.mxu0 0
  %6614 = vmatpush2.bf16.msra.mxu0 %v5649
  %6615 = vmatprep.subr.bf16.mxu0 0
  %6616 = vmatpush2.bf16.msra.mxu0 %v5648
  %6617 = vmatprep.subr.bf16.mxu0 0
  %6618 = vmatpush2.bf16.msra.mxu0 %v5647
  %6619 = vmatprep.subr.bf16.mxu0 0
  %6620 = vmatpush2.bf16.msra.mxu0 %v5646
  %6621 = vmatprep.subr.bf16.mxu0 0
  %6622 = vmatpush2.bf16.msra.mxu0 %v5645
  %6623 = vmatprep.subr.bf16.mxu0 0
  %6624 = vmatpush2.bf16.msra.mxu0 %v5644
  %6625 = vmatprep.subr.bf16.mxu0 0
  %6626 = vmatpush2.bf16.msra.mxu0 %v5643
  %6627 = vmatprep.subr.bf16.mxu0 0
  %6628 = vmatpush2.bf16.msra.mxu0 %v5642
  %6629 = vmatprep.mubr.bf16.mxu0 %v2365
  %6630 = vmatmul.mubr.bf16.gmra.mxu0 %v2364
  %v6631 = vpop.f32.mrf.mxu0
  %v6632 = vadd.f32 %v6503, %v6631
  %v6633 = vpop.f32.mrf.mxu0
  %v6634 = vpop.f32.mrf.mxu0
  %v6635 = vadd.f32 %v6506, %v6634
  %v6636 = vpop.f32.mrf.mxu0
  %6637 = vmatprep.mubr.bf16.mxu0 %v2381
  %6638 = vmatmul.mubr.bf16.gmra.mxu0 %v2380
  %v6639 = vpop.f32.mrf.mxu0
  %v6640 = vadd.f32 %v6511, %v6639
  %v6641 = vpop.f32.mrf.mxu0
  %v6642 = vpop.f32.mrf.mxu0
  %v6643 = vadd.f32 %v6514, %v6642
  %v6644 = vpop.f32.mrf.mxu0
  %6645 = vmatprep.mubr.bf16.mxu0 %v2397
  %6646 = vmatmul.mubr.bf16.gmra.mxu0 %v2396
  %v6647 = vpop.f32.mrf.mxu0
  %v6648 = vadd.f32 %v6519, %v6647
  %v6649 = vpop.f32.mrf.mxu0
  %v6650 = vpop.f32.mrf.mxu0
  %v6651 = vadd.f32 %v6522, %v6650
  %v6652 = vpop.f32.mrf.mxu0
  %6653 = vmatprep.mubr.bf16.mxu0 %v2413
  %6654 = vmatmul.mubr.bf16.gmra.mxu0 %v2412
  %v6655 = vpop.f32.mrf.mxu0
  %v6656 = vadd.f32 %v6527, %v6655
  %v6657 = vpop.f32.mrf.mxu0
  %v6658 = vpop.f32.mrf.mxu0
  %v6659 = vadd.f32 %v6530, %v6658
  %v6660 = vpop.f32.mrf.mxu0
  %6661 = vmatprep.mubr.bf16.mxu0 %v2429
  %6662 = vmatmul.mubr.bf16.gmra.mxu0 %v2428
  %v6663 = vpop.f32.mrf.mxu0
  %v6664 = vadd.f32 %v6535, %v6663
  %v6665 = vpop.f32.mrf.mxu0
  %v6666 = vpop.f32.mrf.mxu0
  %v6667 = vadd.f32 %v6538, %v6666
  %v6668 = vpop.f32.mrf.mxu0
  %6669 = vmatprep.mubr.bf16.mxu0 %v2445
  %6670 = vmatmul.mubr.bf16.gmra.mxu0 %v2444
  %v6671 = vpop.f32.mrf.mxu0
  %v6672 = vadd.f32 %v6543, %v6671
  %v6673 = vpop.f32.mrf.mxu0
  %v6674 = vpop.f32.mrf.mxu0
  %v6675 = vadd.f32 %v6546, %v6674
  %v6676 = vpop.f32.mrf.mxu0
  %6677 = vmatprep.mubr.bf16.mxu0 %v4704
  %6678 = vmatmul.mubr.bf16.gmra.mxu0 %v4703
  %v6679 = vpop.f32.mrf.mxu0
  %v6680 = vadd.f32 %v6551, %v6679
  %v6681 = vpop.f32.mrf.mxu0
  %v6682 = vpop.f32.mrf.mxu0
  %v6683 = vadd.f32 %v6554, %v6682
  %v6684 = vpop.f32.mrf.mxu0
  %6685 = vmatprep.mubr.bf16.mxu0 %v4720
  %6686 = vmatmul.mubr.bf16.gmra.mxu0 %v4719
  %v6687 = vpop.f32.mrf.mxu0
  %v6688 = vadd.f32 %v6559, %v6687
  %v6689 = vpop.f32.mrf.mxu0
  %v6690 = vpop.f32.mrf.mxu0
  %v6691 = vadd.f32 %v6562, %v6690
  %v6692 = vpop.f32.mrf.mxu0
  %6693 = vmatprep.mubr.bf16.mxu0 %v4736
  %6694 = vmatmul.mubr.bf16.gmra.mxu0 %v4735
  %v6695 = vpop.f32.mrf.mxu0
  %v6696 = vadd.f32 %v6567, %v6695
  %v6697 = vpop.f32.mrf.mxu0
  %v6698 = vpop.f32.mrf.mxu0
  %v6699 = vadd.f32 %v6570, %v6698
  %v6700 = vpop.f32.mrf.mxu0
  %6701 = vmatprep.mubr.bf16.mxu0 %v4752
  %6702 = vmatmul.mubr.bf16.gmra.mxu0 %v4751
  %v6703 = vpop.f32.mrf.mxu0
  %v6704 = vadd.f32 %v6575, %v6703
  %v6705 = vpop.f32.mrf.mxu0
  %v6706 = vpop.f32.mrf.mxu0
  %v6707 = vadd.f32 %v6578, %v6706
  %v6708 = vpop.f32.mrf.mxu0
  %6709 = vmatprep.mubr.bf16.mxu0 %v4768
  %6710 = vmatmul.mubr.bf16.gmra.mxu0 %v4767
  %v6711 = vpop.f32.mrf.mxu0
  %v6712 = vadd.f32 %v6583, %v6711
  %v6713 = vpop.f32.mrf.mxu0
  %v6714 = vpop.f32.mrf.mxu0
  %v6715 = vadd.f32 %v6586, %v6714
  %v6716 = vpop.f32.mrf.mxu0
  %6717 = vmatprep.mubr.bf16.mxu0 %v4784
  %6718 = vmatmul.mubr.bf16.gmra.mxu0 %v4783
  %v6719 = vpop.f32.mrf.mxu0
  %v6720 = vadd.f32 %v6591, %v6719
  %v6721 = vpop.f32.mrf.mxu0
  %v6722 = vpop.f32.mrf.mxu0
  %v6723 = vadd.f32 %v6594, %v6722
  %v6724 = vpop.f32.mrf.mxu0
  %6725 = vdwg.mxu0
  %6726 = vmatprep.subr.bf16.mxu0 0
  %6727 = vmatpush1.bf16.msra.mxu0 %v5657
  %6728 = vmatprep.subr.bf16.mxu0 0
  %6729 = vmatpush1.bf16.msra.mxu0 %v5656
  %6730 = vmatprep.subr.bf16.mxu0 0
  %6731 = vmatpush1.bf16.msra.mxu0 %v5655
  %6732 = vmatprep.subr.bf16.mxu0 0
  %6733 = vmatpush1.bf16.msra.mxu0 %v5654
  %6734 = vmatprep.subr.bf16.mxu0 0
  %6735 = vmatpush1.bf16.msra.mxu0 %v5653
  %6736 = vmatprep.subr.bf16.mxu0 0
  %6737 = vmatpush1.bf16.msra.mxu0 %v5652
  %6738 = vmatprep.subr.bf16.mxu0 0
  %6739 = vmatpush1.bf16.msra.mxu0 %v5651
  %6740 = vmatprep.subr.bf16.mxu0 0
  %6741 = vmatpush1.bf16.msra.mxu0 %v5650
  %6742 = vmatprep.subr.bf16.mxu0 0
  %6743 = vmatpush2.bf16.msra.mxu0 0
  %6744 = vmatprep.subr.bf16.mxu0 0
  %6745 = vmatpush2.bf16.msra.mxu0 0
  %6746 = vmatprep.subr.bf16.mxu0 0
  %6747 = vmatpush2.bf16.msra.mxu0 0
  %6748 = vmatprep.subr.bf16.mxu0 0
  %6749 = vmatpush2.bf16.msra.mxu0 0
  %6750 = vmatprep.subr.bf16.mxu0 0
  %6751 = vmatpush2.bf16.msra.mxu0 %v5661
  %6752 = vmatprep.subr.bf16.mxu0 0
  %6753 = vmatpush2.bf16.msra.mxu0 %v5660
  %6754 = vmatprep.subr.bf16.mxu0 0
  %6755 = vmatpush2.bf16.msra.mxu0 %v5659
  %6756 = vmatprep.subr.bf16.mxu0 0
  %6757 = vmatpush2.bf16.msra.mxu0 %v5658
  %6758 = vmatprep.mubr.bf16.mxu0 %v5788
  %6759 = vmatmul.mubr.bf16.gmra.mxu0 %v2366
  %v6760 = vpop.f32.mrf.mxu0
  %v6761 = vadd.f32 %v6632, %v6760
  %v6762 = vpop.f32.mrf.mxu0
  %v6763 = vpop.f32.mrf.mxu0
  %v6764 = vadd.f32 %v6635, %v6763
  %v6765 = vpop.f32.mrf.mxu0
  %6766 = vmatprep.mubr.bf16.mxu0 %v5791
  %6767 = vmatmul.mubr.bf16.gmra.mxu0 %v2382
  %v6768 = vpop.f32.mrf.mxu0
  %v6769 = vadd.f32 %v6640, %v6768
  %v6770 = vpop.f32.mrf.mxu0
  %v6771 = vpop.f32.mrf.mxu0
  %v6772 = vadd.f32 %v6643, %v6771
  %v6773 = vpop.f32.mrf.mxu0
  %6774 = vmatprep.mubr.bf16.mxu0 %v5794
  %6775 = vmatmul.mubr.bf16.gmra.mxu0 %v2398
  %v6776 = vpop.f32.mrf.mxu0
  %v6777 = vadd.f32 %v6648, %v6776
  %v6778 = vpop.f32.mrf.mxu0
  %v6779 = vpop.f32.mrf.mxu0
  %v6780 = vadd.f32 %v6651, %v6779
  %v6781 = vpop.f32.mrf.mxu0
  %6782 = vmatprep.mubr.bf16.mxu0 %v5797
  %6783 = vmatmul.mubr.bf16.gmra.mxu0 %v2414
  %v6784 = vpop.f32.mrf.mxu0
  %v6785 = vadd.f32 %v6656, %v6784
  %v6786 = vpop.f32.mrf.mxu0
  %v6787 = vpop.f32.mrf.mxu0
  %v6788 = vadd.f32 %v6659, %v6787
  %v6789 = vpop.f32.mrf.mxu0
  %6790 = vmatprep.mubr.bf16.mxu0 %v5800
  %6791 = vmatmul.mubr.bf16.gmra.mxu0 %v2430
  %v6792 = vpop.f32.mrf.mxu0
  %v6793 = vadd.f32 %v6664, %v6792
  %v6794 = vpop.f32.mrf.mxu0
  %v6795 = vpop.f32.mrf.mxu0
  %v6796 = vadd.f32 %v6667, %v6795
  %v6797 = vpop.f32.mrf.mxu0
  %6798 = vmatprep.mubr.bf16.mxu0 %v5803
  %6799 = vmatmul.mubr.bf16.gmra.mxu0 %v2446
  %v6800 = vpop.f32.mrf.mxu0
  %v6801 = vadd.f32 %v6672, %v6800
  %v6802 = vpop.f32.mrf.mxu0
  %v6803 = vpop.f32.mrf.mxu0
  %v6804 = vadd.f32 %v6675, %v6803
  %v6805 = vpop.f32.mrf.mxu0
  %6806 = vmatprep.mubr.bf16.mxu0 %v5806
  %6807 = vmatmul.mubr.bf16.gmra.mxu0 %v4705
  %v6808 = vpop.f32.mrf.mxu0
  %v6809 = vadd.f32 %v6680, %v6808
  %v6810 = vpop.f32.mrf.mxu0
  %v6811 = vpop.f32.mrf.mxu0
  %v6812 = vadd.f32 %v6683, %v6811
  %v6813 = vpop.f32.mrf.mxu0
  %6814 = vmatprep.mubr.bf16.mxu0 %v5809
  %6815 = vmatmul.mubr.bf16.gmra.mxu0 %v4721
  %v6816 = vpop.f32.mrf.mxu0
  %v6817 = vadd.f32 %v6688, %v6816
  %v6818 = vpop.f32.mrf.mxu0
  %v6819 = vpop.f32.mrf.mxu0
  %v6820 = vadd.f32 %v6691, %v6819
  %v6821 = vpop.f32.mrf.mxu0
  %6822 = vmatprep.mubr.bf16.mxu0 %v5812
  %6823 = vmatmul.mubr.bf16.gmra.mxu0 %v4737
  %v6824 = vpop.f32.mrf.mxu0
  %v6825 = vadd.f32 %v6696, %v6824
  %v6826 = vpop.f32.mrf.mxu0
  %v6827 = vpop.f32.mrf.mxu0
  %v6828 = vadd.f32 %v6699, %v6827
  %v6829 = vpop.f32.mrf.mxu0
  %6830 = vmatprep.mubr.bf16.mxu0 %v5815
  %6831 = vmatmul.mubr.bf16.gmra.mxu0 %v4753
  %v6832 = vpop.f32.mrf.mxu0
  %v6833 = vadd.f32 %v6704, %v6832
  %v6834 = vpop.f32.mrf.mxu0
  %v6835 = vpop.f32.mrf.mxu0
  %v6836 = vadd.f32 %v6707, %v6835
  %v6837 = vpop.f32.mrf.mxu0
  %6838 = vmatprep.mubr.bf16.mxu0 %v5818
  %6839 = vmatmul.mubr.bf16.gmra.mxu0 %v4769
  %v6840 = vpop.f32.mrf.mxu0
  %v6841 = vadd.f32 %v6712, %v6840
  %v6842 = vpop.f32.mrf.mxu0
  %v6843 = vpop.f32.mrf.mxu0
  %v6844 = vadd.f32 %v6715, %v6843
  %v6845 = vpop.f32.mrf.mxu0
  %6846 = vmatprep.mubr.bf16.mxu0 %v5821
  %6847 = vmatmul.mubr.bf16.gmra.mxu0 %v4785
  %v6848 = vpop.f32.mrf.mxu0
  %v6849 = vadd.f32 %v6720, %v6848
  %v6850 = vpop.f32.mrf.mxu0
  %v6851 = vpop.f32.mrf.mxu0
  %v6852 = vadd.f32 %v6723, %v6851
  %v6853 = vpop.f32.mrf.mxu0
  %6854 = vdwg.mxu0
  %v6855 = vmax.f32 %v6761, 0.0
  %v6856 = vmax.f32 %v6764, 0.0
  %v6857 = vmax.f32 %v6769, 0.0
  %v6858 = vmax.f32 %v6772, 0.0
  %v6859 = vmax.f32 %v6777, 0.0
  %v6860 = vmax.f32 %v6780, 0.0
  %v6861 = vmax.f32 %v6785, 0.0
  %v6862 = vmax.f32 %v6788, 0.0
  %v6863 = vmax.f32 %v6793, 0.0
  %v6864 = vmax.f32 %v6796, 0.0
  %v6865 = vmax.f32 %v6801, 0.0
  %v6866 = vmax.f32 %v6804, 0.0
  %v6867 = vmax.f32 %v6809, 0.0
  %v6868 = vmax.f32 %v6812, 0.0
  %v6869 = vmax.f32 %v6817, 0.0
  %v6870 = vmax.f32 %v6820, 0.0
  %v6871 = vmax.f32 %v6825, 0.0
  %v6872 = vmax.f32 %v6828, 0.0
  %v6873 = vmax.f32 %v6833, 0.0
  %v6874 = vmax.f32 %v6836, 0.0
  %v6875 = vmax.f32 %v6841, 0.0
  %v6876 = vmax.f32 %v6844, 0.0
  %v6877 = vmax.f32 %v6849, 0.0
  %v6878 = vmax.f32 %v6852, 0.0
  %v6879 = vld [vmem:[%s4] sm:$0xff]
  %v6880 = vld [vmem:[%s4 + $0x8] sm:$0xff]
  %v6881 = vld [vmem:[%s4 + $0x10] sm:$0xff]
  %v6882 = vld [vmem:[%s4 + $0x18] sm:$0xff]
  %v6883 = vld [vmem:[%s4 + $0x20] sm:$0xff]
  %v6884 = vld [vmem:[%s4 + $0x28] sm:$0xff]
  %v6885 = vld [vmem:[%s4 + $0x30] sm:$0xff]
  %v6886 = vld [vmem:[%s4 + $0x38] sm:$0xff]
  %v6887 = vld [vmem:[%s4 + $0x40] sm:$0xff]
  %v6888 = vld [vmem:[%s4 + $0x48] sm:$0xff]
  %v6889 = vld [vmem:[%s4 + $0x50] sm:$0xff]
  %v6890 = vld [vmem:[%s4 + $0x58] sm:$0xff]
  %v6891 = vld [vmem:[%s4 + $0x60] sm:$0xff]
  %v6892 = vld [vmem:[%s4 + $0x68] sm:$0xff]
  %v6893 = vld [vmem:[%s4 + $0x70] sm:$0xff]
  %v6894 = vld [vmem:[%s4 + $0x78] sm:$0xff]
  %v6895 = vld [vmem:[%s5] sm:$0x1]
  %v6897 = vlaneseq
  %v6898 = vshrl.u32 %v6897, 7
  %v6899 = vsub.s32 0, %v6898
  %v6900 = vrot.slane %v6895, %v6899
  %6902 = vmatprep.subr.mxu0 0.0
  %6903 = vmatpush1.msra.mxu0 %v6894
  %6904 = vmatprep.subr.mxu0 0.0
  %6905 = vmatpush1.msra.mxu0 %v6893
  %6906 = vmatprep.subr.mxu0 0.0
  %6907 = vmatpush1.msra.mxu0 %v6892
  %6908 = vmatprep.subr.mxu0 0.0
  %6909 = vmatpush1.msra.mxu0 %v6891
  %6910 = vmatprep.subr.mxu0 0.0
  %6911 = vmatpush1.msra.mxu0 %v6890
  %6912 = vmatprep.subr.mxu0 0.0
  %6913 = vmatpush1.msra.mxu0 %v6889
  %6914 = vmatprep.subr.mxu0 0.0
  %6915 = vmatpush1.msra.mxu0 %v6888
  %6916 = vmatprep.subr.mxu0 0.0
  %6917 = vmatpush1.msra.mxu0 %v6887
  %6918 = vmatprep.subr.mxu0 0.0
  %6919 = vmatpush1.msra.mxu0 %v6886
  %6920 = vmatprep.subr.mxu0 0.0
  %6921 = vmatpush1.msra.mxu0 %v6885
  %6922 = vmatprep.subr.mxu0 0.0
  %6923 = vmatpush1.msra.mxu0 %v6884
  %6924 = vmatprep.subr.mxu0 0.0
  %6925 = vmatpush1.msra.mxu0 %v6883
  %6926 = vmatprep.subr.mxu0 0.0
  %6927 = vmatpush1.msra.mxu0 %v6882
  %6928 = vmatprep.subr.mxu0 0.0
  %6929 = vmatpush1.msra.mxu0 %v6881
  %6930 = vmatprep.subr.mxu0 0.0
  %6931 = vmatpush1.msra.mxu0 %v6880
  %6932 = vmatprep.subr.mxu0 0.0
  %6933 = vmatpush1.msra.mxu0 %v6879
  %6934 = vmatprep.subr.mxu0 0.0
  %6935 = vmatpush2.msra.mxu0 0.0
  %6936 = vmatprep.subr.mxu0 0.0
  %6937 = vmatpush2.msra.mxu0 0.0
  %6938 = vmatprep.subr.mxu0 0.0
  %6939 = vmatpush2.msra.mxu0 0.0
  %6940 = vmatprep.subr.mxu0 0.0
  %6941 = vmatpush2.msra.mxu0 0.0
  %6942 = vmatprep.subr.mxu0 0.0
  %6943 = vmatpush2.msra.mxu0 0.0
  %6944 = vmatprep.subr.mxu0 0.0
  %6945 = vmatpush2.msra.mxu0 0.0
  %6946 = vmatprep.subr.mxu0 0.0
  %6947 = vmatpush2.msra.mxu0 0.0
  %6948 = vmatprep.subr.mxu0 0.0
  %6949 = vmatpush2.msra.mxu0 0.0
  %6950 = vmatprep.subr.mxu0 0.0
  %6951 = vmatpush2.msra.mxu0 0.0
  %6952 = vmatprep.subr.mxu0 0.0
  %6953 = vmatpush2.msra.mxu0 0.0
  %6954 = vmatprep.subr.mxu0 0.0
  %6955 = vmatpush2.msra.mxu0 0.0
  %6956 = vmatprep.subr.mxu0 0.0
  %6957 = vmatpush2.msra.mxu0 0.0
  %6958 = vmatprep.subr.mxu0 0.0
  %6959 = vmatpush2.msra.mxu0 0.0
  %6960 = vmatprep.subr.mxu0 0.0
  %6961 = vmatpush2.msra.mxu0 0.0
  %6962 = vmatprep.subr.mxu0 0.0
  %6963 = vmatpush2.msra.mxu0 0.0
  %6964 = vmatprep.subr.mxu0 0.0
  %6965 = vmatpush2.msra.mxu0 0.0
  %6966 = vmatprep.mubr.f32.mxu0 0.0
  %6967 = vmatmul.mubr.f32.gmra.mxu0 %v6855
  %v6968 = vpop.f32.mrf.mxu0
  %v6969 = vadd.f32 %v6900, %v6968
  %v6970 = vpop.f32.mrf.mxu0
  %6971 = vmatprep.mubr.f32.mxu0 0.0
  %6972 = vmatmul.mubr.f32.gmra.mxu0 %v6856
  %v6973 = vpop.f32.mrf.mxu0
  %v6974 = vadd.f32 %v6900, %v6973
  %v6975 = vpop.f32.mrf.mxu0
  %6976 = vmatprep.mubr.f32.mxu0 0.0
  %6977 = vmatmul.mubr.f32.gmra.mxu0 %v6857
  %v6978 = vpop.f32.mrf.mxu0
  %v6979 = vadd.f32 %v6900, %v6978
  %v6980 = vpop.f32.mrf.mxu0
  %6981 = vmatprep.mubr.f32.mxu0 0.0
  %6982 = vmatmul.mubr.f32.gmra.mxu0 %v6858
  %v6983 = vpop.f32.mrf.mxu0
  %v6984 = vadd.f32 %v6900, %v6983
  %v6985 = vpop.f32.mrf.mxu0
  %6986 = vmatprep.mubr.f32.mxu0 0.0
  %6987 = vmatmul.mubr.f32.gmra.mxu0 %v6859
  %v6988 = vpop.f32.mrf.mxu0
  %v6989 = vadd.f32 %v6900, %v6988
  %v6990 = vpop.f32.mrf.mxu0
  %6991 = vmatprep.mubr.f32.mxu0 0.0
  %6992 = vmatmul.mubr.f32.gmra.mxu0 %v6860
  %v6993 = vpop.f32.mrf.mxu0
  %v6994 = vadd.f32 %v6900, %v6993
  %v6995 = vpop.f32.mrf.mxu0
  %6996 = vmatprep.mubr.f32.mxu0 0.0
  %6997 = vmatmul.mubr.f32.gmra.mxu0 %v6861
  %v6998 = vpop.f32.mrf.mxu0
  %v6999 = vadd.f32 %v6900, %v6998
  %v7000 = vpop.f32.mrf.mxu0
  %7001 = vmatprep.mubr.f32.mxu0 0.0
  %7002 = vmatmul.mubr.f32.gmra.mxu0 %v6862
  %v7003 = vpop.f32.mrf.mxu0
  %v7004 = vadd.f32 %v6900, %v7003
  %v7005 = vpop.f32.mrf.mxu0
  %7006 = vmatprep.mubr.f32.mxu0 0.0
  %7007 = vmatmul.mubr.f32.gmra.mxu0 %v6863
  %v7008 = vpop.f32.mrf.mxu0
  %v7009 = vadd.f32 %v6900, %v7008
  %v7010 = vpop.f32.mrf.mxu0
  %7011 = vmatprep.mubr.f32.mxu0 0.0
  %7012 = vmatmul.mubr.f32.gmra.mxu0 %v6864
  %v7013 = vpop.f32.mrf.mxu0
  %v7014 = vadd.f32 %v6900, %v7013
  %v7015 = vpop.f32.mrf.mxu0
  %7016 = vmatprep.mubr.f32.mxu0 0.0
  %7017 = vmatmul.mubr.f32.gmra.mxu0 %v6865
  %v7018 = vpop.f32.mrf.mxu0
  %v7019 = vadd.f32 %v6900, %v7018
  %v7020 = vpop.f32.mrf.mxu0
  %7021 = vmatprep.mubr.f32.mxu0 0.0
  %7022 = vmatmul.mubr.f32.gmra.mxu0 %v6866
  %v7023 = vpop.f32.mrf.mxu0
  %v7024 = vadd.f32 %v6900, %v7023
  %v7025 = vpop.f32.mrf.mxu0
  %7026 = vmatprep.mubr.f32.mxu0 0.0
  %7027 = vmatmul.mubr.f32.gmra.mxu0 %v6867
  %v7028 = vpop.f32.mrf.mxu0
  %v7029 = vadd.f32 %v6900, %v7028
  %v7030 = vpop.f32.mrf.mxu0
  %7031 = vmatprep.mubr.f32.mxu0 0.0
  %7032 = vmatmul.mubr.f32.gmra.mxu0 %v6868
  %v7033 = vpop.f32.mrf.mxu0
  %v7034 = vadd.f32 %v6900, %v7033
  %v7035 = vpop.f32.mrf.mxu0
  %7036 = vmatprep.mubr.f32.mxu0 0.0
  %7037 = vmatmul.mubr.f32.gmra.mxu0 %v6869
  %v7038 = vpop.f32.mrf.mxu0
  %v7039 = vadd.f32 %v6900, %v7038
  %v7040 = vpop.f32.mrf.mxu0
  %7041 = vmatprep.mubr.f32.mxu0 0.0
  %7042 = vmatmul.mubr.f32.gmra.mxu0 %v6870
  %v7043 = vpop.f32.mrf.mxu0
  %v7044 = vadd.f32 %v6900, %v7043
  %v7045 = vpop.f32.mrf.mxu0
  %7046 = vmatprep.mubr.f32.mxu0 0.0
  %7047 = vmatmul.mubr.f32.gmra.mxu0 %v6871
  %v7048 = vpop.f32.mrf.mxu0
  %v7049 = vadd.f32 %v6900, %v7048
  %v7050 = vpop.f32.mrf.mxu0
  %7051 = vmatprep.mubr.f32.mxu0 0.0
  %7052 = vmatmul.mubr.f32.gmra.mxu0 %v6872
  %v7053 = vpop.f32.mrf.mxu0
  %v7054 = vadd.f32 %v6900, %v7053
  %v7055 = vpop.f32.mrf.mxu0
  %7056 = vmatprep.mubr.f32.mxu0 0.0
  %7057 = vmatmul.mubr.f32.gmra.mxu0 %v6873
  %v7058 = vpop.f32.mrf.mxu0
  %v7059 = vadd.f32 %v6900, %v7058
  %v7060 = vpop.f32.mrf.mxu0
  %7061 = vmatprep.mubr.f32.mxu0 0.0
  %7062 = vmatmul.mubr.f32.gmra.mxu0 %v6874
  %v7063 = vpop.f32.mrf.mxu0
  %v7064 = vadd.f32 %v6900, %v7063
  %v7065 = vpop.f32.mrf.mxu0
  %7066 = vmatprep.mubr.f32.mxu0 0.0
  %7067 = vmatmul.mubr.f32.gmra.mxu0 %v6875
  %v7068 = vpop.f32.mrf.mxu0
  %v7069 = vadd.f32 %v6900, %v7068
  %v7070 = vpop.f32.mrf.mxu0
  %7071 = vmatprep.mubr.f32.mxu0 0.0
  %7072 = vmatmul.mubr.f32.gmra.mxu0 %v6876
  %v7073 = vpop.f32.mrf.mxu0
  %v7074 = vadd.f32 %v6900, %v7073
  %v7075 = vpop.f32.mrf.mxu0
  %7076 = vmatprep.mubr.f32.mxu0 0.0
  %7077 = vmatmul.mubr.f32.gmra.mxu0 %v6877
  %v7078 = vpop.f32.mrf.mxu0
  %v7079 = vadd.f32 %v6900, %v7078
  %v7080 = vpop.f32.mrf.mxu0
  %7081 = vmatprep.mubr.f32.mxu0 0.0
  %7082 = vmatmul.mubr.f32.gmra.mxu0 %v6878
  %v7083 = vpop.f32.mrf.mxu0
  %v7084 = vadd.f32 %v6900, %v7083
  %v7085 = vpop.f32.mrf.mxu0
  %7086 = vdwg.mxu0
  %7087 = vst [vmem:[%s6] sm:$0xff] %v6969
  %7088 = vst [vmem:[%s6 + $0x8] sm:$0xff] %v6974
  %7089 = vst [vmem:[%s6 + $0x10] sm:$0xff] %v6979
  %7090 = vst [vmem:[%s6 + $0x18] sm:$0xff] %v6984
  %7091 = vst [vmem:[%s6 + $0x20] sm:$0xff] %v6989
  %7092 = vst [vmem:[%s6 + $0x28] sm:$0xff] %v6994
  %7093 = vst [vmem:[%s6 + $0x30] sm:$0xff] %v6999
  %7094 = vst [vmem:[%s6 + $0x38] sm:$0xff] %v7004
  %7095 = vst [vmem:[%s6 + $0x40] sm:$0xff] %v7009
  %7096 = vst [vmem:[%s6 + $0x48] sm:$0xff] %v7014
  %7097 = vst [vmem:[%s6 + $0x50] sm:$0xff] %v7019
  %7098 = vst [vmem:[%s6 + $0x58] sm:$0xff] %v7024
  %s7099 = scalar_lea.vmem %s6, 96
  %7100 = vst [vmem:[%s7099] sm:$0xff] %v7029
  %7101 = vst [vmem:[%s7099 + $0x8] sm:$0xff] %v7034
  %7102 = vst [vmem:[%s7099 + $0x10] sm:$0xff] %v7039
  %7103 = vst [vmem:[%s7099 + $0x18] sm:$0xff] %v7044
  %7104 = vst [vmem:[%s7099 + $0x20] sm:$0xff] %v7049
  %7105 = vst [vmem:[%s7099 + $0x28] sm:$0xff] %v7054
  %7106 = vst [vmem:[%s7099 + $0x30] sm:$0xff] %v7059
  %7107 = vst [vmem:[%s7099 + $0x38] sm:$0xff] %v7064
  %7108 = vst [vmem:[%s7099 + $0x40] sm:$0xff] %v7069
  %7109 = vst [vmem:[%s7099 + $0x48] sm:$0xff] %v7074
  %7110 = vst [vmem:[%s7099 + $0x50] sm:$0xff] %v7079
  %7111 = vst [vmem:[%s7099 + $0x58] sm:$0xff] %v7084
  // Predicated region
  $region26: #{module2_forward.1} parent=0 // pred_check
    _
  $region27: #{module2_forward.1} parent=0 // pred_check_branch
    %7113 = sbr.rel (0) target = $region29
  $region28: #{module2_forward.1} parent=0 // pred_region
    _
  $region29: #{module2_forward.1} parent=0 // pred_fallthru
    _
  // Predicated region
  $region30: #{module2_forward.1} parent=0 // pred_check
    _
  $region31: #{module2_forward.1} parent=0 // pred_check_branch
    %7115 = sbr.rel (0) target = $region33
  $region32: #{module2_forward.1} parent=0 // pred_region
    _
  $region33: #{module2_forward.1} parent=0 // pred_fallthru
    _

</llo_original>
